<compile_context>
chip_gen: v6e
topology: v6e:2x2x1
jax: 0.10.0
libtpu: 0.0.40
codegen_flags: <defaults>
</compile_context>

<pallas_src>
import functools
import math

import jax
import jax.numpy as jnp
from jax.experimental import pallas as pl
from jax.experimental.pallas import tpu as pltpu


def _round_up(x, m):
    return (x + m - 1) // m * m


def _vmem_limit_bytes(*nbytes):
    # real footprint x2 (temporaries/layout slack) + 4 MiB headroom,
    # capped at 48 MiB (leave room on v7x's 64 MiB physical VMEM).
    est = 2 * int(sum(nbytes)) + (4 << 20)
    return int(min(est, 48 << 20))


# --------------------------- kernel ------------------------------------------

def _ae_fused_kernel(x_ref, w1_ref, b1_ref, w2_ref, b2_ref,
                     w3_ref, b3_ref, w4_ref, b4_ref, o_ref):
    """Fused autoencoder forward: all four Linear layers in one VMEM-resident step.

    x, w1, w4 are bf16 (bandwidth-critical); w2/w3/biases/activations are f32.
    Every matmul accumulates in f32 via preferred_element_type.
    """
    # encoder1 + ReLU
    h = jnp.maximum(
        jnp.dot(x_ref[...], w1_ref[...], preferred_element_type=jnp.float32)
        + b1_ref[...], 0.0)
    # encoder2 + sigmoid (tiny, f32 weights)
    z = jax.nn.sigmoid(
        jnp.dot(h, w2_ref[...], preferred_element_type=jnp.float32)
        + b2_ref[...])
    # decoder1 + ReLU (tiny, f32 weights)
    d = jnp.maximum(
        jnp.dot(z, w3_ref[...], preferred_element_type=jnp.float32)
        + b3_ref[...], 0.0)
    # decoder2 + sigmoid (bf16 weight, lane-dense 768-wide output)
    y = jnp.dot(d.astype(jnp.bfloat16), w4_ref[...],
                preferred_element_type=jnp.float32) + b4_ref[...]
    o_ref[...] = jax.nn.sigmoid(y)


# --------------------------- wrapper ------------------------------------------

@functools.partial(jax.jit, static_argnames=("im_width", "im_height"))
def net_forward(x, params, *, im_width, im_height):
    """Net.forward: x -> decode(encode(x)) -> (3, W, H) (or (B, 3, W, H))."""
    d_in = 3 * im_width * im_height

    single = (x.ndim == 3)
    if single:
        x = x[None]
    b = x.shape[0]

    w1, b1 = params["w1"], params["b1"]
    w2, b2 = params["w2"], params["b2"]
    w3, b3 = params["w3"], params["b3"]
    w4, b4 = params["w4"], params["b4"]

    d_in_p, h_p = w1.shape
    b_p = _round_up(max(b, 1), 16)      # bf16-friendly sublane rows (dead rows sliced off)

    # flatten + pad the image(s) into a lane/sublane aligned bf16 slab
    x_flat = x.reshape(b, d_in).astype(jnp.bfloat16)
    x_pad = jnp.zeros((b_p, d_in_p), jnp.bfloat16).at[:b, :d_in].set(x_flat)

    vmem = _vmem_limit_bytes(
        x_pad.size * 2,
        w1.size * 2, b1.size * 4,
        w2.size * 4, b2.size * 4,
        w3.size * 4, b3.size * 4,
        w4.size * 2, b4.size * 4,
        b_p * d_in_p * 4)               # output slab

    vmem_spec = pl.BlockSpec(memory_space=pltpu.MemorySpace.VMEM)

    y_pad = pl.pallas_call(
        _ae_fused_kernel,
        out_shape=jax.ShapeDtypeStruct((b_p, d_in_p), jnp.float32),
        in_specs=[vmem_spec] * 9,
        out_specs=vmem_spec,
        compiler_params=pltpu.CompilerParams(vmem_limit_bytes=vmem),
    )(x_pad, w1, b1, w2, b2, w3, b3, w4, b4)

    y = y_pad[:b, :d_in].reshape(b, 3, im_width, im_height)
    return y[0] if single else y


# --------------------------- params -------------------------------------------

def init_params(key, im_width, im_height, hidden_size, latent_size):
    """PyTorch-style Linear init U(-1/sqrt(fan_in), 1/sqrt(fan_in)); W is (in, out)."""
    d_in = 3 * im_width * im_height
    dims = [(d_in, hidden_size),         # encoder1
            (hidden_size, latent_size),  # encoder2
            (latent_size, hidden_size),  # decoder1
            (hidden_size, d_in)]         # decoder2
    params = {}
    keys = jax.random.split(key, 2 * len(dims))
    for i, (fan_in, fan_out) in enumerate(dims):
        bound = 1.0 / math.sqrt(fan_in)
        params[f"w{i + 1}"] = jax.random.uniform(
            keys[2 * i], (fan_in, fan_out), minval=-bound, maxval=bound,
            dtype=jnp.float32)
        params[f"b{i + 1}"] = jax.random.uniform(
            keys[2 * i + 1], (1, fan_out), minval=-bound, maxval=bound,
            dtype=jnp.float32)
    return params


def prepare_params(params, im_width, im_height, hidden_size, latent_size):
    """Zero-pad to lane-aligned shapes; large w1/w4 -> bf16, small w2/w3 + biases stay f32.

    Padding is inert: padded w1 rows are zero (x pad cols are zero), padded
    hidden/latent cols get zero weights+bias, and the following layer's padded
    rows are zero, so the spurious sigmoid(0)=0.5 latent entries contribute 0.
    """
    d_in = 3 * im_width * im_height
    d_in_p = _round_up(d_in, 128)
    h_p = _round_up(hidden_size, 128)
    l_p = _round_up(latent_size, 128)

    def pad_w(w, r, c, dtype):
        out = jnp.zeros((r, c), dtype)
        return out.at[:w.shape[0], :w.shape[1]].set(w.astype(dtype))

    def pad_b(bv, c):
        out = jnp.zeros((1, c), jnp.float32)
        return out.at[:, :bv.shape[1]].set(bv.astype(jnp.float32))

    return {
        "w1": pad_w(params["w1"], d_in_p, h_p, jnp.bfloat16),
        "b1": pad_b(params["b1"], h_p),
        "w2": pad_w(params["w2"], h_p, l_p, jnp.float32),
        "b2": pad_b(params["b2"], l_p),
        "w3": pad_w(params["w3"], l_p, h_p, jnp.float32),
        "b3": pad_b(params["b3"], h_p),
        "w4": pad_w(params["w4"], h_p, d_in_p, jnp.bfloat16),
        "b4": pad_b(params["b4"], d_in_p),
    }


def net_forward_reference(x, params_f32, im_width, im_height):
    """Pure-JAX f32 reference of Net.forward (for correctness check)."""
    d_in = 3 * im_width * im_height
    xf = x.reshape(1, d_in).astype(jnp.float32)
    h = jax.nn.relu(xf @ params_f32["w1"] + params_f32["b1"])
    z = jax.nn.sigmoid(h @ params_f32["w2"] + params_f32["b2"])
    d = jax.nn.relu(z @ params_f32["w3"] + params_f32["b3"])
    y = jax.nn.sigmoid(d @ params_f32["w4"] + params_f32["b4"])
    return y.reshape(3, im_width, im_height)


if __name__ == "__main__":
    # Small shapes consistent with the module: one 3 x 16 x 16 image,
    # hidden_size / latent_size taken from the module constants.
    im_width, im_height = 16, 16
    hidden_size = 512
    latent_size = 32 * 32 // 3   # 341

    key = jax.random.PRNGKey(0)
    k_params, k_x = jax.random.split(key)

    params_f32 = init_params(k_params, im_width, im_height,
                             hidden_size, latent_size)
    params = prepare_params(params_f32, im_width, im_height,
                            hidden_size, latent_size)

    x = jax.random.uniform(k_x, (3, im_width, im_height), dtype=jnp.float32)

    y = net_forward(x, params, im_width=im_width, im_height=im_height)
    jax.block_until_ready(y)

    assert y.shape == (3, im_width, im_height)
    y_ref = net_forward_reference(x, params_f32, im_width, im_height)
    # bf16 x/w1/w4 vs. f32 reference: sigmoid-bounded outputs, tolerance is loose.
    assert jnp.allclose(y, y_ref, atol=5e-2), float(jnp.max(jnp.abs(y - y_ref)))

    print("KERNEL_OK")
</pallas_src>

<mosaic_0001>
module attributes {stable_mosaic.version = 11 : i64} {
  func.func @_ae_fused_kernel(%arg0: memref<16x768xbf16, #tpu.memory_space<vmem>>, %arg1: memref<768x512xbf16, #tpu.memory_space<vmem>>, %arg2: memref<1x512xf32, #tpu.memory_space<vmem>>, %arg3: memref<512x384xf32, #tpu.memory_space<vmem>>, %arg4: memref<1x384xf32, #tpu.memory_space<vmem>>, %arg5: memref<384x512xf32, #tpu.memory_space<vmem>>, %arg6: memref<1x512xf32, #tpu.memory_space<vmem>>, %arg7: memref<512x768xbf16, #tpu.memory_space<vmem>>, %arg8: memref<1x768xf32, #tpu.memory_space<vmem>>, %arg9: memref<16x768xf32, #tpu.memory_space<vmem>>) attributes {dimension_semantics = [], scalar_prefetch = 0 : i64, scratch_operands = 0 : i64, tpu.core_type = #tpu.core_type<tc>} {
    %c0 = arith.constant 0 : index
    %c0_0 = arith.constant 0 : index
    %0 = vector.load %arg0[%c0, %c0_0] : memref<16x768xbf16, #tpu.memory_space<vmem>>, vector<16x768xbf16>
    %c0_1 = arith.constant 0 : index
    %c0_2 = arith.constant 0 : index
    %1 = vector.load %arg1[%c0_1, %c0_2] : memref<768x512xbf16, #tpu.memory_space<vmem>>, vector<768x512xbf16>
    %cst = arith.constant dense<0.000000e+00> : vector<16x512xf32>
    %2 = tpu.matmul %0, %1, %cst {dimension_numbers = #tpu.dot_dimension_numbers<[1], [0], [0], [1], [0, 0, 1, 1], [], []>} : vector<16x768xbf16>, vector<768x512xbf16>, vector<16x512xf32> -> vector<16x512xf32>
    %c0_3 = arith.constant 0 : index
    %c0_4 = arith.constant 0 : index
    %3 = vector.load %arg2[%c0_3, %c0_4] : memref<1x512xf32, #tpu.memory_space<vmem>>, vector<1x512xf32>
    %4 = vector.broadcast %3 : vector<1x512xf32> to vector<16x512xf32>
    %5 = arith.addf %2, %4 : vector<16x512xf32>
    %cst_5 = arith.constant 0.000000e+00 : f32
    %6 = vector.broadcast %cst_5 : f32 to vector<16x512xf32>
    %7 = arith.maximumf %5, %6 : vector<16x512xf32>
    %c0_6 = arith.constant 0 : index
    %c0_7 = arith.constant 0 : index
    %8 = vector.load %arg3[%c0_6, %c0_7] : memref<512x384xf32, #tpu.memory_space<vmem>>, vector<512x384xf32>
    %cst_8 = arith.constant dense<0.000000e+00> : vector<16x384xf32>
    %9 = tpu.matmul %7, %8, %cst_8 {dimension_numbers = #tpu.dot_dimension_numbers<[1], [0], [0], [1], [0, 0, 1, 1], [], []>} : vector<16x512xf32>, vector<512x384xf32>, vector<16x384xf32> -> vector<16x384xf32>
    %c0_9 = arith.constant 0 : index
    %c0_10 = arith.constant 0 : index
    %10 = vector.load %arg4[%c0_9, %c0_10] : memref<1x384xf32, #tpu.memory_space<vmem>>, vector<1x384xf32>
    %11 = vector.broadcast %10 : vector<1x384xf32> to vector<16x384xf32>
    %12 = arith.addf %9, %11 : vector<16x384xf32>
    %13 = arith.negf %12 : vector<16x384xf32>
    %14 = math.exp %13 : vector<16x384xf32>
    %cst_11 = arith.constant 1.000000e+00 : f32
    %15 = vector.broadcast %cst_11 : f32 to vector<16x384xf32>
    %16 = arith.addf %15, %14 : vector<16x384xf32>
    %17 = arith.divf %15, %16 : vector<16x384xf32>
    %c0_12 = arith.constant 0 : index
    %c0_13 = arith.constant 0 : index
    %18 = vector.load %arg5[%c0_12, %c0_13] : memref<384x512xf32, #tpu.memory_space<vmem>>, vector<384x512xf32>
    %cst_14 = arith.constant dense<0.000000e+00> : vector<16x512xf32>
    %19 = tpu.matmul %17, %18, %cst_14 {dimension_numbers = #tpu.dot_dimension_numbers<[1], [0], [0], [1], [0, 0, 1, 1], [], []>} : vector<16x384xf32>, vector<384x512xf32>, vector<16x512xf32> -> vector<16x512xf32>
    %c0_15 = arith.constant 0 : index
    %c0_16 = arith.constant 0 : index
    %20 = vector.load %arg6[%c0_15, %c0_16] : memref<1x512xf32, #tpu.memory_space<vmem>>, vector<1x512xf32>
    %21 = vector.broadcast %20 : vector<1x512xf32> to vector<16x512xf32>
    %22 = arith.addf %19, %21 : vector<16x512xf32>
    %cst_17 = arith.constant 0.000000e+00 : f32
    %23 = vector.broadcast %cst_17 : f32 to vector<16x512xf32>
    %24 = arith.maximumf %22, %23 : vector<16x512xf32>
    %25 = arith.truncf %24 : vector<16x512xf32> to vector<16x512xbf16>
    %c0_18 = arith.constant 0 : index
    %c0_19 = arith.constant 0 : index
    %26 = vector.load %arg7[%c0_18, %c0_19] : memref<512x768xbf16, #tpu.memory_space<vmem>>, vector<512x768xbf16>
    %cst_20 = arith.constant dense<0.000000e+00> : vector<16x768xf32>
    %27 = tpu.matmul %25, %26, %cst_20 {dimension_numbers = #tpu.dot_dimension_numbers<[1], [0], [0], [1], [0, 0, 1, 1], [], []>} : vector<16x512xbf16>, vector<512x768xbf16>, vector<16x768xf32> -> vector<16x768xf32>
    %c0_21 = arith.constant 0 : index
    %c0_22 = arith.constant 0 : index
    %28 = vector.load %arg8[%c0_21, %c0_22] : memref<1x768xf32, #tpu.memory_space<vmem>>, vector<1x768xf32>
    %29 = vector.broadcast %28 : vector<1x768xf32> to vector<16x768xf32>
    %30 = arith.addf %27, %29 : vector<16x768xf32>
    %31 = arith.negf %30 : vector<16x768xf32>
    %32 = math.exp %31 : vector<16x768xf32>
    %cst_23 = arith.constant 1.000000e+00 : f32
    %33 = vector.broadcast %cst_23 : f32 to vector<16x768xf32>
    %34 = arith.addf %33, %32 : vector<16x768xf32>
    %35 = arith.divf %33, %34 : vector<16x768xf32>
    %c0_24 = arith.constant 0 : index
    %c0_25 = arith.constant 0 : index
    %36 = vector.load %arg9[%c0_24, %c0_25] : memref<16x768xf32, #tpu.memory_space<vmem>>, vector<16x768xf32>
    tpu.vector_store %arg9[%c0_24, %c0_25], %35 {strides = array<i32>} : memref<16x768xf32, #tpu.memory_space<vmem>>, vector<16x768xf32>,
    return
  }
}

</mosaic_0001>

<llo_original>
// kernel: net_forward.1
$region0: #{net_forward.1}
  #allocation0 [shape = 'u32[]', space=smem, size = 0x4, offset = 0x4, fixed_abs, tag = 'smem constant byte address 0x4 - core index']
  #allocation1 [shape = 'u32[144,128]{1,0:T(1,128)}', space=vmem, size = 0x12000, scoped, tag = 'internal scratch']
  %s0 = inlined_call_operand.vmem [shape: bf16[16,768], index: 0, kind: input, shape index: {}]
  %s1 = inlined_call_operand.hbm [shape: bf16[768,512], index: 1, kind: input, shape index: {}]
  %s2 = inlined_call_operand.vmem [shape: f32[1,512], index: 2, kind: input, shape index: {}]
  %s3 = inlined_call_operand.hbm [shape: f32[512,384], index: 3, kind: input, shape index: {}]
  %s4 = inlined_call_operand.vmem [shape: f32[1,384], index: 4, kind: input, shape index: {}]
  %s5 = inlined_call_operand.hbm [shape: f32[384,512], index: 5, kind: input, shape index: {}]
  %s6 = inlined_call_operand.vmem [shape: f32[1,512], index: 6, kind: input, shape index: {}]
  %s7 = inlined_call_operand.hbm [shape: bf16[512,768], index: 7, kind: input, shape index: {}]
  %s8 = inlined_call_operand.vmem [shape: f32[1,768], index: 8, kind: input, shape index: {}]
  %s9 = inlined_call_operand.vmem [shape: f32[16,768], index: 9, kind: output, shape index: {}]
  %s10 = sld [smem:[#allocation0]]
  $region62: #{net_forward.1} parent=0
    _
  %s12 = ssub.s32 1, %s10
  %s13 = scalar_select 0, %s12, %s10
  $region1: #{net_forward.1} parent=0
    #allocation2 [shape = 'u8[786432]{0}', space=vmem, size = 0xc0000, scoped, tag = 'input window, operand 1, single buffered']
    #allocation3 [shape = 's32[1]{0}', space=sflag, size = 0x4, scoped, tag = 'scoped memory for net_forward.1']
    #allocation4 [shape = 'u8[786432]{0}', space=vmem, size = 0xc0000, scoped, tag = 'input window, operand 3, single buffered']
    #allocation5 [shape = 's32[1]{0}', space=sflag, size = 0x4, scoped, tag = 'scoped memory for net_forward.1']
    #allocation6 [shape = 'u8[786432]{0}', space=vmem, size = 0xc0000, scoped, tag = 'input window, operand 5, single buffered']
    #allocation7 [shape = 'u8[786432]{0}', space=vmem, size = 0xc0000, scoped, tag = 'input window, operand 7, single buffered']
    #allocation8 [shape = 's32[1]{0}', space=sflag, size = 0x4, scoped, tag = 'scoped memory for net_forward.1']
    %14 = vsyncpa [#allocation3], 0
    %15 = vsyncpa [#allocation5], 0
    %16 = vsyncpa [#allocation8], 0
    // Predicated region
    $region2: #{net_forward.1} parent=1 // pred_check
      _
    $region3: #{net_forward.1} parent=1 // pred_check_branch
      %18 = sbr.rel (0) target = $region5
    $region4: #{net_forward.1} parent=1 // pred_region
      _
    $region5: #{net_forward.1} parent=1 // pred_fallthru
      _
    // Predicated region
    $region6: #{net_forward.1} parent=1 // pred_check
      _
    $region7: #{net_forward.1} parent=1 // pred_check_branch
      %20 = sbr.rel (0) target = $region9
    $region8: #{net_forward.1} parent=1 // pred_region
      %s22 = ssub.s32 24576, 24576
      %23 = vsyncadd [#allocation3], %s22
      %s24 = sshll.u32 [#allocation2], 4
      %s25 = int_to_ptr.vmem [resolvable:$true] %s24
      %30 = dma.hbm_to_vmem [thread:$0]  %s1, 24576, %s25, [#allocation3], 256, 256, 16
    $region9: #{net_forward.1} parent=1 // pred_fallthru
      _
    // Predicated region
    $region10: #{net_forward.1} parent=1 // pred_check
      _
    $region11: #{net_forward.1} parent=1 // pred_check_branch
      %32 = sbr.rel (0) target = $region13
    $region12: #{net_forward.1} parent=1 // pred_region
      _
    $region13: #{net_forward.1} parent=1 // pred_fallthru
      _
    // Predicated region
    $region14: #{net_forward.1} parent=1 // pred_check
      _
    $region15: #{net_forward.1} parent=1 // pred_check_branch
      %34 = sbr.rel (0) target = $region17
    $region16: #{net_forward.1} parent=1 // pred_region
      %s36 = ssub.s32 24576, 24576
      %37 = vsyncadd [#allocation5], %s36
      %s38 = sshll.u32 [#allocation4], 4
      %s39 = int_to_ptr.vmem [resolvable:$true] %s38
      %44 = dma.hbm_to_vmem [thread:$0]  %s3, 24576, %s39, [#allocation5], 384, 384, 24
    $region17: #{net_forward.1} parent=1 // pred_fallthru
      _
    // Predicated region
    $region18: #{net_forward.1} parent=1 // pred_check
      _
    $region19: #{net_forward.1} parent=1 // pred_check_branch
      %46 = sbr.rel (0) target = $region21
    $region20: #{net_forward.1} parent=1 // pred_region
      _
    $region21: #{net_forward.1} parent=1 // pred_fallthru
      _
    // Predicated region
    $region22: #{net_forward.1} parent=1 // pred_check
      _
    $region23: #{net_forward.1} parent=1 // pred_check_branch
      %48 = sbr.rel (0) target = $region25
    $region24: #{net_forward.1} parent=1 // pred_region
      %s50 = ssub.s32 24576, 24576
      %51 = vsyncadd [#allocation5], %s50
      %s52 = sshll.u32 [#allocation6], 4
      %s53 = int_to_ptr.vmem [resolvable:$true] %s52
      %58 = dma.hbm_to_vmem [thread:$0]  %s5, 24576, %s53, [#allocation5], 512, 512, 32
    $region25: #{net_forward.1} parent=1 // pred_fallthru
      _
    // Predicated region
    $region26: #{net_forward.1} parent=1 // pred_check
      _
    $region27: #{net_forward.1} parent=1 // pred_check_branch
      %60 = sbr.rel (0) target = $region29
    $region28: #{net_forward.1} parent=1 // pred_region
      _
    $region29: #{net_forward.1} parent=1 // pred_fallthru
      _
    // Predicated region
    $region30: #{net_forward.1} parent=1 // pred_check
      _
    $region31: #{net_forward.1} parent=1 // pred_check_branch
      %62 = sbr.rel (0) target = $region33
    $region32: #{net_forward.1} parent=1 // pred_region
      %s64 = ssub.s32 24576, 24576
      %65 = vsyncadd [#allocation8], %s64
      %s66 = sshll.u32 [#allocation7], 4
      %s67 = int_to_ptr.vmem [resolvable:$true] %s66
      %72 = dma.hbm_to_vmem [thread:$0]  %s7, 24576, %s67, [#allocation8], 384, 384, 24
    $region33: #{net_forward.1} parent=1 // pred_fallthru
      _
    // Predicated region
    $region34: #{net_forward.1} parent=1 // pred_check
      _
    $region35: #{net_forward.1} parent=1 // pred_check_branch
      %74 = sbr.rel (0) target = $region37
    $region36: #{net_forward.1} parent=1 // pred_region
      _
    $region37: #{net_forward.1} parent=1 // pred_fallthru
      _
    // Predicated region
    $region38: #{net_forward.1} parent=1 // pred_check
      _
    $region39: #{net_forward.1} parent=1 // pred_check_branch
      %76 = sbr.rel (0) target = $region41
    $region40: #{net_forward.1} parent=1 // pred_region
      %77 = dma.done [#allocation3], 24576
    $region41: #{net_forward.1} parent=1 // pred_fallthru
      _
    // Predicated region
    $region42: #{net_forward.1} parent=1 // pred_check
      _
    $region43: #{net_forward.1} parent=1 // pred_check_branch
      %79 = sbr.rel (0) target = $region45
    $region44: #{net_forward.1} parent=1 // pred_region
      %80 = dma.done [#allocation5], 24576
    $region45: #{net_forward.1} parent=1 // pred_fallthru
      _
    // Predicated region
    $region46: #{net_forward.1} parent=1 // pred_check
      _
    $region47: #{net_forward.1} parent=1 // pred_check_branch
      %82 = sbr.rel (0) target = $region49
    $region48: #{net_forward.1} parent=1 // pred_region
      %83 = dma.done [#allocation5], 24576
    $region49: #{net_forward.1} parent=1 // pred_fallthru
      _
    // Predicated region
    $region50: #{net_forward.1} parent=1 // pred_check
      _
    $region51: #{net_forward.1} parent=1 // pred_check_branch
      %85 = sbr.rel (0) target = $region53
    $region52: #{net_forward.1} parent=1 // pred_region
      %86 = dma.done [#allocation8], 24576
    $region53: #{net_forward.1} parent=1 // pred_fallthru
      _
    %v87 = vld [vmem:[%s0] sm:$0xff]
    %v88 = vld [vmem:[%s0 + $0x8] sm:$0xff]
    %v89 = vld [vmem:[%s0 + $0x10] sm:$0xff]
    %v90 = vld [vmem:[%s0 + $0x18] sm:$0xff]
    %v91 = vld [vmem:[%s0 + $0x20] sm:$0xff]
    %v92 = vld [vmem:[%s0 + $0x28] sm:$0xff]
    %v93 = vld [vmem:[#allocation2] sm:$0xff]
    %v94 = vld [vmem:[#allocation2 + $0x8] sm:$0xff]
    %v95 = vld [vmem:[#allocation2 + $0x10] sm:$0xff]
    %v96 = vld [vmem:[#allocation2 + $0x18] sm:$0xff]
    %v97 = vld [vmem:[#allocation2 + $0x20] sm:$0xff]
    %v98 = vld [vmem:[#allocation2 + $0x28] sm:$0xff]
    %v99 = vld [vmem:[#allocation2 + $0x30] sm:$0xff]
    %v100 = vld [vmem:[#allocation2 + $0x38] sm:$0xff]
    %v101 = vld [vmem:[#allocation2 + $0x40] sm:$0xff]
    %v102 = vld [vmem:[#allocation2 + $0x48] sm:$0xff]
    %v103 = vld [vmem:[#allocation2 + $0x50] sm:$0xff]
    %v104 = vld [vmem:[#allocation2 + $0x58] sm:$0xff]
    %v105 = vld [vmem:[#allocation2 + $0x60] sm:$0xff]
    %v106 = vld [vmem:[#allocation2 + $0x68] sm:$0xff]
    %v107 = vld [vmem:[#allocation2 + $0x70] sm:$0xff]
    %v108 = vld [vmem:[#allocation2 + $0x78] sm:$0xff]
    %v109 = vld [vmem:[#allocation2 + $0x80] sm:$0xff]
    %v110 = vld [vmem:[#allocation2 + $0x88] sm:$0xff]
    %v111 = vld [vmem:[#allocation2 + $0x90] sm:$0xff]
    %v112 = vld [vmem:[#allocation2 + $0x98] sm:$0xff]
    %v113 = vld [vmem:[#allocation2 + $0xa0] sm:$0xff]
    %v114 = vld [vmem:[#allocation2 + $0xa8] sm:$0xff]
    %v115 = vld [vmem:[#allocation2 + $0xb0] sm:$0xff]
    %v116 = vld [vmem:[#allocation2 + $0xb8] sm:$0xff]
    %v117 = vld [vmem:[#allocation2 + $0xc0] sm:$0xff]
    %v118 = vld [vmem:[#allocation2 + $0xc8] sm:$0xff]
    %v119 = vld [vmem:[#allocation2 + $0xd0] sm:$0xff]
    %v120 = vld [vmem:[#allocation2 + $0xd8] sm:$0xff]
    %v121 = vld [vmem:[#allocation2 + $0xe0] sm:$0xff]
    %v122 = vld [vmem:[#allocation2 + $0xe8] sm:$0xff]
    %v123 = vld [vmem:[#allocation2 + $0xf0] sm:$0xff]
    %v124 = vld [vmem:[#allocation2 + $0xf8] sm:$0xff]
    %v125 = vld [vmem:[#allocation2 + $0x100] sm:$0xff]
    %v126 = vld [vmem:[#allocation2 + $0x108] sm:$0xff]
    %v127 = vld [vmem:[#allocation2 + $0x110] sm:$0xff]
    %v128 = vld [vmem:[#allocation2 + $0x118] sm:$0xff]
    %v129 = vld [vmem:[#allocation2 + $0x120] sm:$0xff]
    %v130 = vld [vmem:[#allocation2 + $0x128] sm:$0xff]
    %v131 = vld [vmem:[#allocation2 + $0x130] sm:$0xff]
    %v132 = vld [vmem:[#allocation2 + $0x138] sm:$0xff]
    %v133 = vld [vmem:[#allocation2 + $0x140] sm:$0xff]
    %v134 = vld [vmem:[#allocation2 + $0x148] sm:$0xff]
    %v135 = vld [vmem:[#allocation2 + $0x150] sm:$0xff]
    %v136 = vld [vmem:[#allocation2 + $0x158] sm:$0xff]
    %v137 = vld [vmem:[#allocation2 + $0x160] sm:$0xff]
    %v138 = vld [vmem:[#allocation2 + $0x168] sm:$0xff]
    %v139 = vld [vmem:[#allocation2 + $0x170] sm:$0xff]
    %v140 = vld [vmem:[#allocation2 + $0x178] sm:$0xff]
    %v141 = vld [vmem:[#allocation2 + $0x180] sm:$0xff]
    %v142 = vld [vmem:[#allocation2 + $0x188] sm:$0xff]
    %v143 = vld [vmem:[#allocation2 + $0x190] sm:$0xff]
    %v144 = vld [vmem:[#allocation2 + $0x198] sm:$0xff]
    %v145 = vld [vmem:[#allocation2 + $0x1a0] sm:$0xff]
    %v146 = vld [vmem:[#allocation2 + $0x1a8] sm:$0xff]
    %v147 = vld [vmem:[#allocation2 + $0x1b0] sm:$0xff]
    %v148 = vld [vmem:[#allocation2 + $0x1b8] sm:$0xff]
    %v149 = vld [vmem:[#allocation2 + $0x1c0] sm:$0xff]
    %v150 = vld [vmem:[#allocation2 + $0x1c8] sm:$0xff]
    %v151 = vld [vmem:[#allocation2 + $0x1d0] sm:$0xff]
    %v152 = vld [vmem:[#allocation2 + $0x1d8] sm:$0xff]
    %v153 = vld [vmem:[#allocation2 + $0x1e0] sm:$0xff]
    %v154 = vld [vmem:[#allocation2 + $0x1e8] sm:$0xff]
    %v155 = vld [vmem:[#allocation2 + $0x1f0] sm:$0xff]
    %v156 = vld [vmem:[#allocation2 + $0x1f8] sm:$0xff]
    %v157 = vld [vmem:[#allocation2 + $0x200] sm:$0xff]
    %v158 = vld [vmem:[#allocation2 + $0x208] sm:$0xff]
    %v159 = vld [vmem:[#allocation2 + $0x210] sm:$0xff]
    %v160 = vld [vmem:[#allocation2 + $0x218] sm:$0xff]
    %v161 = vld [vmem:[#allocation2 + $0x220] sm:$0xff]
    %v162 = vld [vmem:[#allocation2 + $0x228] sm:$0xff]
    %v163 = vld [vmem:[#allocation2 + $0x230] sm:$0xff]
    %v164 = vld [vmem:[#allocation2 + $0x238] sm:$0xff]
    %v165 = vld [vmem:[#allocation2 + $0x240] sm:$0xff]
    %v166 = vld [vmem:[#allocation2 + $0x248] sm:$0xff]
    %v167 = vld [vmem:[#allocation2 + $0x250] sm:$0xff]
    %v168 = vld [vmem:[#allocation2 + $0x258] sm:$0xff]
    %v169 = vld [vmem:[#allocation2 + $0x260] sm:$0xff]
    %v170 = vld [vmem:[#allocation2 + $0x268] sm:$0xff]
    %v171 = vld [vmem:[#allocation2 + $0x270] sm:$0xff]
    %v172 = vld [vmem:[#allocation2 + $0x278] sm:$0xff]
    %v173 = vld [vmem:[#allocation2 + $0x280] sm:$0xff]
    %v174 = vld [vmem:[#allocation2 + $0x288] sm:$0xff]
    %v175 = vld [vmem:[#allocation2 + $0x290] sm:$0xff]
    %v176 = vld [vmem:[#allocation2 + $0x298] sm:$0xff]
    %v177 = vld [vmem:[#allocation2 + $0x2a0] sm:$0xff]
    %v178 = vld [vmem:[#allocation2 + $0x2a8] sm:$0xff]
    %v179 = vld [vmem:[#allocation2 + $0x2b0] sm:$0xff]
    %v180 = vld [vmem:[#allocation2 + $0x2b8] sm:$0xff]
    %v181 = vld [vmem:[#allocation2 + $0x2c0] sm:$0xff]
    %v182 = vld [vmem:[#allocation2 + $0x2c8] sm:$0xff]
    %v183 = vld [vmem:[#allocation2 + $0x2d0] sm:$0xff]
    %v184 = vld [vmem:[#allocation2 + $0x2d8] sm:$0xff]
    %v185 = vld [vmem:[#allocation2 + $0x2e0] sm:$0xff]
    %v186 = vld [vmem:[#allocation2 + $0x2e8] sm:$0xff]
    %v187 = vld [vmem:[#allocation2 + $0x2f0] sm:$0xff]
    %v188 = vld [vmem:[#allocation2 + $0x2f8] sm:$0xff]
    %v189 = vld [vmem:[#allocation2 + $0x300] sm:$0xff]
    %v190 = vld [vmem:[#allocation2 + $0x308] sm:$0xff]
    %v191 = vld [vmem:[#allocation2 + $0x310] sm:$0xff]
    %v192 = vld [vmem:[#allocation2 + $0x318] sm:$0xff]
    %v193 = vld [vmem:[#allocation2 + $0x320] sm:$0xff]
    %v194 = vld [vmem:[#allocation2 + $0x328] sm:$0xff]
    %v195 = vld [vmem:[#allocation2 + $0x330] sm:$0xff]
    %v196 = vld [vmem:[#allocation2 + $0x338] sm:$0xff]
    %v197 = vld [vmem:[#allocation2 + $0x340] sm:$0xff]
    %v198 = vld [vmem:[#allocation2 + $0x348] sm:$0xff]
    %v199 = vld [vmem:[#allocation2 + $0x350] sm:$0xff]
    %v200 = vld [vmem:[#allocation2 + $0x358] sm:$0xff]
    %v201 = vld [vmem:[#allocation2 + $0x360] sm:$0xff]
    %v202 = vld [vmem:[#allocation2 + $0x368] sm:$0xff]
    %v203 = vld [vmem:[#allocation2 + $0x370] sm:$0xff]
    %v204 = vld [vmem:[#allocation2 + $0x378] sm:$0xff]
    %v205 = vld [vmem:[#allocation2 + $0x380] sm:$0xff]
    %v206 = vld [vmem:[#allocation2 + $0x388] sm:$0xff]
    %v207 = vld [vmem:[#allocation2 + $0x390] sm:$0xff]
    %v208 = vld [vmem:[#allocation2 + $0x398] sm:$0xff]
    %v209 = vld [vmem:[#allocation2 + $0x3a0] sm:$0xff]
    %v210 = vld [vmem:[#allocation2 + $0x3a8] sm:$0xff]
    %v211 = vld [vmem:[#allocation2 + $0x3b0] sm:$0xff]
    %v212 = vld [vmem:[#allocation2 + $0x3b8] sm:$0xff]
    %v213 = vld [vmem:[#allocation2 + $0x3c0] sm:$0xff]
    %v214 = vld [vmem:[#allocation2 + $0x3c8] sm:$0xff]
    %v215 = vld [vmem:[#allocation2 + $0x3d0] sm:$0xff]
    %v216 = vld [vmem:[#allocation2 + $0x3d8] sm:$0xff]
    %v217 = vld [vmem:[#allocation2 + $0x3e0] sm:$0xff]
    %v218 = vld [vmem:[#allocation2 + $0x3e8] sm:$0xff]
    %v219 = vld [vmem:[#allocation2 + $0x3f0] sm:$0xff]
    %v220 = vld [vmem:[#allocation2 + $0x3f8] sm:$0xff]
    %v221 = vld [vmem:[#allocation2 + $0x400] sm:$0xff]
    %v222 = vld [vmem:[#allocation2 + $0x408] sm:$0xff]
    %v223 = vld [vmem:[#allocation2 + $0x410] sm:$0xff]
    %v224 = vld [vmem:[#allocation2 + $0x418] sm:$0xff]
    %v225 = vld [vmem:[#allocation2 + $0x420] sm:$0xff]
    %v226 = vld [vmem:[#allocation2 + $0x428] sm:$0xff]
    %v227 = vld [vmem:[#allocation2 + $0x430] sm:$0xff]
    %v228 = vld [vmem:[#allocation2 + $0x438] sm:$0xff]
    %v229 = vld [vmem:[#allocation2 + $0x440] sm:$0xff]
    %v230 = vld [vmem:[#allocation2 + $0x448] sm:$0xff]
    %v231 = vld [vmem:[#allocation2 + $0x450] sm:$0xff]
    %v232 = vld [vmem:[#allocation2 + $0x458] sm:$0xff]
    %v233 = vld [vmem:[#allocation2 + $0x460] sm:$0xff]
    %v234 = vld [vmem:[#allocation2 + $0x468] sm:$0xff]
    %v235 = vld [vmem:[#allocation2 + $0x470] sm:$0xff]
    %v236 = vld [vmem:[#allocation2 + $0x478] sm:$0xff]
    %v237 = vld [vmem:[#allocation2 + $0x480] sm:$0xff]
    %v238 = vld [vmem:[#allocation2 + $0x488] sm:$0xff]
    %v239 = vld [vmem:[#allocation2 + $0x490] sm:$0xff]
    %v240 = vld [vmem:[#allocation2 + $0x498] sm:$0xff]
    %v241 = vld [vmem:[#allocation2 + $0x4a0] sm:$0xff]
    %v242 = vld [vmem:[#allocation2 + $0x4a8] sm:$0xff]
    %v243 = vld [vmem:[#allocation2 + $0x4b0] sm:$0xff]
    %v244 = vld [vmem:[#allocation2 + $0x4b8] sm:$0xff]
    %v245 = vld [vmem:[#allocation2 + $0x4c0] sm:$0xff]
    %v246 = vld [vmem:[#allocation2 + $0x4c8] sm:$0xff]
    %v247 = vld [vmem:[#allocation2 + $0x4d0] sm:$0xff]
    %v248 = vld [vmem:[#allocation2 + $0x4d8] sm:$0xff]
    %v249 = vld [vmem:[#allocation2 + $0x4e0] sm:$0xff]
    %v250 = vld [vmem:[#allocation2 + $0x4e8] sm:$0xff]
    %v251 = vld [vmem:[#allocation2 + $0x4f0] sm:$0xff]
    %v252 = vld [vmem:[#allocation2 + $0x4f8] sm:$0xff]
    %v253 = vld [vmem:[#allocation2 + $0x500] sm:$0xff]
    %v254 = vld [vmem:[#allocation2 + $0x508] sm:$0xff]
    %v255 = vld [vmem:[#allocation2 + $0x510] sm:$0xff]
    %v256 = vld [vmem:[#allocation2 + $0x518] sm:$0xff]
    %v257 = vld [vmem:[#allocation2 + $0x520] sm:$0xff]
    %v258 = vld [vmem:[#allocation2 + $0x528] sm:$0xff]
    %v259 = vld [vmem:[#allocation2 + $0x530] sm:$0xff]
    %v260 = vld [vmem:[#allocation2 + $0x538] sm:$0xff]
    %v261 = vld [vmem:[#allocation2 + $0x540] sm:$0xff]
    %v262 = vld [vmem:[#allocation2 + $0x548] sm:$0xff]
    %v263 = vld [vmem:[#allocation2 + $0x550] sm:$0xff]
    %v264 = vld [vmem:[#allocation2 + $0x558] sm:$0xff]
    %v265 = vld [vmem:[#allocation2 + $0x560] sm:$0xff]
    %v266 = vld [vmem:[#allocation2 + $0x568] sm:$0xff]
    %v267 = vld [vmem:[#allocation2 + $0x570] sm:$0xff]
    %v268 = vld [vmem:[#allocation2 + $0x578] sm:$0xff]
    %v269 = vld [vmem:[#allocation2 + $0x580] sm:$0xff]
    %v270 = vld [vmem:[#allocation2 + $0x588] sm:$0xff]
    %v271 = vld [vmem:[#allocation2 + $0x590] sm:$0xff]
    %v272 = vld [vmem:[#allocation2 + $0x598] sm:$0xff]
    %v273 = vld [vmem:[#allocation2 + $0x5a0] sm:$0xff]
    %v274 = vld [vmem:[#allocation2 + $0x5a8] sm:$0xff]
    %v275 = vld [vmem:[#allocation2 + $0x5b0] sm:$0xff]
    %v276 = vld [vmem:[#allocation2 + $0x5b8] sm:$0xff]
    %v277 = vld [vmem:[#allocation2 + $0x5c0] sm:$0xff]
    %v278 = vld [vmem:[#allocation2 + $0x5c8] sm:$0xff]
    %v279 = vld [vmem:[#allocation2 + $0x5d0] sm:$0xff]
    %v280 = vld [vmem:[#allocation2 + $0x5d8] sm:$0xff]
    %v281 = vld [vmem:[#allocation2 + $0x5e0] sm:$0xff]
    %v282 = vld [vmem:[#allocation2 + $0x5e8] sm:$0xff]
    %v283 = vld [vmem:[#allocation2 + $0x5f0] sm:$0xff]
    %v284 = vld [vmem:[#allocation2 + $0x5f8] sm:$0xff]
    %v285 = vld [vmem:[%s2] sm:$0xf]
    %v287 = vlaneseq
    %v288 = vshrl.u32 %v287, 7
    %v289 = vsub.s32 0, %v288
    %v290 = vrot.slane %v285, %v289
    %v291 = vlaneseq
    %v292 = vshrl.u32 %v291, 7
    %v293 = vsub.s32 1, %v292
    %v294 = vrot.slane %v285, %v293
    %v295 = vlaneseq
    %v296 = vshrl.u32 %v295, 7
    %v297 = vsub.s32 2, %v296
    %v298 = vrot.slane %v285, %v297
    %v299 = vlaneseq
    %v300 = vshrl.u32 %v299, 7
    %v301 = vsub.s32 3, %v300
    %v302 = vrot.slane %v285, %v301
    %v313 = vunpack.c.l.b16 %v87
    %v314 = vunpack.c.h.b16 %v87
    %v315 = vunpack.c.l.b16 %v88
    %v316 = vunpack.c.h.b16 %v88
    %v317 = vunpack.c.l.b16 %v89
    %v318 = vunpack.c.h.b16 %v89
    %v319 = vunpack.c.l.b16 %v90
    %v320 = vunpack.c.h.b16 %v90
    %v321 = vunpack.c.l.b16 %v91
    %v322 = vunpack.c.h.b16 %v91
    %v323 = vunpack.c.l.b16 %v92
    %v324 = vunpack.c.h.b16 %v92
    %v325 = vpack.c.b16 %v319, %v313
    %v326 = vpack.c.b16 %v320, %v314
    %v327 = vpack.c.b16 %v321, %v315
    %v328 = vpack.c.b16 %v322, %v316
    %v329 = vpack.c.b16 %v323, %v317
    %v330 = vpack.c.b16 %v324, %v318
    %v529 = vunpack.c.l.b16 %v93
    %v530 = vunpack.c.h.b16 %v93
    %v531 = vunpack.c.l.b16 %v94
    %v532 = vunpack.c.h.b16 %v94
    %v533 = vunpack.c.l.b16 %v95
    %v534 = vunpack.c.h.b16 %v95
    %v535 = vunpack.c.l.b16 %v96
    %v536 = vunpack.c.h.b16 %v96
    %v537 = vunpack.c.l.b16 %v97
    %v538 = vunpack.c.h.b16 %v97
    %v539 = vunpack.c.l.b16 %v98
    %v540 = vunpack.c.h.b16 %v98
    %v541 = vunpack.c.l.b16 %v99
    %v542 = vunpack.c.h.b16 %v99
    %v543 = vunpack.c.l.b16 %v100
    %v544 = vunpack.c.h.b16 %v100
    %v545 = vunpack.c.l.b16 %v101
    %v546 = vunpack.c.h.b16 %v101
    %v547 = vunpack.c.l.b16 %v102
    %v548 = vunpack.c.h.b16 %v102
    %v549 = vunpack.c.l.b16 %v103
    %v550 = vunpack.c.h.b16 %v103
    %v551 = vunpack.c.l.b16 %v104
    %v552 = vunpack.c.h.b16 %v104
    %v553 = vunpack.c.l.b16 %v105
    %v554 = vunpack.c.h.b16 %v105
    %v555 = vunpack.c.l.b16 %v106
    %v556 = vunpack.c.h.b16 %v106
    %v557 = vunpack.c.l.b16 %v107
    %v558 = vunpack.c.h.b16 %v107
    %v559 = vunpack.c.l.b16 %v108
    %v560 = vunpack.c.h.b16 %v108
    %v561 = vunpack.c.l.b16 %v109
    %v562 = vunpack.c.h.b16 %v109
    %v563 = vunpack.c.l.b16 %v110
    %v564 = vunpack.c.h.b16 %v110
    %v565 = vunpack.c.l.b16 %v111
    %v566 = vunpack.c.h.b16 %v111
    %v567 = vunpack.c.l.b16 %v112
    %v568 = vunpack.c.h.b16 %v112
    %v569 = vunpack.c.l.b16 %v113
    %v570 = vunpack.c.h.b16 %v113
    %v571 = vunpack.c.l.b16 %v114
    %v572 = vunpack.c.h.b16 %v114
    %v573 = vunpack.c.l.b16 %v115
    %v574 = vunpack.c.h.b16 %v115
    %v575 = vunpack.c.l.b16 %v116
    %v576 = vunpack.c.h.b16 %v116
    %v577 = vunpack.c.l.b16 %v117
    %v578 = vunpack.c.h.b16 %v117
    %v579 = vunpack.c.l.b16 %v118
    %v580 = vunpack.c.h.b16 %v118
    %v581 = vunpack.c.l.b16 %v119
    %v582 = vunpack.c.h.b16 %v119
    %v583 = vunpack.c.l.b16 %v120
    %v584 = vunpack.c.h.b16 %v120
    %v585 = vunpack.c.l.b16 %v121
    %v586 = vunpack.c.h.b16 %v121
    %v587 = vunpack.c.l.b16 %v122
    %v588 = vunpack.c.h.b16 %v122
    %v589 = vunpack.c.l.b16 %v123
    %v590 = vunpack.c.h.b16 %v123
    %v591 = vunpack.c.l.b16 %v124
    %v592 = vunpack.c.h.b16 %v124
    %v593 = vunpack.c.l.b16 %v125
    %v594 = vunpack.c.h.b16 %v125
    %v595 = vunpack.c.l.b16 %v126
    %v596 = vunpack.c.h.b16 %v126
    %v597 = vunpack.c.l.b16 %v127
    %v598 = vunpack.c.h.b16 %v127
    %v599 = vunpack.c.l.b16 %v128
    %v600 = vunpack.c.h.b16 %v128
    %v601 = vunpack.c.l.b16 %v129
    %v602 = vunpack.c.h.b16 %v129
    %v603 = vunpack.c.l.b16 %v130
    %v604 = vunpack.c.h.b16 %v130
    %v605 = vunpack.c.l.b16 %v131
    %v606 = vunpack.c.h.b16 %v131
    %v607 = vunpack.c.l.b16 %v132
    %v608 = vunpack.c.h.b16 %v132
    %v609 = vunpack.c.l.b16 %v133
    %v610 = vunpack.c.h.b16 %v133
    %v611 = vunpack.c.l.b16 %v134
    %v612 = vunpack.c.h.b16 %v134
    %v613 = vunpack.c.l.b16 %v135
    %v614 = vunpack.c.h.b16 %v135
    %v615 = vunpack.c.l.b16 %v136
    %v616 = vunpack.c.h.b16 %v136
    %v617 = vunpack.c.l.b16 %v137
    %v618 = vunpack.c.h.b16 %v137
    %v619 = vunpack.c.l.b16 %v138
    %v620 = vunpack.c.h.b16 %v138
    %v621 = vunpack.c.l.b16 %v139
    %v622 = vunpack.c.h.b16 %v139
    %v623 = vunpack.c.l.b16 %v140
    %v624 = vunpack.c.h.b16 %v140
    %v625 = vunpack.c.l.b16 %v141
    %v626 = vunpack.c.h.b16 %v141
    %v627 = vunpack.c.l.b16 %v142
    %v628 = vunpack.c.h.b16 %v142
    %v629 = vunpack.c.l.b16 %v143
    %v630 = vunpack.c.h.b16 %v143
    %v631 = vunpack.c.l.b16 %v144
    %v632 = vunpack.c.h.b16 %v144
    %v633 = vunpack.c.l.b16 %v145
    %v634 = vunpack.c.h.b16 %v145
    %v635 = vunpack.c.l.b16 %v146
    %v636 = vunpack.c.h.b16 %v146
    %v637 = vunpack.c.l.b16 %v147
    %v638 = vunpack.c.h.b16 %v147
    %v639 = vunpack.c.l.b16 %v148
    %v640 = vunpack.c.h.b16 %v148
    %v641 = vunpack.c.l.b16 %v149
    %v642 = vunpack.c.h.b16 %v149
    %v643 = vunpack.c.l.b16 %v150
    %v644 = vunpack.c.h.b16 %v150
    %v645 = vunpack.c.l.b16 %v151
    %v646 = vunpack.c.h.b16 %v151
    %v647 = vunpack.c.l.b16 %v152
    %v648 = vunpack.c.h.b16 %v152
    %v649 = vunpack.c.l.b16 %v153
    %v650 = vunpack.c.h.b16 %v153
    %v651 = vunpack.c.l.b16 %v154
    %v652 = vunpack.c.h.b16 %v154
    %v653 = vunpack.c.l.b16 %v155
    %v654 = vunpack.c.h.b16 %v155
    %v655 = vunpack.c.l.b16 %v156
    %v656 = vunpack.c.h.b16 %v156
    %v657 = vunpack.c.l.b16 %v157
    %v658 = vunpack.c.h.b16 %v157
    %v659 = vunpack.c.l.b16 %v158
    %v660 = vunpack.c.h.b16 %v158
    %v661 = vunpack.c.l.b16 %v159
    %v662 = vunpack.c.h.b16 %v159
    %v663 = vunpack.c.l.b16 %v160
    %v664 = vunpack.c.h.b16 %v160
    %v665 = vunpack.c.l.b16 %v161
    %v666 = vunpack.c.h.b16 %v161
    %v667 = vunpack.c.l.b16 %v162
    %v668 = vunpack.c.h.b16 %v162
    %v669 = vunpack.c.l.b16 %v163
    %v670 = vunpack.c.h.b16 %v163
    %v671 = vunpack.c.l.b16 %v164
    %v672 = vunpack.c.h.b16 %v164
    %v673 = vunpack.c.l.b16 %v165
    %v674 = vunpack.c.h.b16 %v165
    %v675 = vunpack.c.l.b16 %v166
    %v676 = vunpack.c.h.b16 %v166
    %v677 = vunpack.c.l.b16 %v167
    %v678 = vunpack.c.h.b16 %v167
    %v679 = vunpack.c.l.b16 %v168
    %v680 = vunpack.c.h.b16 %v168
    %v681 = vunpack.c.l.b16 %v169
    %v682 = vunpack.c.h.b16 %v169
    %v683 = vunpack.c.l.b16 %v170
    %v684 = vunpack.c.h.b16 %v170
    %v685 = vunpack.c.l.b16 %v171
    %v686 = vunpack.c.h.b16 %v171
    %v687 = vunpack.c.l.b16 %v172
    %v688 = vunpack.c.h.b16 %v172
    %v689 = vunpack.c.l.b16 %v173
    %v690 = vunpack.c.h.b16 %v173
    %v691 = vunpack.c.l.b16 %v174
    %v692 = vunpack.c.h.b16 %v174
    %v693 = vunpack.c.l.b16 %v175
    %v694 = vunpack.c.h.b16 %v175
    %v695 = vunpack.c.l.b16 %v176
    %v696 = vunpack.c.h.b16 %v176
    %v697 = vunpack.c.l.b16 %v177
    %v698 = vunpack.c.h.b16 %v177
    %v699 = vunpack.c.l.b16 %v178
    %v700 = vunpack.c.h.b16 %v178
    %v701 = vunpack.c.l.b16 %v179
    %v702 = vunpack.c.h.b16 %v179
    %v703 = vunpack.c.l.b16 %v180
    %v704 = vunpack.c.h.b16 %v180
    %v705 = vunpack.c.l.b16 %v181
    %v706 = vunpack.c.h.b16 %v181
    %v707 = vunpack.c.l.b16 %v182
    %v708 = vunpack.c.h.b16 %v182
    %v709 = vunpack.c.l.b16 %v183
    %v710 = vunpack.c.h.b16 %v183
    %v711 = vunpack.c.l.b16 %v184
    %v712 = vunpack.c.h.b16 %v184
    %v713 = vunpack.c.l.b16 %v185
    %v714 = vunpack.c.h.b16 %v185
    %v715 = vunpack.c.l.b16 %v186
    %v716 = vunpack.c.h.b16 %v186
    %v717 = vunpack.c.l.b16 %v187
    %v718 = vunpack.c.h.b16 %v187
    %v719 = vunpack.c.l.b16 %v188
    %v720 = vunpack.c.h.b16 %v188
    %v721 = vunpack.c.l.b16 %v189
    %v722 = vunpack.c.h.b16 %v189
    %v723 = vunpack.c.l.b16 %v190
    %v724 = vunpack.c.h.b16 %v190
    %v725 = vunpack.c.l.b16 %v191
    %v726 = vunpack.c.h.b16 %v191
    %v727 = vunpack.c.l.b16 %v192
    %v728 = vunpack.c.h.b16 %v192
    %v729 = vunpack.c.l.b16 %v193
    %v730 = vunpack.c.h.b16 %v193
    %v731 = vunpack.c.l.b16 %v194
    %v732 = vunpack.c.h.b16 %v194
    %v733 = vunpack.c.l.b16 %v195
    %v734 = vunpack.c.h.b16 %v195
    %v735 = vunpack.c.l.b16 %v196
    %v736 = vunpack.c.h.b16 %v196
    %v737 = vunpack.c.l.b16 %v197
    %v738 = vunpack.c.h.b16 %v197
    %v739 = vunpack.c.l.b16 %v198
    %v740 = vunpack.c.h.b16 %v198
    %v741 = vunpack.c.l.b16 %v199
    %v742 = vunpack.c.h.b16 %v199
    %v743 = vunpack.c.l.b16 %v200
    %v744 = vunpack.c.h.b16 %v200
    %v745 = vunpack.c.l.b16 %v201
    %v746 = vunpack.c.h.b16 %v201
    %v747 = vunpack.c.l.b16 %v202
    %v748 = vunpack.c.h.b16 %v202
    %v749 = vunpack.c.l.b16 %v203
    %v750 = vunpack.c.h.b16 %v203
    %v751 = vunpack.c.l.b16 %v204
    %v752 = vunpack.c.h.b16 %v204
    %v753 = vunpack.c.l.b16 %v205
    %v754 = vunpack.c.h.b16 %v205
    %v755 = vunpack.c.l.b16 %v206
    %v756 = vunpack.c.h.b16 %v206
    %v757 = vunpack.c.l.b16 %v207
    %v758 = vunpack.c.h.b16 %v207
    %v759 = vunpack.c.l.b16 %v208
    %v760 = vunpack.c.h.b16 %v208
    %v761 = vunpack.c.l.b16 %v209
    %v762 = vunpack.c.h.b16 %v209
    %v763 = vunpack.c.l.b16 %v210
    %v764 = vunpack.c.h.b16 %v210
    %v765 = vunpack.c.l.b16 %v211
    %v766 = vunpack.c.h.b16 %v211
    %v767 = vunpack.c.l.b16 %v212
    %v768 = vunpack.c.h.b16 %v212
    %v769 = vunpack.c.l.b16 %v213
    %v770 = vunpack.c.h.b16 %v213
    %v771 = vunpack.c.l.b16 %v214
    %v772 = vunpack.c.h.b16 %v214
    %v773 = vunpack.c.l.b16 %v215
    %v774 = vunpack.c.h.b16 %v215
    %v775 = vunpack.c.l.b16 %v216
    %v776 = vunpack.c.h.b16 %v216
    %v777 = vunpack.c.l.b16 %v217
    %v778 = vunpack.c.h.b16 %v217
    %v779 = vunpack.c.l.b16 %v218
    %v780 = vunpack.c.h.b16 %v218
    %v781 = vunpack.c.l.b16 %v219
    %v782 = vunpack.c.h.b16 %v219
    %v783 = vunpack.c.l.b16 %v220
    %v784 = vunpack.c.h.b16 %v220
    %v785 = vunpack.c.l.b16 %v221
    %v786 = vunpack.c.h.b16 %v221
    %v787 = vunpack.c.l.b16 %v222
    %v788 = vunpack.c.h.b16 %v222
    %v789 = vunpack.c.l.b16 %v223
    %v790 = vunpack.c.h.b16 %v223
    %v791 = vunpack.c.l.b16 %v224
    %v792 = vunpack.c.h.b16 %v224
    %v793 = vunpack.c.l.b16 %v225
    %v794 = vunpack.c.h.b16 %v225
    %v795 = vunpack.c.l.b16 %v226
    %v796 = vunpack.c.h.b16 %v226
    %v797 = vunpack.c.l.b16 %v227
    %v798 = vunpack.c.h.b16 %v227
    %v799 = vunpack.c.l.b16 %v228
    %v800 = vunpack.c.h.b16 %v228
    %v801 = vunpack.c.l.b16 %v229
    %v802 = vunpack.c.h.b16 %v229
    %v803 = vunpack.c.l.b16 %v230
    %v804 = vunpack.c.h.b16 %v230
    %v805 = vunpack.c.l.b16 %v231
    %v806 = vunpack.c.h.b16 %v231
    %v807 = vunpack.c.l.b16 %v232
    %v808 = vunpack.c.h.b16 %v232
    %v809 = vunpack.c.l.b16 %v233
    %v810 = vunpack.c.h.b16 %v233
    %v811 = vunpack.c.l.b16 %v234
    %v812 = vunpack.c.h.b16 %v234
    %v813 = vunpack.c.l.b16 %v235
    %v814 = vunpack.c.h.b16 %v235
    %v815 = vunpack.c.l.b16 %v236
    %v816 = vunpack.c.h.b16 %v236
    %v817 = vunpack.c.l.b16 %v237
    %v818 = vunpack.c.h.b16 %v237
    %v819 = vunpack.c.l.b16 %v238
    %v820 = vunpack.c.h.b16 %v238
    %v821 = vunpack.c.l.b16 %v239
    %v822 = vunpack.c.h.b16 %v239
    %v823 = vunpack.c.l.b16 %v240
    %v824 = vunpack.c.h.b16 %v240
    %v825 = vunpack.c.l.b16 %v241
    %v826 = vunpack.c.h.b16 %v241
    %v827 = vunpack.c.l.b16 %v242
    %v828 = vunpack.c.h.b16 %v242
    %v829 = vunpack.c.l.b16 %v243
    %v830 = vunpack.c.h.b16 %v243
    %v831 = vunpack.c.l.b16 %v244
    %v832 = vunpack.c.h.b16 %v244
    %v833 = vunpack.c.l.b16 %v245
    %v834 = vunpack.c.h.b16 %v245
    %v835 = vunpack.c.l.b16 %v246
    %v836 = vunpack.c.h.b16 %v246
    %v837 = vunpack.c.l.b16 %v247
    %v838 = vunpack.c.h.b16 %v247
    %v839 = vunpack.c.l.b16 %v248
    %v840 = vunpack.c.h.b16 %v248
    %v841 = vunpack.c.l.b16 %v249
    %v842 = vunpack.c.h.b16 %v249
    %v843 = vunpack.c.l.b16 %v250
    %v844 = vunpack.c.h.b16 %v250
    %v845 = vunpack.c.l.b16 %v251
    %v846 = vunpack.c.h.b16 %v251
    %v847 = vunpack.c.l.b16 %v252
    %v848 = vunpack.c.h.b16 %v252
    %v849 = vunpack.c.l.b16 %v253
    %v850 = vunpack.c.h.b16 %v253
    %v851 = vunpack.c.l.b16 %v254
    %v852 = vunpack.c.h.b16 %v254
    %v853 = vunpack.c.l.b16 %v255
    %v854 = vunpack.c.h.b16 %v255
    %v855 = vunpack.c.l.b16 %v256
    %v856 = vunpack.c.h.b16 %v256
    %v857 = vunpack.c.l.b16 %v257
    %v858 = vunpack.c.h.b16 %v257
    %v859 = vunpack.c.l.b16 %v258
    %v860 = vunpack.c.h.b16 %v258
    %v861 = vunpack.c.l.b16 %v259
    %v862 = vunpack.c.h.b16 %v259
    %v863 = vunpack.c.l.b16 %v260
    %v864 = vunpack.c.h.b16 %v260
    %v865 = vunpack.c.l.b16 %v261
    %v866 = vunpack.c.h.b16 %v261
    %v867 = vunpack.c.l.b16 %v262
    %v868 = vunpack.c.h.b16 %v262
    %v869 = vunpack.c.l.b16 %v263
    %v870 = vunpack.c.h.b16 %v263
    %v871 = vunpack.c.l.b16 %v264
    %v872 = vunpack.c.h.b16 %v264
    %v873 = vunpack.c.l.b16 %v265
    %v874 = vunpack.c.h.b16 %v265
    %v875 = vunpack.c.l.b16 %v266
    %v876 = vunpack.c.h.b16 %v266
    %v877 = vunpack.c.l.b16 %v267
    %v878 = vunpack.c.h.b16 %v267
    %v879 = vunpack.c.l.b16 %v268
    %v880 = vunpack.c.h.b16 %v268
    %v881 = vunpack.c.l.b16 %v269
    %v882 = vunpack.c.h.b16 %v269
    %v883 = vunpack.c.l.b16 %v270
    %v884 = vunpack.c.h.b16 %v270
    %v885 = vunpack.c.l.b16 %v271
    %v886 = vunpack.c.h.b16 %v271
    %v887 = vunpack.c.l.b16 %v272
    %v888 = vunpack.c.h.b16 %v272
    %v889 = vunpack.c.l.b16 %v273
    %v890 = vunpack.c.h.b16 %v273
    %v891 = vunpack.c.l.b16 %v274
    %v892 = vunpack.c.h.b16 %v274
    %v893 = vunpack.c.l.b16 %v275
    %v894 = vunpack.c.h.b16 %v275
    %v895 = vunpack.c.l.b16 %v276
    %v896 = vunpack.c.h.b16 %v276
    %v897 = vunpack.c.l.b16 %v277
    %v898 = vunpack.c.h.b16 %v277
    %v899 = vunpack.c.l.b16 %v278
    %v900 = vunpack.c.h.b16 %v278
    %v901 = vunpack.c.l.b16 %v279
    %v902 = vunpack.c.h.b16 %v279
    %v903 = vunpack.c.l.b16 %v280
    %v904 = vunpack.c.h.b16 %v280
    %v905 = vunpack.c.l.b16 %v281
    %v906 = vunpack.c.h.b16 %v281
    %v907 = vunpack.c.l.b16 %v282
    %v908 = vunpack.c.h.b16 %v282
    %v909 = vunpack.c.l.b16 %v283
    %v910 = vunpack.c.h.b16 %v283
    %v911 = vunpack.c.l.b16 %v284
    %v912 = vunpack.c.h.b16 %v284
    %v913 = vpack.c.b16 %v533, %v529
    %v914 = vpack.c.b16 %v534, %v530
    %v915 = vpack.c.b16 %v535, %v531
    %v916 = vpack.c.b16 %v536, %v532
    %v917 = vpack.c.b16 %v541, %v537
    %v918 = vpack.c.b16 %v542, %v538
    %v919 = vpack.c.b16 %v543, %v539
    %v920 = vpack.c.b16 %v544, %v540
    %v921 = vpack.c.b16 %v549, %v545
    %v922 = vpack.c.b16 %v550, %v546
    %v923 = vpack.c.b16 %v551, %v547
    %v924 = vpack.c.b16 %v552, %v548
    %v925 = vpack.c.b16 %v557, %v553
    %v926 = vpack.c.b16 %v558, %v554
    %v927 = vpack.c.b16 %v559, %v555
    %v928 = vpack.c.b16 %v560, %v556
    %v929 = vpack.c.b16 %v565, %v561
    %v930 = vpack.c.b16 %v566, %v562
    %v931 = vpack.c.b16 %v567, %v563
    %v932 = vpack.c.b16 %v568, %v564
    %v933 = vpack.c.b16 %v573, %v569
    %v934 = vpack.c.b16 %v574, %v570
    %v935 = vpack.c.b16 %v575, %v571
    %v936 = vpack.c.b16 %v576, %v572
    %v937 = vpack.c.b16 %v581, %v577
    %v938 = vpack.c.b16 %v582, %v578
    %v939 = vpack.c.b16 %v583, %v579
    %v940 = vpack.c.b16 %v584, %v580
    %v941 = vpack.c.b16 %v589, %v585
    %v942 = vpack.c.b16 %v590, %v586
    %v943 = vpack.c.b16 %v591, %v587
    %v944 = vpack.c.b16 %v592, %v588
    %v945 = vpack.c.b16 %v597, %v593
    %v946 = vpack.c.b16 %v598, %v594
    %v947 = vpack.c.b16 %v599, %v595
    %v948 = vpack.c.b16 %v600, %v596
    %v949 = vpack.c.b16 %v605, %v601
    %v950 = vpack.c.b16 %v606, %v602
    %v951 = vpack.c.b16 %v607, %v603
    %v952 = vpack.c.b16 %v608, %v604
    %v953 = vpack.c.b16 %v613, %v609
    %v954 = vpack.c.b16 %v614, %v610
    %v955 = vpack.c.b16 %v615, %v611
    %v956 = vpack.c.b16 %v616, %v612
    %v957 = vpack.c.b16 %v621, %v617
    %v958 = vpack.c.b16 %v622, %v618
    %v959 = vpack.c.b16 %v623, %v619
    %v960 = vpack.c.b16 %v624, %v620
    %v961 = vpack.c.b16 %v629, %v625
    %v962 = vpack.c.b16 %v630, %v626
    %v963 = vpack.c.b16 %v631, %v627
    %v964 = vpack.c.b16 %v632, %v628
    %v965 = vpack.c.b16 %v637, %v633
    %v966 = vpack.c.b16 %v638, %v634
    %v967 = vpack.c.b16 %v639, %v635
    %v968 = vpack.c.b16 %v640, %v636
    %v969 = vpack.c.b16 %v645, %v641
    %v970 = vpack.c.b16 %v646, %v642
    %v971 = vpack.c.b16 %v647, %v643
    %v972 = vpack.c.b16 %v648, %v644
    %v973 = vpack.c.b16 %v653, %v649
    %v974 = vpack.c.b16 %v654, %v650
    %v975 = vpack.c.b16 %v655, %v651
    %v976 = vpack.c.b16 %v656, %v652
    %v977 = vpack.c.b16 %v661, %v657
    %v978 = vpack.c.b16 %v662, %v658
    %v979 = vpack.c.b16 %v663, %v659
    %v980 = vpack.c.b16 %v664, %v660
    %v981 = vpack.c.b16 %v669, %v665
    %v982 = vpack.c.b16 %v670, %v666
    %v983 = vpack.c.b16 %v671, %v667
    %v984 = vpack.c.b16 %v672, %v668
    %v985 = vpack.c.b16 %v677, %v673
    %v986 = vpack.c.b16 %v678, %v674
    %v987 = vpack.c.b16 %v679, %v675
    %v988 = vpack.c.b16 %v680, %v676
    %v989 = vpack.c.b16 %v685, %v681
    %v990 = vpack.c.b16 %v686, %v682
    %v991 = vpack.c.b16 %v687, %v683
    %v992 = vpack.c.b16 %v688, %v684
    %v993 = vpack.c.b16 %v693, %v689
    %v994 = vpack.c.b16 %v694, %v690
    %v995 = vpack.c.b16 %v695, %v691
    %v996 = vpack.c.b16 %v696, %v692
    %v997 = vpack.c.b16 %v701, %v697
    %v998 = vpack.c.b16 %v702, %v698
    %v999 = vpack.c.b16 %v703, %v699
    %v1000 = vpack.c.b16 %v704, %v700
    %v1001 = vpack.c.b16 %v709, %v705
    %v1002 = vpack.c.b16 %v710, %v706
    %v1003 = vpack.c.b16 %v711, %v707
    %v1004 = vpack.c.b16 %v712, %v708
    %v1005 = vpack.c.b16 %v717, %v713
    %v1006 = vpack.c.b16 %v718, %v714
    %v1007 = vpack.c.b16 %v719, %v715
    %v1008 = vpack.c.b16 %v720, %v716
    %v1009 = vpack.c.b16 %v725, %v721
    %v1010 = vpack.c.b16 %v726, %v722
    %v1011 = vpack.c.b16 %v727, %v723
    %v1012 = vpack.c.b16 %v728, %v724
    %v1013 = vpack.c.b16 %v733, %v729
    %v1014 = vpack.c.b16 %v734, %v730
    %v1015 = vpack.c.b16 %v735, %v731
    %v1016 = vpack.c.b16 %v736, %v732
    %v1017 = vpack.c.b16 %v741, %v737
    %v1018 = vpack.c.b16 %v742, %v738
    %v1019 = vpack.c.b16 %v743, %v739
    %v1020 = vpack.c.b16 %v744, %v740
    %v1021 = vpack.c.b16 %v749, %v745
    %v1022 = vpack.c.b16 %v750, %v746
    %v1023 = vpack.c.b16 %v751, %v747
    %v1024 = vpack.c.b16 %v752, %v748
    %v1025 = vpack.c.b16 %v757, %v753
    %v1026 = vpack.c.b16 %v758, %v754
    %v1027 = vpack.c.b16 %v759, %v755
    %v1028 = vpack.c.b16 %v760, %v756
    %v1029 = vpack.c.b16 %v765, %v761
    %v1030 = vpack.c.b16 %v766, %v762
    %v1031 = vpack.c.b16 %v767, %v763
    %v1032 = vpack.c.b16 %v768, %v764
    %v1033 = vpack.c.b16 %v773, %v769
    %v1034 = vpack.c.b16 %v774, %v770
    %v1035 = vpack.c.b16 %v775, %v771
    %v1036 = vpack.c.b16 %v776, %v772
    %v1037 = vpack.c.b16 %v781, %v777
    %v1038 = vpack.c.b16 %v782, %v778
    %v1039 = vpack.c.b16 %v783, %v779
    %v1040 = vpack.c.b16 %v784, %v780
    %v1041 = vpack.c.b16 %v789, %v785
    %v1042 = vpack.c.b16 %v790, %v786
    %v1043 = vpack.c.b16 %v791, %v787
    %v1044 = vpack.c.b16 %v792, %v788
    %v1045 = vpack.c.b16 %v797, %v793
    %v1046 = vpack.c.b16 %v798, %v794
    %v1047 = vpack.c.b16 %v799, %v795
    %v1048 = vpack.c.b16 %v800, %v796
    %v1049 = vpack.c.b16 %v805, %v801
    %v1050 = vpack.c.b16 %v806, %v802
    %v1051 = vpack.c.b16 %v807, %v803
    %v1052 = vpack.c.b16 %v808, %v804
    %v1053 = vpack.c.b16 %v813, %v809
    %v1054 = vpack.c.b16 %v814, %v810
    %v1055 = vpack.c.b16 %v815, %v811
    %v1056 = vpack.c.b16 %v816, %v812
    %v1057 = vpack.c.b16 %v821, %v817
    %v1058 = vpack.c.b16 %v822, %v818
    %v1059 = vpack.c.b16 %v823, %v819
    %v1060 = vpack.c.b16 %v824, %v820
    %v1061 = vpack.c.b16 %v829, %v825
    %v1062 = vpack.c.b16 %v830, %v826
    %v1063 = vpack.c.b16 %v831, %v827
    %v1064 = vpack.c.b16 %v832, %v828
    %v1065 = vpack.c.b16 %v837, %v833
    %v1066 = vpack.c.b16 %v838, %v834
    %v1067 = vpack.c.b16 %v839, %v835
    %v1068 = vpack.c.b16 %v840, %v836
    %v1069 = vpack.c.b16 %v845, %v841
    %v1070 = vpack.c.b16 %v846, %v842
    %v1071 = vpack.c.b16 %v847, %v843
    %v1072 = vpack.c.b16 %v848, %v844
    %v1073 = vpack.c.b16 %v853, %v849
    %v1074 = vpack.c.b16 %v854, %v850
    %v1075 = vpack.c.b16 %v855, %v851
    %v1076 = vpack.c.b16 %v856, %v852
    %v1077 = vpack.c.b16 %v861, %v857
    %v1078 = vpack.c.b16 %v862, %v858
    %v1079 = vpack.c.b16 %v863, %v859
    %v1080 = vpack.c.b16 %v864, %v860
    %v1081 = vpack.c.b16 %v869, %v865
    %v1082 = vpack.c.b16 %v870, %v866
    %v1083 = vpack.c.b16 %v871, %v867
    %v1084 = vpack.c.b16 %v872, %v868
    %v1085 = vpack.c.b16 %v877, %v873
    %v1086 = vpack.c.b16 %v878, %v874
    %v1087 = vpack.c.b16 %v879, %v875
    %v1088 = vpack.c.b16 %v880, %v876
    %v1089 = vpack.c.b16 %v885, %v881
    %v1090 = vpack.c.b16 %v886, %v882
    %v1091 = vpack.c.b16 %v887, %v883
    %v1092 = vpack.c.b16 %v888, %v884
    %v1093 = vpack.c.b16 %v893, %v889
    %v1094 = vpack.c.b16 %v894, %v890
    %v1095 = vpack.c.b16 %v895, %v891
    %v1096 = vpack.c.b16 %v896, %v892
    %v1097 = vpack.c.b16 %v901, %v897
    %v1098 = vpack.c.b16 %v902, %v898
    %v1099 = vpack.c.b16 %v903, %v899
    %v1100 = vpack.c.b16 %v904, %v900
    %v1101 = vpack.c.b16 %v909, %v905
    %v1102 = vpack.c.b16 %v910, %v906
    %v1103 = vpack.c.b16 %v911, %v907
    %v1104 = vpack.c.b16 %v912, %v908
    %1297 = vmatprep.subr.bf16.mxu0 %v942
    %1298 = vmatpush1.bf16.msra.mxu0 %v941
    %1299 = vmatprep.subr.bf16.mxu0 %v938
    %1300 = vmatpush1.bf16.msra.mxu0 %v937
    %1301 = vmatprep.subr.bf16.mxu0 %v934
    %1302 = vmatpush1.bf16.msra.mxu0 %v933
    %1303 = vmatprep.subr.bf16.mxu0 %v930
    %1304 = vmatpush1.bf16.msra.mxu0 %v929
    %1305 = vmatprep.subr.bf16.mxu0 %v926
    %1306 = vmatpush1.bf16.msra.mxu0 %v925
    %1307 = vmatprep.subr.bf16.mxu0 %v922
    %1308 = vmatpush1.bf16.msra.mxu0 %v921
    %1309 = vmatprep.subr.bf16.mxu0 %v918
    %1310 = vmatpush1.bf16.msra.mxu0 %v917
    %1311 = vmatprep.subr.bf16.mxu0 %v914
    %1312 = vmatpush1.bf16.msra.mxu0 %v913
    %1313 = vmatprep.subr.bf16.mxu0 %v974
    %1314 = vmatpush2.bf16.msra.mxu0 %v973
    %1315 = vmatprep.subr.bf16.mxu0 %v970
    %1316 = vmatpush2.bf16.msra.mxu0 %v969
    %1317 = vmatprep.subr.bf16.mxu0 %v966
    %1318 = vmatpush2.bf16.msra.mxu0 %v965
    %1319 = vmatprep.subr.bf16.mxu0 %v962
    %1320 = vmatpush2.bf16.msra.mxu0 %v961
    %1321 = vmatprep.subr.bf16.mxu0 %v958
    %1322 = vmatpush2.bf16.msra.mxu0 %v957
    %1323 = vmatprep.subr.bf16.mxu0 %v954
    %1324 = vmatpush2.bf16.msra.mxu0 %v953
    %1325 = vmatprep.subr.bf16.mxu0 %v950
    %1326 = vmatpush2.bf16.msra.mxu0 %v949
    %1327 = vmatprep.subr.bf16.mxu0 %v946
    %1328 = vmatpush2.bf16.msra.mxu0 %v945
    %1329 = vmatprep.mubr.bf16.mxu0 %v326
    %1330 = vmatmul.mubr.bf16.gmra.mxu0 %v325
    %v1331 = vpop.f32.mrf.mxu0
    %v1332 = vadd.f32 %v290, %v1331
    %v1333 = vpop.f32.mrf.mxu0
    %v1334 = vadd.f32 %v294, %v1333
    %v1335 = vpop.f32.mrf.mxu0
    %v1336 = vadd.f32 %v290, %v1335
    %v1337 = vpop.f32.mrf.mxu0
    %v1338 = vadd.f32 %v294, %v1337
    %1339 = vdwg.mxu0
    %1340 = vmatprep.subr.bf16.mxu0 %v1006
    %1341 = vmatpush1.bf16.msra.mxu0 %v1005
    %1342 = vmatprep.subr.bf16.mxu0 %v1002
    %1343 = vmatpush1.bf16.msra.mxu0 %v1001
    %1344 = vmatprep.subr.bf16.mxu0 %v998
    %1345 = vmatpush1.bf16.msra.mxu0 %v997
    %1346 = vmatprep.subr.bf16.mxu0 %v994
    %1347 = vmatpush1.bf16.msra.mxu0 %v993
    %1348 = vmatprep.subr.bf16.mxu0 %v990
    %1349 = vmatpush1.bf16.msra.mxu0 %v989
    %1350 = vmatprep.subr.bf16.mxu0 %v986
    %1351 = vmatpush1.bf16.msra.mxu0 %v985
    %1352 = vmatprep.subr.bf16.mxu0 %v982
    %1353 = vmatpush1.bf16.msra.mxu0 %v981
    %1354 = vmatprep.subr.bf16.mxu0 %v978
    %1355 = vmatpush1.bf16.msra.mxu0 %v977
    %1356 = vmatprep.subr.bf16.mxu0 %v1038
    %1357 = vmatpush2.bf16.msra.mxu0 %v1037
    %1358 = vmatprep.subr.bf16.mxu0 %v1034
    %1359 = vmatpush2.bf16.msra.mxu0 %v1033
    %1360 = vmatprep.subr.bf16.mxu0 %v1030
    %1361 = vmatpush2.bf16.msra.mxu0 %v1029
    %1362 = vmatprep.subr.bf16.mxu0 %v1026
    %1363 = vmatpush2.bf16.msra.mxu0 %v1025
    %1364 = vmatprep.subr.bf16.mxu0 %v1022
    %1365 = vmatpush2.bf16.msra.mxu0 %v1021
    %1366 = vmatprep.subr.bf16.mxu0 %v1018
    %1367 = vmatpush2.bf16.msra.mxu0 %v1017
    %1368 = vmatprep.subr.bf16.mxu0 %v1014
    %1369 = vmatpush2.bf16.msra.mxu0 %v1013
    %1370 = vmatprep.subr.bf16.mxu0 %v1010
    %1371 = vmatpush2.bf16.msra.mxu0 %v1009
    %1372 = vmatprep.mubr.bf16.mxu0 %v328
    %1373 = vmatmul.mubr.bf16.gmra.mxu0 %v327
    %v1374 = vpop.f32.mrf.mxu0
    %v1375 = vadd.f32 %v1332, %v1374
    %v1376 = vpop.f32.mrf.mxu0
    %v1377 = vadd.f32 %v1334, %v1376
    %v1378 = vpop.f32.mrf.mxu0
    %v1379 = vadd.f32 %v1336, %v1378
    %v1380 = vpop.f32.mrf.mxu0
    %v1381 = vadd.f32 %v1338, %v1380
    %1382 = vdwg.mxu0
    %1383 = vmatprep.subr.bf16.mxu0 %v1070
    %1384 = vmatpush1.bf16.msra.mxu0 %v1069
    %1385 = vmatprep.subr.bf16.mxu0 %v1066
    %1386 = vmatpush1.bf16.msra.mxu0 %v1065
    %1387 = vmatprep.subr.bf16.mxu0 %v1062
    %1388 = vmatpush1.bf16.msra.mxu0 %v1061
    %1389 = vmatprep.subr.bf16.mxu0 %v1058
    %1390 = vmatpush1.bf16.msra.mxu0 %v1057
    %1391 = vmatprep.subr.bf16.mxu0 %v1054
    %1392 = vmatpush1.bf16.msra.mxu0 %v1053
    %1393 = vmatprep.subr.bf16.mxu0 %v1050
    %1394 = vmatpush1.bf16.msra.mxu0 %v1049
    %1395 = vmatprep.subr.bf16.mxu0 %v1046
    %1396 = vmatpush1.bf16.msra.mxu0 %v1045
    %1397 = vmatprep.subr.bf16.mxu0 %v1042
    %1398 = vmatpush1.bf16.msra.mxu0 %v1041
    %1399 = vmatprep.subr.bf16.mxu0 %v1102
    %1400 = vmatpush2.bf16.msra.mxu0 %v1101
    %1401 = vmatprep.subr.bf16.mxu0 %v1098
    %1402 = vmatpush2.bf16.msra.mxu0 %v1097
    %1403 = vmatprep.subr.bf16.mxu0 %v1094
    %1404 = vmatpush2.bf16.msra.mxu0 %v1093
    %1405 = vmatprep.subr.bf16.mxu0 %v1090
    %1406 = vmatpush2.bf16.msra.mxu0 %v1089
    %1407 = vmatprep.subr.bf16.mxu0 %v1086
    %1408 = vmatpush2.bf16.msra.mxu0 %v1085
    %1409 = vmatprep.subr.bf16.mxu0 %v1082
    %1410 = vmatpush2.bf16.msra.mxu0 %v1081
    %1411 = vmatprep.subr.bf16.mxu0 %v1078
    %1412 = vmatpush2.bf16.msra.mxu0 %v1077
    %1413 = vmatprep.subr.bf16.mxu0 %v1074
    %1414 = vmatpush2.bf16.msra.mxu0 %v1073
    %1415 = vmatprep.mubr.bf16.mxu0 %v330
    %1416 = vmatmul.mubr.bf16.gmra.mxu0 %v329
    %v1417 = vpop.f32.mrf.mxu0
    %v1418 = vadd.f32 %v1375, %v1417
    %v1419 = vpop.f32.mrf.mxu0
    %v1420 = vadd.f32 %v1377, %v1419
    %v1421 = vpop.f32.mrf.mxu0
    %v1422 = vadd.f32 %v1379, %v1421
    %v1423 = vpop.f32.mrf.mxu0
    %v1424 = vadd.f32 %v1381, %v1423
    %1425 = vdwg.mxu0
    %1426 = vmatprep.subr.bf16.mxu0 %v944
    %1427 = vmatpush1.bf16.msra.mxu0 %v943
    %1428 = vmatprep.subr.bf16.mxu0 %v940
    %1429 = vmatpush1.bf16.msra.mxu0 %v939
    %1430 = vmatprep.subr.bf16.mxu0 %v936
    %1431 = vmatpush1.bf16.msra.mxu0 %v935
    %1432 = vmatprep.subr.bf16.mxu0 %v932
    %1433 = vmatpush1.bf16.msra.mxu0 %v931
    %1434 = vmatprep.subr.bf16.mxu0 %v928
    %1435 = vmatpush1.bf16.msra.mxu0 %v927
    %1436 = vmatprep.subr.bf16.mxu0 %v924
    %1437 = vmatpush1.bf16.msra.mxu0 %v923
    %1438 = vmatprep.subr.bf16.mxu0 %v920
    %1439 = vmatpush1.bf16.msra.mxu0 %v919
    %1440 = vmatprep.subr.bf16.mxu0 %v916
    %1441 = vmatpush1.bf16.msra.mxu0 %v915
    %1442 = vmatprep.subr.bf16.mxu0 %v976
    %1443 = vmatpush2.bf16.msra.mxu0 %v975
    %1444 = vmatprep.subr.bf16.mxu0 %v972
    %1445 = vmatpush2.bf16.msra.mxu0 %v971
    %1446 = vmatprep.subr.bf16.mxu0 %v968
    %1447 = vmatpush2.bf16.msra.mxu0 %v967
    %1448 = vmatprep.subr.bf16.mxu0 %v964
    %1449 = vmatpush2.bf16.msra.mxu0 %v963
    %1450 = vmatprep.subr.bf16.mxu0 %v960
    %1451 = vmatpush2.bf16.msra.mxu0 %v959
    %1452 = vmatprep.subr.bf16.mxu0 %v956
    %1453 = vmatpush2.bf16.msra.mxu0 %v955
    %1454 = vmatprep.subr.bf16.mxu0 %v952
    %1455 = vmatpush2.bf16.msra.mxu0 %v951
    %1456 = vmatprep.subr.bf16.mxu0 %v948
    %1457 = vmatpush2.bf16.msra.mxu0 %v947
    %1458 = vmatprep.mubr.bf16.mxu0 %v326
    %1459 = vmatmul.mubr.bf16.gmra.mxu0 %v325
    %v1460 = vpop.f32.mrf.mxu0
    %v1461 = vadd.f32 %v298, %v1460
    %v1462 = vpop.f32.mrf.mxu0
    %v1463 = vadd.f32 %v302, %v1462
    %v1464 = vpop.f32.mrf.mxu0
    %v1465 = vadd.f32 %v298, %v1464
    %v1466 = vpop.f32.mrf.mxu0
    %v1467 = vadd.f32 %v302, %v1466
    %1468 = vdwg.mxu0
    %1469 = vmatprep.subr.bf16.mxu0 %v1008
    %1470 = vmatpush1.bf16.msra.mxu0 %v1007
    %1471 = vmatprep.subr.bf16.mxu0 %v1004
    %1472 = vmatpush1.bf16.msra.mxu0 %v1003
    %1473 = vmatprep.subr.bf16.mxu0 %v1000
    %1474 = vmatpush1.bf16.msra.mxu0 %v999
    %1475 = vmatprep.subr.bf16.mxu0 %v996
    %1476 = vmatpush1.bf16.msra.mxu0 %v995
    %1477 = vmatprep.subr.bf16.mxu0 %v992
    %1478 = vmatpush1.bf16.msra.mxu0 %v991
    %1479 = vmatprep.subr.bf16.mxu0 %v988
    %1480 = vmatpush1.bf16.msra.mxu0 %v987
    %1481 = vmatprep.subr.bf16.mxu0 %v984
    %1482 = vmatpush1.bf16.msra.mxu0 %v983
    %1483 = vmatprep.subr.bf16.mxu0 %v980
    %1484 = vmatpush1.bf16.msra.mxu0 %v979
    %1485 = vmatprep.subr.bf16.mxu0 %v1040
    %1486 = vmatpush2.bf16.msra.mxu0 %v1039
    %1487 = vmatprep.subr.bf16.mxu0 %v1036
    %1488 = vmatpush2.bf16.msra.mxu0 %v1035
    %1489 = vmatprep.subr.bf16.mxu0 %v1032
    %1490 = vmatpush2.bf16.msra.mxu0 %v1031
    %1491 = vmatprep.subr.bf16.mxu0 %v1028
    %1492 = vmatpush2.bf16.msra.mxu0 %v1027
    %1493 = vmatprep.subr.bf16.mxu0 %v1024
    %1494 = vmatpush2.bf16.msra.mxu0 %v1023
    %1495 = vmatprep.subr.bf16.mxu0 %v1020
    %1496 = vmatpush2.bf16.msra.mxu0 %v1019
    %1497 = vmatprep.subr.bf16.mxu0 %v1016
    %1498 = vmatpush2.bf16.msra.mxu0 %v1015
    %1499 = vmatprep.subr.bf16.mxu0 %v1012
    %1500 = vmatpush2.bf16.msra.mxu0 %v1011
    %1501 = vmatprep.mubr.bf16.mxu0 %v328
    %1502 = vmatmul.mubr.bf16.gmra.mxu0 %v327
    %v1503 = vpop.f32.mrf.mxu0
    %v1504 = vadd.f32 %v1461, %v1503
    %v1505 = vpop.f32.mrf.mxu0
    %v1506 = vadd.f32 %v1463, %v1505
    %v1507 = vpop.f32.mrf.mxu0
    %v1508 = vadd.f32 %v1465, %v1507
    %v1509 = vpop.f32.mrf.mxu0
    %v1510 = vadd.f32 %v1467, %v1509
    %1511 = vdwg.mxu0
    %1512 = vmatprep.subr.bf16.mxu0 %v1072
    %1513 = vmatpush1.bf16.msra.mxu0 %v1071
    %1514 = vmatprep.subr.bf16.mxu0 %v1068
    %1515 = vmatpush1.bf16.msra.mxu0 %v1067
    %1516 = vmatprep.subr.bf16.mxu0 %v1064
    %1517 = vmatpush1.bf16.msra.mxu0 %v1063
    %1518 = vmatprep.subr.bf16.mxu0 %v1060
    %1519 = vmatpush1.bf16.msra.mxu0 %v1059
    %1520 = vmatprep.subr.bf16.mxu0 %v1056
    %1521 = vmatpush1.bf16.msra.mxu0 %v1055
    %1522 = vmatprep.subr.bf16.mxu0 %v1052
    %1523 = vmatpush1.bf16.msra.mxu0 %v1051
    %1524 = vmatprep.subr.bf16.mxu0 %v1048
    %1525 = vmatpush1.bf16.msra.mxu0 %v1047
    %1526 = vmatprep.subr.bf16.mxu0 %v1044
    %1527 = vmatpush1.bf16.msra.mxu0 %v1043
    %1528 = vmatprep.subr.bf16.mxu0 %v1104
    %1529 = vmatpush2.bf16.msra.mxu0 %v1103
    %1530 = vmatprep.subr.bf16.mxu0 %v1100
    %1531 = vmatpush2.bf16.msra.mxu0 %v1099
    %1532 = vmatprep.subr.bf16.mxu0 %v1096
    %1533 = vmatpush2.bf16.msra.mxu0 %v1095
    %1534 = vmatprep.subr.bf16.mxu0 %v1092
    %1535 = vmatpush2.bf16.msra.mxu0 %v1091
    %1536 = vmatprep.subr.bf16.mxu0 %v1088
    %1537 = vmatpush2.bf16.msra.mxu0 %v1087
    %1538 = vmatprep.subr.bf16.mxu0 %v1084
    %1539 = vmatpush2.bf16.msra.mxu0 %v1083
    %1540 = vmatprep.subr.bf16.mxu0 %v1080
    %1541 = vmatpush2.bf16.msra.mxu0 %v1079
    %1542 = vmatprep.subr.bf16.mxu0 %v1076
    %1543 = vmatpush2.bf16.msra.mxu0 %v1075
    %1544 = vmatprep.mubr.bf16.mxu0 %v330
    %1545 = vmatmul.mubr.bf16.gmra.mxu0 %v329
    %v1546 = vpop.f32.mrf.mxu0
    %v1547 = vadd.f32 %v1504, %v1546
    %v1548 = vpop.f32.mrf.mxu0
    %v1549 = vadd.f32 %v1506, %v1548
    %v1550 = vpop.f32.mrf.mxu0
    %v1551 = vadd.f32 %v1508, %v1550
    %v1552 = vpop.f32.mrf.mxu0
    %v1553 = vadd.f32 %v1510, %v1552
    %1554 = vdwg.mxu0
    %v1555 = vmax.f32 %v1418, 0.0
    %v1556 = vmax.f32 %v1420, 0.0
    %v1557 = vmax.f32 %v1547, 0.0
    %v1558 = vmax.f32 %v1549, 0.0
    %v1559 = vmax.f32 %v1422, 0.0
    %v1560 = vmax.f32 %v1424, 0.0
    %v1561 = vmax.f32 %v1551, 0.0
    %v1562 = vmax.f32 %v1553, 0.0
    %v1563 = vld [vmem:[#allocation4] sm:$0xff]
    %v1564 = vld [vmem:[#allocation4 + $0x8] sm:$0xff]
    %v1565 = vld [vmem:[#allocation4 + $0x10] sm:$0xff]
    %v1566 = vld [vmem:[#allocation4 + $0x18] sm:$0xff]
    %v1567 = vld [vmem:[#allocation4 + $0x20] sm:$0xff]
    %v1568 = vld [vmem:[#allocation4 + $0x28] sm:$0xff]
    %v1569 = vld [vmem:[#allocation4 + $0x30] sm:$0xff]
    %v1570 = vld [vmem:[#allocation4 + $0x38] sm:$0xff]
    %v1571 = vld [vmem:[#allocation4 + $0x40] sm:$0xff]
    %v1572 = vld [vmem:[#allocation4 + $0x48] sm:$0xff]
    %v1573 = vld [vmem:[#allocation4 + $0x50] sm:$0xff]
    %v1574 = vld [vmem:[#allocation4 + $0x58] sm:$0xff]
    %v1575 = vld [vmem:[#allocation4 + $0x60] sm:$0xff]
    %v1576 = vld [vmem:[#allocation4 + $0x68] sm:$0xff]
    %v1577 = vld [vmem:[#allocation4 + $0x70] sm:$0xff]
    %v1578 = vld [vmem:[#allocation4 + $0x78] sm:$0xff]
    %v1579 = vld [vmem:[#allocation4 + $0x80] sm:$0xff]
    %v1580 = vld [vmem:[#allocation4 + $0x88] sm:$0xff]
    %v1581 = vld [vmem:[#allocation4 + $0x90] sm:$0xff]
    %v1582 = vld [vmem:[#allocation4 + $0x98] sm:$0xff]
    %v1583 = vld [vmem:[#allocation4 + $0xa0] sm:$0xff]
    %v1584 = vld [vmem:[#allocation4 + $0xa8] sm:$0xff]
    %v1585 = vld [vmem:[#allocation4 + $0xb0] sm:$0xff]
    %v1586 = vld [vmem:[#allocation4 + $0xb8] sm:$0xff]
    %v1587 = vld [vmem:[#allocation4 + $0xc0] sm:$0xff]
    %v1588 = vld [vmem:[#allocation4 + $0xc8] sm:$0xff]
    %v1589 = vld [vmem:[#allocation4 + $0xd0] sm:$0xff]
    %v1590 = vld [vmem:[#allocation4 + $0xd8] sm:$0xff]
    %v1591 = vld [vmem:[#allocation4 + $0xe0] sm:$0xff]
    %v1592 = vld [vmem:[#allocation4 + $0xe8] sm:$0xff]
    %v1593 = vld [vmem:[#allocation4 + $0xf0] sm:$0xff]
    %v1594 = vld [vmem:[#allocation4 + $0xf8] sm:$0xff]
    %v1595 = vld [vmem:[#allocation4 + $0x100] sm:$0xff]
    %v1596 = vld [vmem:[#allocation4 + $0x108] sm:$0xff]
    %v1597 = vld [vmem:[#allocation4 + $0x110] sm:$0xff]
    %v1598 = vld [vmem:[#allocation4 + $0x118] sm:$0xff]
    %v1599 = vld [vmem:[#allocation4 + $0x120] sm:$0xff]
    %v1600 = vld [vmem:[#allocation4 + $0x128] sm:$0xff]
    %v1601 = vld [vmem:[#allocation4 + $0x130] sm:$0xff]
    %v1602 = vld [vmem:[#allocation4 + $0x138] sm:$0xff]
    %v1603 = vld [vmem:[#allocation4 + $0x140] sm:$0xff]
    %v1604 = vld [vmem:[#allocation4 + $0x148] sm:$0xff]
    %v1605 = vld [vmem:[#allocation4 + $0x150] sm:$0xff]
    %v1606 = vld [vmem:[#allocation4 + $0x158] sm:$0xff]
    %v1607 = vld [vmem:[#allocation4 + $0x160] sm:$0xff]
    %v1608 = vld [vmem:[#allocation4 + $0x168] sm:$0xff]
    %v1609 = vld [vmem:[#allocation4 + $0x170] sm:$0xff]
    %v1610 = vld [vmem:[#allocation4 + $0x178] sm:$0xff]
    %v1611 = vld [vmem:[#allocation4 + $0x180] sm:$0xff]
    %v1612 = vld [vmem:[#allocation4 + $0x188] sm:$0xff]
    %v1613 = vld [vmem:[#allocation4 + $0x190] sm:$0xff]
    %v1614 = vld [vmem:[#allocation4 + $0x198] sm:$0xff]
    %v1615 = vld [vmem:[#allocation4 + $0x1a0] sm:$0xff]
    %v1616 = vld [vmem:[#allocation4 + $0x1a8] sm:$0xff]
    %v1617 = vld [vmem:[#allocation4 + $0x1b0] sm:$0xff]
    %v1618 = vld [vmem:[#allocation4 + $0x1b8] sm:$0xff]
    %v1619 = vld [vmem:[#allocation4 + $0x1c0] sm:$0xff]
    %v1620 = vld [vmem:[#allocation4 + $0x1c8] sm:$0xff]
    %v1621 = vld [vmem:[#allocation4 + $0x1d0] sm:$0xff]
    %v1622 = vld [vmem:[#allocation4 + $0x1d8] sm:$0xff]
    %v1623 = vld [vmem:[#allocation4 + $0x1e0] sm:$0xff]
    %v1624 = vld [vmem:[#allocation4 + $0x1e8] sm:$0xff]
    %v1625 = vld [vmem:[#allocation4 + $0x1f0] sm:$0xff]
    %v1626 = vld [vmem:[#allocation4 + $0x1f8] sm:$0xff]
    %v1627 = vld [vmem:[#allocation4 + $0x200] sm:$0xff]
    %v1628 = vld [vmem:[#allocation4 + $0x208] sm:$0xff]
    %v1629 = vld [vmem:[#allocation4 + $0x210] sm:$0xff]
    %v1630 = vld [vmem:[#allocation4 + $0x218] sm:$0xff]
    %v1631 = vld [vmem:[#allocation4 + $0x220] sm:$0xff]
    %v1632 = vld [vmem:[#allocation4 + $0x228] sm:$0xff]
    %v1633 = vld [vmem:[#allocation4 + $0x230] sm:$0xff]
    %v1634 = vld [vmem:[#allocation4 + $0x238] sm:$0xff]
    %v1635 = vld [vmem:[#allocation4 + $0x240] sm:$0xff]
    %v1636 = vld [vmem:[#allocation4 + $0x248] sm:$0xff]
    %v1637 = vld [vmem:[#allocation4 + $0x250] sm:$0xff]
    %v1638 = vld [vmem:[#allocation4 + $0x258] sm:$0xff]
    %v1639 = vld [vmem:[#allocation4 + $0x260] sm:$0xff]
    %v1640 = vld [vmem:[#allocation4 + $0x268] sm:$0xff]
    %v1641 = vld [vmem:[#allocation4 + $0x270] sm:$0xff]
    %v1642 = vld [vmem:[#allocation4 + $0x278] sm:$0xff]
    %v1643 = vld [vmem:[#allocation4 + $0x280] sm:$0xff]
    %v1644 = vld [vmem:[#allocation4 + $0x288] sm:$0xff]
    %v1645 = vld [vmem:[#allocation4 + $0x290] sm:$0xff]
    %v1646 = vld [vmem:[#allocation4 + $0x298] sm:$0xff]
    %v1647 = vld [vmem:[#allocation4 + $0x2a0] sm:$0xff]
    %v1648 = vld [vmem:[#allocation4 + $0x2a8] sm:$0xff]
    %v1649 = vld [vmem:[#allocation4 + $0x2b0] sm:$0xff]
    %v1650 = vld [vmem:[#allocation4 + $0x2b8] sm:$0xff]
    %v1651 = vld [vmem:[#allocation4 + $0x2c0] sm:$0xff]
    %v1652 = vld [vmem:[#allocation4 + $0x2c8] sm:$0xff]
    %v1653 = vld [vmem:[#allocation4 + $0x2d0] sm:$0xff]
    %v1654 = vld [vmem:[#allocation4 + $0x2d8] sm:$0xff]
    %v1655 = vld [vmem:[#allocation4 + $0x2e0] sm:$0xff]
    %v1656 = vld [vmem:[#allocation4 + $0x2e8] sm:$0xff]
    %v1657 = vld [vmem:[#allocation4 + $0x2f0] sm:$0xff]
    %v1658 = vld [vmem:[#allocation4 + $0x2f8] sm:$0xff]
    %v1659 = vld [vmem:[#allocation4 + $0x300] sm:$0xff]
    %v1660 = vld [vmem:[#allocation4 + $0x308] sm:$0xff]
    %v1661 = vld [vmem:[#allocation4 + $0x310] sm:$0xff]
    %v1662 = vld [vmem:[#allocation4 + $0x318] sm:$0xff]
    %v1663 = vld [vmem:[#allocation4 + $0x320] sm:$0xff]
    %v1664 = vld [vmem:[#allocation4 + $0x328] sm:$0xff]
    %v1665 = vld [vmem:[#allocation4 + $0x330] sm:$0xff]
    %v1666 = vld [vmem:[#allocation4 + $0x338] sm:$0xff]
    %v1667 = vld [vmem:[#allocation4 + $0x340] sm:$0xff]
    %v1668 = vld [vmem:[#allocation4 + $0x348] sm:$0xff]
    %v1669 = vld [vmem:[#allocation4 + $0x350] sm:$0xff]
    %v1670 = vld [vmem:[#allocation4 + $0x358] sm:$0xff]
    %v1671 = vld [vmem:[#allocation4 + $0x360] sm:$0xff]
    %v1672 = vld [vmem:[#allocation4 + $0x368] sm:$0xff]
    %v1673 = vld [vmem:[#allocation4 + $0x370] sm:$0xff]
    %v1674 = vld [vmem:[#allocation4 + $0x378] sm:$0xff]
    %v1675 = vld [vmem:[#allocation4 + $0x380] sm:$0xff]
    %v1676 = vld [vmem:[#allocation4 + $0x388] sm:$0xff]
    %v1677 = vld [vmem:[#allocation4 + $0x390] sm:$0xff]
    %v1678 = vld [vmem:[#allocation4 + $0x398] sm:$0xff]
    %v1679 = vld [vmem:[#allocation4 + $0x3a0] sm:$0xff]
    %v1680 = vld [vmem:[#allocation4 + $0x3a8] sm:$0xff]
    %v1681 = vld [vmem:[#allocation4 + $0x3b0] sm:$0xff]
    %v1682 = vld [vmem:[#allocation4 + $0x3b8] sm:$0xff]
    %v1683 = vld [vmem:[#allocation4 + $0x3c0] sm:$0xff]
    %v1684 = vld [vmem:[#allocation4 + $0x3c8] sm:$0xff]
    %v1685 = vld [vmem:[#allocation4 + $0x3d0] sm:$0xff]
    %v1686 = vld [vmem:[#allocation4 + $0x3d8] sm:$0xff]
    %v1687 = vld [vmem:[#allocation4 + $0x3e0] sm:$0xff]
    %v1688 = vld [vmem:[#allocation4 + $0x3e8] sm:$0xff]
    %v1689 = vld [vmem:[#allocation4 + $0x3f0] sm:$0xff]
    %v1690 = vld [vmem:[#allocation4 + $0x3f8] sm:$0xff]
    %v1691 = vld [vmem:[#allocation4 + $0x400] sm:$0xff]
    %v1692 = vld [vmem:[#allocation4 + $0x408] sm:$0xff]
    %v1693 = vld [vmem:[#allocation4 + $0x410] sm:$0xff]
    %v1694 = vld [vmem:[#allocation4 + $0x418] sm:$0xff]
    %v1695 = vld [vmem:[#allocation4 + $0x420] sm:$0xff]
    %v1696 = vld [vmem:[#allocation4 + $0x428] sm:$0xff]
    %v1697 = vld [vmem:[#allocation4 + $0x430] sm:$0xff]
    %v1698 = vld [vmem:[#allocation4 + $0x438] sm:$0xff]
    %v1699 = vld [vmem:[#allocation4 + $0x440] sm:$0xff]
    %v1700 = vld [vmem:[#allocation4 + $0x448] sm:$0xff]
    %v1701 = vld [vmem:[#allocation4 + $0x450] sm:$0xff]
    %v1702 = vld [vmem:[#allocation4 + $0x458] sm:$0xff]
    %v1703 = vld [vmem:[#allocation4 + $0x460] sm:$0xff]
    %v1704 = vld [vmem:[#allocation4 + $0x468] sm:$0xff]
    %v1705 = vld [vmem:[#allocation4 + $0x470] sm:$0xff]
    %v1706 = vld [vmem:[#allocation4 + $0x478] sm:$0xff]
    %v1707 = vld [vmem:[#allocation4 + $0x480] sm:$0xff]
    %v1708 = vld [vmem:[#allocation4 + $0x488] sm:$0xff]
    %v1709 = vld [vmem:[#allocation4 + $0x490] sm:$0xff]
    %v1710 = vld [vmem:[#allocation4 + $0x498] sm:$0xff]
    %v1711 = vld [vmem:[#allocation4 + $0x4a0] sm:$0xff]
    %v1712 = vld [vmem:[#allocation4 + $0x4a8] sm:$0xff]
    %v1713 = vld [vmem:[#allocation4 + $0x4b0] sm:$0xff]
    %v1714 = vld [vmem:[#allocation4 + $0x4b8] sm:$0xff]
    %v1715 = vld [vmem:[#allocation4 + $0x4c0] sm:$0xff]
    %v1716 = vld [vmem:[#allocation4 + $0x4c8] sm:$0xff]
    %v1717 = vld [vmem:[#allocation4 + $0x4d0] sm:$0xff]
    %v1718 = vld [vmem:[#allocation4 + $0x4d8] sm:$0xff]
    %v1719 = vld [vmem:[#allocation4 + $0x4e0] sm:$0xff]
    %v1720 = vld [vmem:[#allocation4 + $0x4e8] sm:$0xff]
    %v1721 = vld [vmem:[#allocation4 + $0x4f0] sm:$0xff]
    %v1722 = vld [vmem:[#allocation4 + $0x4f8] sm:$0xff]
    %v1723 = vld [vmem:[#allocation4 + $0x500] sm:$0xff]
    %v1724 = vld [vmem:[#allocation4 + $0x508] sm:$0xff]
    %v1725 = vld [vmem:[#allocation4 + $0x510] sm:$0xff]
    %v1726 = vld [vmem:[#allocation4 + $0x518] sm:$0xff]
    %v1727 = vld [vmem:[#allocation4 + $0x520] sm:$0xff]
    %v1728 = vld [vmem:[#allocation4 + $0x528] sm:$0xff]
    %v1729 = vld [vmem:[#allocation4 + $0x530] sm:$0xff]
    %v1730 = vld [vmem:[#allocation4 + $0x538] sm:$0xff]
    %v1731 = vld [vmem:[#allocation4 + $0x540] sm:$0xff]
    %v1732 = vld [vmem:[#allocation4 + $0x548] sm:$0xff]
    %v1733 = vld [vmem:[#allocation4 + $0x550] sm:$0xff]
    %v1734 = vld [vmem:[#allocation4 + $0x558] sm:$0xff]
    %v1735 = vld [vmem:[#allocation4 + $0x560] sm:$0xff]
    %v1736 = vld [vmem:[#allocation4 + $0x568] sm:$0xff]
    %v1737 = vld [vmem:[#allocation4 + $0x570] sm:$0xff]
    %v1738 = vld [vmem:[#allocation4 + $0x578] sm:$0xff]
    %v1739 = vld [vmem:[#allocation4 + $0x580] sm:$0xff]
    %v1740 = vld [vmem:[#allocation4 + $0x588] sm:$0xff]
    %v1741 = vld [vmem:[#allocation4 + $0x590] sm:$0xff]
    %v1742 = vld [vmem:[#allocation4 + $0x598] sm:$0xff]
    %v1743 = vld [vmem:[#allocation4 + $0x5a0] sm:$0xff]
    %v1744 = vld [vmem:[#allocation4 + $0x5a8] sm:$0xff]
    %v1745 = vld [vmem:[#allocation4 + $0x5b0] sm:$0xff]
    %v1746 = vld [vmem:[#allocation4 + $0x5b8] sm:$0xff]
    %v1747 = vld [vmem:[#allocation4 + $0x5c0] sm:$0xff]
    %v1748 = vld [vmem:[#allocation4 + $0x5c8] sm:$0xff]
    %v1749 = vld [vmem:[#allocation4 + $0x5d0] sm:$0xff]
    %v1750 = vld [vmem:[#allocation4 + $0x5d8] sm:$0xff]
    %v1751 = vld [vmem:[#allocation4 + $0x5e0] sm:$0xff]
    %v1752 = vld [vmem:[#allocation4 + $0x5e8] sm:$0xff]
    %v1753 = vld [vmem:[#allocation4 + $0x5f0] sm:$0xff]
    %v1754 = vld [vmem:[#allocation4 + $0x5f8] sm:$0xff]
    %v1755 = vld [vmem:[%s4] sm:$0x7]
    %v1757 = vlaneseq
    %v1758 = vshrl.u32 %v1757, 7
    %v1759 = vsub.s32 0, %v1758
    %v1760 = vrot.slane %v1755, %v1759
    %v1761 = vlaneseq
    %v1762 = vshrl.u32 %v1761, 7
    %v1763 = vsub.s32 1, %v1762
    %v1764 = vrot.slane %v1755, %v1763
    %v1765 = vlaneseq
    %v1766 = vshrl.u32 %v1765, 7
    %v1767 = vsub.s32 2, %v1766
    %v1768 = vrot.slane %v1755, %v1767
    %1772 = vmatprep.subr.mxu0 %v1609
    %1773 = vmatpush1.msra.mxu0 %v1608
    %1774 = vmatprep.subr.mxu0 %v1606
    %1775 = vmatpush1.msra.mxu0 %v1605
    %1776 = vmatprep.subr.mxu0 %v1603
    %1777 = vmatpush1.msra.mxu0 %v1602
    %1778 = vmatprep.subr.mxu0 %v1600
    %1779 = vmatpush1.msra.mxu0 %v1599
    %1780 = vmatprep.subr.mxu0 %v1597
    %1781 = vmatpush1.msra.mxu0 %v1596
    %1782 = vmatprep.subr.mxu0 %v1594
    %1783 = vmatpush1.msra.mxu0 %v1593
    %1784 = vmatprep.subr.mxu0 %v1591
    %1785 = vmatpush1.msra.mxu0 %v1590
    %1786 = vmatprep.subr.mxu0 %v1588
    %1787 = vmatpush1.msra.mxu0 %v1587
    %1788 = vmatprep.subr.mxu0 %v1585
    %1789 = vmatpush1.msra.mxu0 %v1584
    %1790 = vmatprep.subr.mxu0 %v1582
    %1791 = vmatpush1.msra.mxu0 %v1581
    %1792 = vmatprep.subr.mxu0 %v1579
    %1793 = vmatpush1.msra.mxu0 %v1578
    %1794 = vmatprep.subr.mxu0 %v1576
    %1795 = vmatpush1.msra.mxu0 %v1575
    %1796 = vmatprep.subr.mxu0 %v1573
    %1797 = vmatpush1.msra.mxu0 %v1572
    %1798 = vmatprep.subr.mxu0 %v1570
    %1799 = vmatpush1.msra.mxu0 %v1569
    %1800 = vmatprep.subr.mxu0 %v1567
    %1801 = vmatpush1.msra.mxu0 %v1566
    %1802 = vmatprep.subr.mxu0 %v1564
    %1803 = vmatpush1.msra.mxu0 %v1563
    %1804 = vmatprep.subr.mxu0 %v1657
    %1805 = vmatpush2.msra.mxu0 %v1656
    %1806 = vmatprep.subr.mxu0 %v1654
    %1807 = vmatpush2.msra.mxu0 %v1653
    %1808 = vmatprep.subr.mxu0 %v1651
    %1809 = vmatpush2.msra.mxu0 %v1650
    %1810 = vmatprep.subr.mxu0 %v1648
    %1811 = vmatpush2.msra.mxu0 %v1647
    %1812 = vmatprep.subr.mxu0 %v1645
    %1813 = vmatpush2.msra.mxu0 %v1644
    %1814 = vmatprep.subr.mxu0 %v1642
    %1815 = vmatpush2.msra.mxu0 %v1641
    %1816 = vmatprep.subr.mxu0 %v1639
    %1817 = vmatpush2.msra.mxu0 %v1638
    %1818 = vmatprep.subr.mxu0 %v1636
    %1819 = vmatpush2.msra.mxu0 %v1635
    %1820 = vmatprep.subr.mxu0 %v1633
    %1821 = vmatpush2.msra.mxu0 %v1632
    %1822 = vmatprep.subr.mxu0 %v1630
    %1823 = vmatpush2.msra.mxu0 %v1629
    %1824 = vmatprep.subr.mxu0 %v1627
    %1825 = vmatpush2.msra.mxu0 %v1626
    %1826 = vmatprep.subr.mxu0 %v1624
    %1827 = vmatpush2.msra.mxu0 %v1623
    %1828 = vmatprep.subr.mxu0 %v1621
    %1829 = vmatpush2.msra.mxu0 %v1620
    %1830 = vmatprep.subr.mxu0 %v1618
    %1831 = vmatpush2.msra.mxu0 %v1617
    %1832 = vmatprep.subr.mxu0 %v1615
    %1833 = vmatpush2.msra.mxu0 %v1614
    %1834 = vmatprep.subr.mxu0 %v1612
    %1835 = vmatpush2.msra.mxu0 %v1611
    %1836 = vmatprep.mubr.f32.mxu0 %v1556
    %1837 = vmatmul.mubr.f32.gmra.mxu0 %v1555
    %v1838 = vpop.f32.mrf.mxu0
    %v1839 = vadd.f32 %v1760, %v1838
    %v1840 = vpop.f32.mrf.mxu0
    %v1841 = vadd.f32 %v1764, %v1840
    %1842 = vmatprep.mubr.f32.mxu0 %v1560
    %1843 = vmatmul.mubr.f32.gmra.mxu0 %v1559
    %v1844 = vpop.f32.mrf.mxu0
    %v1845 = vadd.f32 %v1760, %v1844
    %v1846 = vpop.f32.mrf.mxu0
    %v1847 = vadd.f32 %v1764, %v1846
    %1848 = vdwg.mxu0
    %1849 = vmatprep.subr.mxu0 %v1705
    %1850 = vmatpush1.msra.mxu0 %v1704
    %1851 = vmatprep.subr.mxu0 %v1702
    %1852 = vmatpush1.msra.mxu0 %v1701
    %1853 = vmatprep.subr.mxu0 %v1699
    %1854 = vmatpush1.msra.mxu0 %v1698
    %1855 = vmatprep.subr.mxu0 %v1696
    %1856 = vmatpush1.msra.mxu0 %v1695
    %1857 = vmatprep.subr.mxu0 %v1693
    %1858 = vmatpush1.msra.mxu0 %v1692
    %1859 = vmatprep.subr.mxu0 %v1690
    %1860 = vmatpush1.msra.mxu0 %v1689
    %1861 = vmatprep.subr.mxu0 %v1687
    %1862 = vmatpush1.msra.mxu0 %v1686
    %1863 = vmatprep.subr.mxu0 %v1684
    %1864 = vmatpush1.msra.mxu0 %v1683
    %1865 = vmatprep.subr.mxu0 %v1681
    %1866 = vmatpush1.msra.mxu0 %v1680
    %1867 = vmatprep.subr.mxu0 %v1678
    %1868 = vmatpush1.msra.mxu0 %v1677
    %1869 = vmatprep.subr.mxu0 %v1675
    %1870 = vmatpush1.msra.mxu0 %v1674
    %1871 = vmatprep.subr.mxu0 %v1672
    %1872 = vmatpush1.msra.mxu0 %v1671
    %1873 = vmatprep.subr.mxu0 %v1669
    %1874 = vmatpush1.msra.mxu0 %v1668
    %1875 = vmatprep.subr.mxu0 %v1666
    %1876 = vmatpush1.msra.mxu0 %v1665
    %1877 = vmatprep.subr.mxu0 %v1663
    %1878 = vmatpush1.msra.mxu0 %v1662
    %1879 = vmatprep.subr.mxu0 %v1660
    %1880 = vmatpush1.msra.mxu0 %v1659
    %1881 = vmatprep.subr.mxu0 %v1753
    %1882 = vmatpush2.msra.mxu0 %v1752
    %1883 = vmatprep.subr.mxu0 %v1750
    %1884 = vmatpush2.msra.mxu0 %v1749
    %1885 = vmatprep.subr.mxu0 %v1747
    %1886 = vmatpush2.msra.mxu0 %v1746
    %1887 = vmatprep.subr.mxu0 %v1744
    %1888 = vmatpush2.msra.mxu0 %v1743
    %1889 = vmatprep.subr.mxu0 %v1741
    %1890 = vmatpush2.msra.mxu0 %v1740
    %1891 = vmatprep.subr.mxu0 %v1738
    %1892 = vmatpush2.msra.mxu0 %v1737
    %1893 = vmatprep.subr.mxu0 %v1735
    %1894 = vmatpush2.msra.mxu0 %v1734
    %1895 = vmatprep.subr.mxu0 %v1732
    %1896 = vmatpush2.msra.mxu0 %v1731
    %1897 = vmatprep.subr.mxu0 %v1729
    %1898 = vmatpush2.msra.mxu0 %v1728
    %1899 = vmatprep.subr.mxu0 %v1726
    %1900 = vmatpush2.msra.mxu0 %v1725
    %1901 = vmatprep.subr.mxu0 %v1723
    %1902 = vmatpush2.msra.mxu0 %v1722
    %1903 = vmatprep.subr.mxu0 %v1720
    %1904 = vmatpush2.msra.mxu0 %v1719
    %1905 = vmatprep.subr.mxu0 %v1717
    %1906 = vmatpush2.msra.mxu0 %v1716
    %1907 = vmatprep.subr.mxu0 %v1714
    %1908 = vmatpush2.msra.mxu0 %v1713
    %1909 = vmatprep.subr.mxu0 %v1711
    %1910 = vmatpush2.msra.mxu0 %v1710
    %1911 = vmatprep.subr.mxu0 %v1708
    %1912 = vmatpush2.msra.mxu0 %v1707
    %1913 = vmatprep.mubr.f32.mxu0 %v1558
    %1914 = vmatmul.mubr.f32.gmra.mxu0 %v1557
    %v1915 = vpop.f32.mrf.mxu0
    %v1916 = vadd.f32 %v1839, %v1915
    %v1917 = vpop.f32.mrf.mxu0
    %v1918 = vadd.f32 %v1841, %v1917
    %1919 = vmatprep.mubr.f32.mxu0 %v1562
    %1920 = vmatmul.mubr.f32.gmra.mxu0 %v1561
    %v1921 = vpop.f32.mrf.mxu0
    %v1922 = vadd.f32 %v1845, %v1921
    %v1923 = vpop.f32.mrf.mxu0
    %v1924 = vadd.f32 %v1847, %v1923
    %1925 = vdwg.mxu0
    %1926 = vmatprep.subr.mxu0 0.0
    %1927 = vmatpush1.msra.mxu0 %v1610
    %1928 = vmatprep.subr.mxu0 0.0
    %1929 = vmatpush1.msra.mxu0 %v1607
    %1930 = vmatprep.subr.mxu0 0.0
    %1931 = vmatpush1.msra.mxu0 %v1604
    %1932 = vmatprep.subr.mxu0 0.0
    %1933 = vmatpush1.msra.mxu0 %v1601
    %1934 = vmatprep.subr.mxu0 0.0
    %1935 = vmatpush1.msra.mxu0 %v1598
    %1936 = vmatprep.subr.mxu0 0.0
    %1937 = vmatpush1.msra.mxu0 %v1595
    %1938 = vmatprep.subr.mxu0 0.0
    %1939 = vmatpush1.msra.mxu0 %v1592
    %1940 = vmatprep.subr.mxu0 0.0
    %1941 = vmatpush1.msra.mxu0 %v1589
    %1942 = vmatprep.subr.mxu0 0.0
    %1943 = vmatpush1.msra.mxu0 %v1586
    %1944 = vmatprep.subr.mxu0 0.0
    %1945 = vmatpush1.msra.mxu0 %v1583
    %1946 = vmatprep.subr.mxu0 0.0
    %1947 = vmatpush1.msra.mxu0 %v1580
    %1948 = vmatprep.subr.mxu0 0.0
    %1949 = vmatpush1.msra.mxu0 %v1577
    %1950 = vmatprep.subr.mxu0 0.0
    %1951 = vmatpush1.msra.mxu0 %v1574
    %1952 = vmatprep.subr.mxu0 0.0
    %1953 = vmatpush1.msra.mxu0 %v1571
    %1954 = vmatprep.subr.mxu0 0.0
    %1955 = vmatpush1.msra.mxu0 %v1568
    %1956 = vmatprep.subr.mxu0 0.0
    %1957 = vmatpush1.msra.mxu0 %v1565
    %1958 = vmatprep.subr.mxu0 0.0
    %1959 = vmatpush2.msra.mxu0 %v1658
    %1960 = vmatprep.subr.mxu0 0.0
    %1961 = vmatpush2.msra.mxu0 %v1655
    %1962 = vmatprep.subr.mxu0 0.0
    %1963 = vmatpush2.msra.mxu0 %v1652
    %1964 = vmatprep.subr.mxu0 0.0
    %1965 = vmatpush2.msra.mxu0 %v1649
    %1966 = vmatprep.subr.mxu0 0.0
    %1967 = vmatpush2.msra.mxu0 %v1646
    %1968 = vmatprep.subr.mxu0 0.0
    %1969 = vmatpush2.msra.mxu0 %v1643
    %1970 = vmatprep.subr.mxu0 0.0
    %1971 = vmatpush2.msra.mxu0 %v1640
    %1972 = vmatprep.subr.mxu0 0.0
    %1973 = vmatpush2.msra.mxu0 %v1637
    %1974 = vmatprep.subr.mxu0 0.0
    %1975 = vmatpush2.msra.mxu0 %v1634
    %1976 = vmatprep.subr.mxu0 0.0
    %1977 = vmatpush2.msra.mxu0 %v1631
    %1978 = vmatprep.subr.mxu0 0.0
    %1979 = vmatpush2.msra.mxu0 %v1628
    %1980 = vmatprep.subr.mxu0 0.0
    %1981 = vmatpush2.msra.mxu0 %v1625
    %1982 = vmatprep.subr.mxu0 0.0
    %1983 = vmatpush2.msra.mxu0 %v1622
    %1984 = vmatprep.subr.mxu0 0.0
    %1985 = vmatpush2.msra.mxu0 %v1619
    %1986 = vmatprep.subr.mxu0 0.0
    %1987 = vmatpush2.msra.mxu0 %v1616
    %1988 = vmatprep.subr.mxu0 0.0
    %1989 = vmatpush2.msra.mxu0 %v1613
    %1990 = vmatprep.mubr.f32.mxu0 %v1556
    %1991 = vmatmul.mubr.f32.gmra.mxu0 %v1555
    %v1992 = vpop.f32.mrf.mxu0
    %v1993 = vadd.f32 %v1768, %v1992
    %v1994 = vpop.f32.mrf.mxu0
    %1995 = vmatprep.mubr.f32.mxu0 %v1560
    %1996 = vmatmul.mubr.f32.gmra.mxu0 %v1559
    %v1997 = vpop.f32.mrf.mxu0
    %v1998 = vadd.f32 %v1768, %v1997
    %v1999 = vpop.f32.mrf.mxu0
    %2000 = vdwg.mxu0
    %2001 = vmatprep.subr.mxu0 0.0
    %2002 = vmatpush1.msra.mxu0 %v1706
    %2003 = vmatprep.subr.mxu0 0.0
    %2004 = vmatpush1.msra.mxu0 %v1703
    %2005 = vmatprep.subr.mxu0 0.0
    %2006 = vmatpush1.msra.mxu0 %v1700
    %2007 = vmatprep.subr.mxu0 0.0
    %2008 = vmatpush1.msra.mxu0 %v1697
    %2009 = vmatprep.subr.mxu0 0.0
    %2010 = vmatpush1.msra.mxu0 %v1694
    %2011 = vmatprep.subr.mxu0 0.0
    %2012 = vmatpush1.msra.mxu0 %v1691
    %2013 = vmatprep.subr.mxu0 0.0
    %2014 = vmatpush1.msra.mxu0 %v1688
    %2015 = vmatprep.subr.mxu0 0.0
    %2016 = vmatpush1.msra.mxu0 %v1685
    %2017 = vmatprep.subr.mxu0 0.0
    %2018 = vmatpush1.msra.mxu0 %v1682
    %2019 = vmatprep.subr.mxu0 0.0
    %2020 = vmatpush1.msra.mxu0 %v1679
    %2021 = vmatprep.subr.mxu0 0.0
    %2022 = vmatpush1.msra.mxu0 %v1676
    %2023 = vmatprep.subr.mxu0 0.0
    %2024 = vmatpush1.msra.mxu0 %v1673
    %2025 = vmatprep.subr.mxu0 0.0
    %2026 = vmatpush1.msra.mxu0 %v1670
    %2027 = vmatprep.subr.mxu0 0.0
    %2028 = vmatpush1.msra.mxu0 %v1667
    %2029 = vmatprep.subr.mxu0 0.0
    %2030 = vmatpush1.msra.mxu0 %v1664
    %2031 = vmatprep.subr.mxu0 0.0
    %2032 = vmatpush1.msra.mxu0 %v1661
    %2033 = vmatprep.subr.mxu0 0.0
    %2034 = vmatpush2.msra.mxu0 %v1754
    %2035 = vmatprep.subr.mxu0 0.0
    %2036 = vmatpush2.msra.mxu0 %v1751
    %2037 = vmatprep.subr.mxu0 0.0
    %2038 = vmatpush2.msra.mxu0 %v1748
    %2039 = vmatprep.subr.mxu0 0.0
    %2040 = vmatpush2.msra.mxu0 %v1745
    %2041 = vmatprep.subr.mxu0 0.0
    %2042 = vmatpush2.msra.mxu0 %v1742
    %2043 = vmatprep.subr.mxu0 0.0
    %2044 = vmatpush2.msra.mxu0 %v1739
    %2045 = vmatprep.subr.mxu0 0.0
    %2046 = vmatpush2.msra.mxu0 %v1736
    %2047 = vmatprep.subr.mxu0 0.0
    %2048 = vmatpush2.msra.mxu0 %v1733
    %2049 = vmatprep.subr.mxu0 0.0
    %2050 = vmatpush2.msra.mxu0 %v1730
    %2051 = vmatprep.subr.mxu0 0.0
    %2052 = vmatpush2.msra.mxu0 %v1727
    %2053 = vmatprep.subr.mxu0 0.0
    %2054 = vmatpush2.msra.mxu0 %v1724
    %2055 = vmatprep.subr.mxu0 0.0
    %2056 = vmatpush2.msra.mxu0 %v1721
    %2057 = vmatprep.subr.mxu0 0.0
    %2058 = vmatpush2.msra.mxu0 %v1718
    %2059 = vmatprep.subr.mxu0 0.0
    %2060 = vmatpush2.msra.mxu0 %v1715
    %2061 = vmatprep.subr.mxu0 0.0
    %2062 = vmatpush2.msra.mxu0 %v1712
    %2063 = vmatprep.subr.mxu0 0.0
    %2064 = vmatpush2.msra.mxu0 %v1709
    %2065 = vmatprep.mubr.f32.mxu0 %v1558
    %2066 = vmatmul.mubr.f32.gmra.mxu0 %v1557
    %v2067 = vpop.f32.mrf.mxu0
    %v2068 = vadd.f32 %v1993, %v2067
    %v2069 = vpop.f32.mrf.mxu0
    %2070 = vmatprep.mubr.f32.mxu0 %v1562
    %2071 = vmatmul.mubr.f32.gmra.mxu0 %v1561
    %v2072 = vpop.f32.mrf.mxu0
    %v2073 = vadd.f32 %v1998, %v2072
    %v2074 = vpop.f32.mrf.mxu0
    %2075 = vdwg.mxu0
    %v2076 = vxor.u32 %v1916, 2147483648
    %v2077 = vxor.u32 %v1918, 2147483648
    %v2078 = vxor.u32 %v2068, 2147483648
    %v2079 = vxor.u32 %v1922, 2147483648
    %v2080 = vxor.u32 %v1924, 2147483648
    %v2081 = vxor.u32 %v2073, 2147483648
    %v2082 = vmul.f32 %v2076, 1.442695
    %v2083 = vpow.pop %v2082
    %v2084 = vmul.f32 %v2077, 1.442695
    %v2085 = vpow.pop %v2084
    %v2086 = vmul.f32 %v2078, 1.442695
    %v2087 = vpow.pop %v2086
    %v2088 = vmul.f32 %v2079, 1.442695
    %v2089 = vpow.pop %v2088
    %v2090 = vmul.f32 %v2080, 1.442695
    %v2091 = vpow.pop %v2090
    %v2092 = vmul.f32 %v2081, 1.442695
    %v2093 = vpow.pop %v2092
    %v2094 = vadd.f32 %v2083, 1.0
    %v2095 = vadd.f32 %v2085, 1.0
    %v2096 = vadd.f32 %v2087, 1.0
    %v2097 = vadd.f32 %v2089, 1.0
    %v2098 = vadd.f32 %v2091, 1.0
    %v2099 = vadd.f32 %v2093, 1.0
    %v2100 = vrcp.pop %v2094
    %v2101 = vmul.f32 1.0, %v2100
    %v2102 = vrcp.pop %v2095
    %v2103 = vmul.f32 1.0, %v2102
    %v2104 = vrcp.pop %v2096
    %v2105 = vmul.f32 1.0, %v2104
    %v2106 = vrcp.pop %v2097
    %v2107 = vmul.f32 1.0, %v2106
    %v2108 = vrcp.pop %v2098
    %v2109 = vmul.f32 1.0, %v2108
    %v2110 = vrcp.pop %v2099
    %v2111 = vmul.f32 1.0, %v2110
    %v2112 = vld [vmem:[#allocation6] sm:$0xff]
    %v2113 = vld [vmem:[#allocation6 + $0x8] sm:$0xff]
    %v2114 = vld [vmem:[#allocation6 + $0x10] sm:$0xff]
    %v2115 = vld [vmem:[#allocation6 + $0x18] sm:$0xff]
    %v2116 = vld [vmem:[#allocation6 + $0x20] sm:$0xff]
    %v2117 = vld [vmem:[#allocation6 + $0x28] sm:$0xff]
    %v2118 = vld [vmem:[#allocation6 + $0x30] sm:$0xff]
    %v2119 = vld [vmem:[#allocation6 + $0x38] sm:$0xff]
    %v2120 = vld [vmem:[#allocation6 + $0x40] sm:$0xff]
    %v2121 = vld [vmem:[#allocation6 + $0x48] sm:$0xff]
    %v2122 = vld [vmem:[#allocation6 + $0x50] sm:$0xff]
    %v2123 = vld [vmem:[#allocation6 + $0x58] sm:$0xff]
    %v2124 = vld [vmem:[#allocation6 + $0x60] sm:$0xff]
    %v2125 = vld [vmem:[#allocation6 + $0x68] sm:$0xff]
    %v2126 = vld [vmem:[#allocation6 + $0x70] sm:$0xff]
    %v2127 = vld [vmem:[#allocation6 + $0x78] sm:$0xff]
    %v2128 = vld [vmem:[#allocation6 + $0x80] sm:$0xff]
    %v2129 = vld [vmem:[#allocation6 + $0x88] sm:$0xff]
    %v2130 = vld [vmem:[#allocation6 + $0x90] sm:$0xff]
    %v2131 = vld [vmem:[#allocation6 + $0x98] sm:$0xff]
    %v2132 = vld [vmem:[#allocation6 + $0xa0] sm:$0xff]
    %v2133 = vld [vmem:[#allocation6 + $0xa8] sm:$0xff]
    %v2134 = vld [vmem:[#allocation6 + $0xb0] sm:$0xff]
    %v2135 = vld [vmem:[#allocation6 + $0xb8] sm:$0xff]
    %v2136 = vld [vmem:[#allocation6 + $0xc0] sm:$0xff]
    %v2137 = vld [vmem:[#allocation6 + $0xc8] sm:$0xff]
    %v2138 = vld [vmem:[#allocation6 + $0xd0] sm:$0xff]
    %v2139 = vld [vmem:[#allocation6 + $0xd8] sm:$0xff]
    %v2140 = vld [vmem:[#allocation6 + $0xe0] sm:$0xff]
    %v2141 = vld [vmem:[#allocation6 + $0xe8] sm:$0xff]
    %v2142 = vld [vmem:[#allocation6 + $0xf0] sm:$0xff]
    %v2143 = vld [vmem:[#allocation6 + $0xf8] sm:$0xff]
    %v2144 = vld [vmem:[#allocation6 + $0x100] sm:$0xff]
    %v2145 = vld [vmem:[#allocation6 + $0x108] sm:$0xff]
    %v2146 = vld [vmem:[#allocation6 + $0x110] sm:$0xff]
    %v2147 = vld [vmem:[#allocation6 + $0x118] sm:$0xff]
    %v2148 = vld [vmem:[#allocation6 + $0x120] sm:$0xff]
    %v2149 = vld [vmem:[#allocation6 + $0x128] sm:$0xff]
    %v2150 = vld [vmem:[#allocation6 + $0x130] sm:$0xff]
    %v2151 = vld [vmem:[#allocation6 + $0x138] sm:$0xff]
    %v2152 = vld [vmem:[#allocation6 + $0x140] sm:$0xff]
    %v2153 = vld [vmem:[#allocation6 + $0x148] sm:$0xff]
    %v2154 = vld [vmem:[#allocation6 + $0x150] sm:$0xff]
    %v2155 = vld [vmem:[#allocation6 + $0x158] sm:$0xff]
    %v2156 = vld [vmem:[#allocation6 + $0x160] sm:$0xff]
    %v2157 = vld [vmem:[#allocation6 + $0x168] sm:$0xff]
    %v2158 = vld [vmem:[#allocation6 + $0x170] sm:$0xff]
    %v2159 = vld [vmem:[#allocation6 + $0x178] sm:$0xff]
    %v2160 = vld [vmem:[#allocation6 + $0x180] sm:$0xff]
    %v2161 = vld [vmem:[#allocation6 + $0x188] sm:$0xff]
    %v2162 = vld [vmem:[#allocation6 + $0x190] sm:$0xff]
    %v2163 = vld [vmem:[#allocation6 + $0x198] sm:$0xff]
    %v2164 = vld [vmem:[#allocation6 + $0x1a0] sm:$0xff]
    %v2165 = vld [vmem:[#allocation6 + $0x1a8] sm:$0xff]
    %v2166 = vld [vmem:[#allocation6 + $0x1b0] sm:$0xff]
    %v2167 = vld [vmem:[#allocation6 + $0x1b8] sm:$0xff]
    %v2168 = vld [vmem:[#allocation6 + $0x1c0] sm:$0xff]
    %v2169 = vld [vmem:[#allocation6 + $0x1c8] sm:$0xff]
    %v2170 = vld [vmem:[#allocation6 + $0x1d0] sm:$0xff]
    %v2171 = vld [vmem:[#allocation6 + $0x1d8] sm:$0xff]
    %v2172 = vld [vmem:[#allocation6 + $0x1e0] sm:$0xff]
    %v2173 = vld [vmem:[#allocation6 + $0x1e8] sm:$0xff]
    %v2174 = vld [vmem:[#allocation6 + $0x1f0] sm:$0xff]
    %v2175 = vld [vmem:[#allocation6 + $0x1f8] sm:$0xff]
    %v2176 = vld [vmem:[#allocation6 + $0x200] sm:$0xff]
    %v2177 = vld [vmem:[#allocation6 + $0x208] sm:$0xff]
    %v2178 = vld [vmem:[#allocation6 + $0x210] sm:$0xff]
    %v2179 = vld [vmem:[#allocation6 + $0x218] sm:$0xff]
    %v2180 = vld [vmem:[#allocation6 + $0x220] sm:$0xff]
    %v2181 = vld [vmem:[#allocation6 + $0x228] sm:$0xff]
    %v2182 = vld [vmem:[#allocation6 + $0x230] sm:$0xff]
    %v2183 = vld [vmem:[#allocation6 + $0x238] sm:$0xff]
    %v2184 = vld [vmem:[#allocation6 + $0x240] sm:$0xff]
    %v2185 = vld [vmem:[#allocation6 + $0x248] sm:$0xff]
    %v2186 = vld [vmem:[#allocation6 + $0x250] sm:$0xff]
    %v2187 = vld [vmem:[#allocation6 + $0x258] sm:$0xff]
    %v2188 = vld [vmem:[#allocation6 + $0x260] sm:$0xff]
    %v2189 = vld [vmem:[#allocation6 + $0x268] sm:$0xff]
    %v2190 = vld [vmem:[#allocation6 + $0x270] sm:$0xff]
    %v2191 = vld [vmem:[#allocation6 + $0x278] sm:$0xff]
    %v2192 = vld [vmem:[#allocation6 + $0x280] sm:$0xff]
    %v2193 = vld [vmem:[#allocation6 + $0x288] sm:$0xff]
    %v2194 = vld [vmem:[#allocation6 + $0x290] sm:$0xff]
    %v2195 = vld [vmem:[#allocation6 + $0x298] sm:$0xff]
    %v2196 = vld [vmem:[#allocation6 + $0x2a0] sm:$0xff]
    %v2197 = vld [vmem:[#allocation6 + $0x2a8] sm:$0xff]
    %v2198 = vld [vmem:[#allocation6 + $0x2b0] sm:$0xff]
    %v2199 = vld [vmem:[#allocation6 + $0x2b8] sm:$0xff]
    %v2200 = vld [vmem:[#allocation6 + $0x2c0] sm:$0xff]
    %v2201 = vld [vmem:[#allocation6 + $0x2c8] sm:$0xff]
    %v2202 = vld [vmem:[#allocation6 + $0x2d0] sm:$0xff]
    %v2203 = vld [vmem:[#allocation6 + $0x2d8] sm:$0xff]
    %v2204 = vld [vmem:[#allocation6 + $0x2e0] sm:$0xff]
    %v2205 = vld [vmem:[#allocation6 + $0x2e8] sm:$0xff]
    %v2206 = vld [vmem:[#allocation6 + $0x2f0] sm:$0xff]
    %v2207 = vld [vmem:[#allocation6 + $0x2f8] sm:$0xff]
    %v2208 = vld [vmem:[#allocation6 + $0x300] sm:$0xff]
    %v2209 = vld [vmem:[#allocation6 + $0x308] sm:$0xff]
    %v2210 = vld [vmem:[#allocation6 + $0x310] sm:$0xff]
    %v2211 = vld [vmem:[#allocation6 + $0x318] sm:$0xff]
    %v2212 = vld [vmem:[#allocation6 + $0x320] sm:$0xff]
    %v2213 = vld [vmem:[#allocation6 + $0x328] sm:$0xff]
    %v2214 = vld [vmem:[#allocation6 + $0x330] sm:$0xff]
    %v2215 = vld [vmem:[#allocation6 + $0x338] sm:$0xff]
    %v2216 = vld [vmem:[#allocation6 + $0x340] sm:$0xff]
    %v2217 = vld [vmem:[#allocation6 + $0x348] sm:$0xff]
    %v2218 = vld [vmem:[#allocation6 + $0x350] sm:$0xff]
    %v2219 = vld [vmem:[#allocation6 + $0x358] sm:$0xff]
    %v2220 = vld [vmem:[#allocation6 + $0x360] sm:$0xff]
    %v2221 = vld [vmem:[#allocation6 + $0x368] sm:$0xff]
    %v2222 = vld [vmem:[#allocation6 + $0x370] sm:$0xff]
    %v2223 = vld [vmem:[#allocation6 + $0x378] sm:$0xff]
    %v2224 = vld [vmem:[#allocation6 + $0x380] sm:$0xff]
    %v2225 = vld [vmem:[#allocation6 + $0x388] sm:$0xff]
    %v2226 = vld [vmem:[#allocation6 + $0x390] sm:$0xff]
    %v2227 = vld [vmem:[#allocation6 + $0x398] sm:$0xff]
    %v2228 = vld [vmem:[#allocation6 + $0x3a0] sm:$0xff]
    %v2229 = vld [vmem:[#allocation6 + $0x3a8] sm:$0xff]
    %v2230 = vld [vmem:[#allocation6 + $0x3b0] sm:$0xff]
    %v2231 = vld [vmem:[#allocation6 + $0x3b8] sm:$0xff]
    %v2232 = vld [vmem:[#allocation6 + $0x3c0] sm:$0xff]
    %v2233 = vld [vmem:[#allocation6 + $0x3c8] sm:$0xff]
    %v2234 = vld [vmem:[#allocation6 + $0x3d0] sm:$0xff]
    %v2235 = vld [vmem:[#allocation6 + $0x3d8] sm:$0xff]
    %v2236 = vld [vmem:[#allocation6 + $0x3e0] sm:$0xff]
    %v2237 = vld [vmem:[#allocation6 + $0x3e8] sm:$0xff]
    %v2238 = vld [vmem:[#allocation6 + $0x3f0] sm:$0xff]
    %v2239 = vld [vmem:[#allocation6 + $0x3f8] sm:$0xff]
    %v2240 = vld [vmem:[#allocation6 + $0x400] sm:$0xff]
    %v2241 = vld [vmem:[#allocation6 + $0x408] sm:$0xff]
    %v2242 = vld [vmem:[#allocation6 + $0x410] sm:$0xff]
    %v2243 = vld [vmem:[#allocation6 + $0x418] sm:$0xff]
    %v2244 = vld [vmem:[#allocation6 + $0x420] sm:$0xff]
    %v2245 = vld [vmem:[#allocation6 + $0x428] sm:$0xff]
    %v2246 = vld [vmem:[#allocation6 + $0x430] sm:$0xff]
    %v2247 = vld [vmem:[#allocation6 + $0x438] sm:$0xff]
    %v2248 = vld [vmem:[#allocation6 + $0x440] sm:$0xff]
    %v2249 = vld [vmem:[#allocation6 + $0x448] sm:$0xff]
    %v2250 = vld [vmem:[#allocation6 + $0x450] sm:$0xff]
    %v2251 = vld [vmem:[#allocation6 + $0x458] sm:$0xff]
    %v2252 = vld [vmem:[#allocation6 + $0x460] sm:$0xff]
    %v2253 = vld [vmem:[#allocation6 + $0x468] sm:$0xff]
    %v2254 = vld [vmem:[#allocation6 + $0x470] sm:$0xff]
    %v2255 = vld [vmem:[#allocation6 + $0x478] sm:$0xff]
    %v2256 = vld [vmem:[#allocation6 + $0x480] sm:$0xff]
    %v2257 = vld [vmem:[#allocation6 + $0x488] sm:$0xff]
    %v2258 = vld [vmem:[#allocation6 + $0x490] sm:$0xff]
    %v2259 = vld [vmem:[#allocation6 + $0x498] sm:$0xff]
    %v2260 = vld [vmem:[#allocation6 + $0x4a0] sm:$0xff]
    %v2261 = vld [vmem:[#allocation6 + $0x4a8] sm:$0xff]
    %v2262 = vld [vmem:[#allocation6 + $0x4b0] sm:$0xff]
    %v2263 = vld [vmem:[#allocation6 + $0x4b8] sm:$0xff]
    %v2264 = vld [vmem:[#allocation6 + $0x4c0] sm:$0xff]
    %v2265 = vld [vmem:[#allocation6 + $0x4c8] sm:$0xff]
    %v2266 = vld [vmem:[#allocation6 + $0x4d0] sm:$0xff]
    %v2267 = vld [vmem:[#allocation6 + $0x4d8] sm:$0xff]
    %v2268 = vld [vmem:[#allocation6 + $0x4e0] sm:$0xff]
    %v2269 = vld [vmem:[#allocation6 + $0x4e8] sm:$0xff]
    %v2270 = vld [vmem:[#allocation6 + $0x4f0] sm:$0xff]
    %v2271 = vld [vmem:[#allocation6 + $0x4f8] sm:$0xff]
    %v2272 = vld [vmem:[#allocation6 + $0x500] sm:$0xff]
    %v2273 = vld [vmem:[#allocation6 + $0x508] sm:$0xff]
    %v2274 = vld [vmem:[#allocation6 + $0x510] sm:$0xff]
    %v2275 = vld [vmem:[#allocation6 + $0x518] sm:$0xff]
    %v2276 = vld [vmem:[#allocation6 + $0x520] sm:$0xff]
    %v2277 = vld [vmem:[#allocation6 + $0x528] sm:$0xff]
    %v2278 = vld [vmem:[#allocation6 + $0x530] sm:$0xff]
    %v2279 = vld [vmem:[#allocation6 + $0x538] sm:$0xff]
    %v2280 = vld [vmem:[#allocation6 + $0x540] sm:$0xff]
    %v2281 = vld [vmem:[#allocation6 + $0x548] sm:$0xff]
    %v2282 = vld [vmem:[#allocation6 + $0x550] sm:$0xff]
    %v2283 = vld [vmem:[#allocation6 + $0x558] sm:$0xff]
    %v2284 = vld [vmem:[#allocation6 + $0x560] sm:$0xff]
    %v2285 = vld [vmem:[#allocation6 + $0x568] sm:$0xff]
    %v2286 = vld [vmem:[#allocation6 + $0x570] sm:$0xff]
    %v2287 = vld [vmem:[#allocation6 + $0x578] sm:$0xff]
    %v2288 = vld [vmem:[#allocation6 + $0x580] sm:$0xff]
    %v2289 = vld [vmem:[#allocation6 + $0x588] sm:$0xff]
    %v2290 = vld [vmem:[#allocation6 + $0x590] sm:$0xff]
    %v2291 = vld [vmem:[#allocation6 + $0x598] sm:$0xff]
    %v2292 = vld [vmem:[#allocation6 + $0x5a0] sm:$0xff]
    %v2293 = vld [vmem:[#allocation6 + $0x5a8] sm:$0xff]
    %v2294 = vld [vmem:[#allocation6 + $0x5b0] sm:$0xff]
    %v2295 = vld [vmem:[#allocation6 + $0x5b8] sm:$0xff]
    %v2296 = vld [vmem:[#allocation6 + $0x5c0] sm:$0xff]
    %v2297 = vld [vmem:[#allocation6 + $0x5c8] sm:$0xff]
    %v2298 = vld [vmem:[#allocation6 + $0x5d0] sm:$0xff]
    %v2299 = vld [vmem:[#allocation6 + $0x5d8] sm:$0xff]
    %v2300 = vld [vmem:[#allocation6 + $0x5e0] sm:$0xff]
    %v2301 = vld [vmem:[#allocation6 + $0x5e8] sm:$0xff]
    %v2302 = vld [vmem:[#allocation6 + $0x5f0] sm:$0xff]
    %v2303 = vld [vmem:[#allocation6 + $0x5f8] sm:$0xff]
    %v2304 = vld [vmem:[%s6] sm:$0xf]
    %v2306 = vlaneseq
    %v2307 = vshrl.u32 %v2306, 7
    %v2308 = vsub.s32 0, %v2307
    %v2309 = vrot.slane %v2304, %v2308
    %v2310 = vlaneseq
    %v2311 = vshrl.u32 %v2310, 7
    %v2312 = vsub.s32 1, %v2311
    %v2313 = vrot.slane %v2304, %v2312
    %v2314 = vlaneseq
    %v2315 = vshrl.u32 %v2314, 7
    %v2316 = vsub.s32 2, %v2315
    %v2317 = vrot.slane %v2304, %v2316
    %v2318 = vlaneseq
    %v2319 = vshrl.u32 %v2318, 7
    %v2320 = vsub.s32 3, %v2319
    %v2321 = vrot.slane %v2304, %v2320
    %2326 = vmatprep.subr.mxu0 %v2173
    %2327 = vmatpush1.msra.mxu0 %v2172
    %2328 = vmatprep.subr.mxu0 %v2169
    %2329 = vmatpush1.msra.mxu0 %v2168
    %2330 = vmatprep.subr.mxu0 %v2165
    %2331 = vmatpush1.msra.mxu0 %v2164
    %2332 = vmatprep.subr.mxu0 %v2161
    %2333 = vmatpush1.msra.mxu0 %v2160
    %2334 = vmatprep.subr.mxu0 %v2157
    %2335 = vmatpush1.msra.mxu0 %v2156
    %2336 = vmatprep.subr.mxu0 %v2153
    %2337 = vmatpush1.msra.mxu0 %v2152
    %2338 = vmatprep.subr.mxu0 %v2149
    %2339 = vmatpush1.msra.mxu0 %v2148
    %2340 = vmatprep.subr.mxu0 %v2145
    %2341 = vmatpush1.msra.mxu0 %v2144
    %2342 = vmatprep.subr.mxu0 %v2141
    %2343 = vmatpush1.msra.mxu0 %v2140
    %2344 = vmatprep.subr.mxu0 %v2137
    %2345 = vmatpush1.msra.mxu0 %v2136
    %2346 = vmatprep.subr.mxu0 %v2133
    %2347 = vmatpush1.msra.mxu0 %v2132
    %2348 = vmatprep.subr.mxu0 %v2129
    %2349 = vmatpush1.msra.mxu0 %v2128
    %2350 = vmatprep.subr.mxu0 %v2125
    %2351 = vmatpush1.msra.mxu0 %v2124
    %2352 = vmatprep.subr.mxu0 %v2121
    %2353 = vmatpush1.msra.mxu0 %v2120
    %2354 = vmatprep.subr.mxu0 %v2117
    %2355 = vmatpush1.msra.mxu0 %v2116
    %2356 = vmatprep.subr.mxu0 %v2113
    %2357 = vmatpush1.msra.mxu0 %v2112
    %2358 = vmatprep.subr.mxu0 %v2237
    %2359 = vmatpush2.msra.mxu0 %v2236
    %2360 = vmatprep.subr.mxu0 %v2233
    %2361 = vmatpush2.msra.mxu0 %v2232
    %2362 = vmatprep.subr.mxu0 %v2229
    %2363 = vmatpush2.msra.mxu0 %v2228
    %2364 = vmatprep.subr.mxu0 %v2225
    %2365 = vmatpush2.msra.mxu0 %v2224
    %2366 = vmatprep.subr.mxu0 %v2221
    %2367 = vmatpush2.msra.mxu0 %v2220
    %2368 = vmatprep.subr.mxu0 %v2217
    %2369 = vmatpush2.msra.mxu0 %v2216
    %2370 = vmatprep.subr.mxu0 %v2213
    %2371 = vmatpush2.msra.mxu0 %v2212
    %2372 = vmatprep.subr.mxu0 %v2209
    %2373 = vmatpush2.msra.mxu0 %v2208
    %2374 = vmatprep.subr.mxu0 %v2205
    %2375 = vmatpush2.msra.mxu0 %v2204
    %2376 = vmatprep.subr.mxu0 %v2201
    %2377 = vmatpush2.msra.mxu0 %v2200
    %2378 = vmatprep.subr.mxu0 %v2197
    %2379 = vmatpush2.msra.mxu0 %v2196
    %2380 = vmatprep.subr.mxu0 %v2193
    %2381 = vmatpush2.msra.mxu0 %v2192
    %2382 = vmatprep.subr.mxu0 %v2189
    %2383 = vmatpush2.msra.mxu0 %v2188
    %2384 = vmatprep.subr.mxu0 %v2185
    %2385 = vmatpush2.msra.mxu0 %v2184
    %2386 = vmatprep.subr.mxu0 %v2181
    %2387 = vmatpush2.msra.mxu0 %v2180
    %2388 = vmatprep.subr.mxu0 %v2177
    %2389 = vmatpush2.msra.mxu0 %v2176
    %2390 = vmatprep.mubr.f32.mxu0 %v2103
    %2391 = vmatmul.mubr.f32.gmra.mxu0 %v2101
    %v2392 = vpop.f32.mrf.mxu0
    %v2393 = vadd.f32 %v2309, %v2392
    %v2394 = vpop.f32.mrf.mxu0
    %v2395 = vadd.f32 %v2313, %v2394
    %2396 = vmatprep.mubr.f32.mxu0 %v2109
    %2397 = vmatmul.mubr.f32.gmra.mxu0 %v2107
    %v2398 = vpop.f32.mrf.mxu0
    %v2399 = vadd.f32 %v2309, %v2398
    %v2400 = vpop.f32.mrf.mxu0
    %v2401 = vadd.f32 %v2313, %v2400
    %2402 = vdwg.mxu0
    %2403 = vmatprep.subr.mxu0 %v2301
    %2404 = vmatpush1.msra.mxu0 %v2300
    %2405 = vmatprep.subr.mxu0 %v2297
    %2406 = vmatpush1.msra.mxu0 %v2296
    %2407 = vmatprep.subr.mxu0 %v2293
    %2408 = vmatpush1.msra.mxu0 %v2292
    %2409 = vmatprep.subr.mxu0 %v2289
    %2410 = vmatpush1.msra.mxu0 %v2288
    %2411 = vmatprep.subr.mxu0 %v2285
    %2412 = vmatpush1.msra.mxu0 %v2284
    %2413 = vmatprep.subr.mxu0 %v2281
    %2414 = vmatpush1.msra.mxu0 %v2280
    %2415 = vmatprep.subr.mxu0 %v2277
    %2416 = vmatpush1.msra.mxu0 %v2276
    %2417 = vmatprep.subr.mxu0 %v2273
    %2418 = vmatpush1.msra.mxu0 %v2272
    %2419 = vmatprep.subr.mxu0 %v2269
    %2420 = vmatpush1.msra.mxu0 %v2268
    %2421 = vmatprep.subr.mxu0 %v2265
    %2422 = vmatpush1.msra.mxu0 %v2264
    %2423 = vmatprep.subr.mxu0 %v2261
    %2424 = vmatpush1.msra.mxu0 %v2260
    %2425 = vmatprep.subr.mxu0 %v2257
    %2426 = vmatpush1.msra.mxu0 %v2256
    %2427 = vmatprep.subr.mxu0 %v2253
    %2428 = vmatpush1.msra.mxu0 %v2252
    %2429 = vmatprep.subr.mxu0 %v2249
    %2430 = vmatpush1.msra.mxu0 %v2248
    %2431 = vmatprep.subr.mxu0 %v2245
    %2432 = vmatpush1.msra.mxu0 %v2244
    %2433 = vmatprep.subr.mxu0 %v2241
    %2434 = vmatpush1.msra.mxu0 %v2240
    %2435 = vmatprep.subr.mxu0 0.0
    %2436 = vmatpush2.msra.mxu0 0.0
    %2437 = vmatprep.subr.mxu0 0.0
    %2438 = vmatpush2.msra.mxu0 0.0
    %2439 = vmatprep.subr.mxu0 0.0
    %2440 = vmatpush2.msra.mxu0 0.0
    %2441 = vmatprep.subr.mxu0 0.0
    %2442 = vmatpush2.msra.mxu0 0.0
    %2443 = vmatprep.subr.mxu0 0.0
    %2444 = vmatpush2.msra.mxu0 0.0
    %2445 = vmatprep.subr.mxu0 0.0
    %2446 = vmatpush2.msra.mxu0 0.0
    %2447 = vmatprep.subr.mxu0 0.0
    %2448 = vmatpush2.msra.mxu0 0.0
    %2449 = vmatprep.subr.mxu0 0.0
    %2450 = vmatpush2.msra.mxu0 0.0
    %2451 = vmatprep.subr.mxu0 0.0
    %2452 = vmatpush2.msra.mxu0 0.0
    %2453 = vmatprep.subr.mxu0 0.0
    %2454 = vmatpush2.msra.mxu0 0.0
    %2455 = vmatprep.subr.mxu0 0.0
    %2456 = vmatpush2.msra.mxu0 0.0
    %2457 = vmatprep.subr.mxu0 0.0
    %2458 = vmatpush2.msra.mxu0 0.0
    %2459 = vmatprep.subr.mxu0 0.0
    %2460 = vmatpush2.msra.mxu0 0.0
    %2461 = vmatprep.subr.mxu0 0.0
    %2462 = vmatpush2.msra.mxu0 0.0
    %2463 = vmatprep.subr.mxu0 0.0
    %2464 = vmatpush2.msra.mxu0 0.0
    %2465 = vmatprep.subr.mxu0 0.0
    %2466 = vmatpush2.msra.mxu0 0.0
    %2467 = vmatprep.mubr.f32.mxu0 0.0
    %2468 = vmatmul.mubr.f32.gmra.mxu0 %v2105
    %v2469 = vpop.f32.mrf.mxu0
    %v2470 = vadd.f32 %v2393, %v2469
    %v2471 = vpop.f32.mrf.mxu0
    %v2472 = vadd.f32 %v2395, %v2471
    %2473 = vmatprep.mubr.f32.mxu0 0.0
    %2474 = vmatmul.mubr.f32.gmra.mxu0 %v2111
    %v2475 = vpop.f32.mrf.mxu0
    %v2476 = vadd.f32 %v2399, %v2475
    %v2477 = vpop.f32.mrf.mxu0
    %v2478 = vadd.f32 %v2401, %v2477
    %2479 = vdwg.mxu0
    %2480 = vmatprep.subr.mxu0 %v2175
    %2481 = vmatpush1.msra.mxu0 %v2174
    %2482 = vmatprep.subr.mxu0 %v2171
    %2483 = vmatpush1.msra.mxu0 %v2170
    %2484 = vmatprep.subr.mxu0 %v2167
    %2485 = vmatpush1.msra.mxu0 %v2166
    %2486 = vmatprep.subr.mxu0 %v2163
    %2487 = vmatpush1.msra.mxu0 %v2162
    %2488 = vmatprep.subr.mxu0 %v2159
    %2489 = vmatpush1.msra.mxu0 %v2158
    %2490 = vmatprep.subr.mxu0 %v2155
    %2491 = vmatpush1.msra.mxu0 %v2154
    %2492 = vmatprep.subr.mxu0 %v2151
    %2493 = vmatpush1.msra.mxu0 %v2150
    %2494 = vmatprep.subr.mxu0 %v2147
    %2495 = vmatpush1.msra.mxu0 %v2146
    %2496 = vmatprep.subr.mxu0 %v2143
    %2497 = vmatpush1.msra.mxu0 %v2142
    %2498 = vmatprep.subr.mxu0 %v2139
    %2499 = vmatpush1.msra.mxu0 %v2138
    %2500 = vmatprep.subr.mxu0 %v2135
    %2501 = vmatpush1.msra.mxu0 %v2134
    %2502 = vmatprep.subr.mxu0 %v2131
    %2503 = vmatpush1.msra.mxu0 %v2130
    %2504 = vmatprep.subr.mxu0 %v2127
    %2505 = vmatpush1.msra.mxu0 %v2126
    %2506 = vmatprep.subr.mxu0 %v2123
    %2507 = vmatpush1.msra.mxu0 %v2122
    %2508 = vmatprep.subr.mxu0 %v2119
    %2509 = vmatpush1.msra.mxu0 %v2118
    %2510 = vmatprep.subr.mxu0 %v2115
    %2511 = vmatpush1.msra.mxu0 %v2114
    %2512 = vmatprep.subr.mxu0 %v2239
    %2513 = vmatpush2.msra.mxu0 %v2238
    %2514 = vmatprep.subr.mxu0 %v2235
    %2515 = vmatpush2.msra.mxu0 %v2234
    %2516 = vmatprep.subr.mxu0 %v2231
    %2517 = vmatpush2.msra.mxu0 %v2230
    %2518 = vmatprep.subr.mxu0 %v2227
    %2519 = vmatpush2.msra.mxu0 %v2226
    %2520 = vmatprep.subr.mxu0 %v2223
    %2521 = vmatpush2.msra.mxu0 %v2222
    %2522 = vmatprep.subr.mxu0 %v2219
    %2523 = vmatpush2.msra.mxu0 %v2218
    %2524 = vmatprep.subr.mxu0 %v2215
    %2525 = vmatpush2.msra.mxu0 %v2214
    %2526 = vmatprep.subr.mxu0 %v2211
    %2527 = vmatpush2.msra.mxu0 %v2210
    %2528 = vmatprep.subr.mxu0 %v2207
    %2529 = vmatpush2.msra.mxu0 %v2206
    %2530 = vmatprep.subr.mxu0 %v2203
    %2531 = vmatpush2.msra.mxu0 %v2202
    %2532 = vmatprep.subr.mxu0 %v2199
    %2533 = vmatpush2.msra.mxu0 %v2198
    %2534 = vmatprep.subr.mxu0 %v2195
    %2535 = vmatpush2.msra.mxu0 %v2194
    %2536 = vmatprep.subr.mxu0 %v2191
    %2537 = vmatpush2.msra.mxu0 %v2190
    %2538 = vmatprep.subr.mxu0 %v2187
    %2539 = vmatpush2.msra.mxu0 %v2186
    %2540 = vmatprep.subr.mxu0 %v2183
    %2541 = vmatpush2.msra.mxu0 %v2182
    %2542 = vmatprep.subr.mxu0 %v2179
    %2543 = vmatpush2.msra.mxu0 %v2178
    %2544 = vmatprep.mubr.f32.mxu0 %v2103
    %2545 = vmatmul.mubr.f32.gmra.mxu0 %v2101
    %v2546 = vpop.f32.mrf.mxu0
    %v2547 = vadd.f32 %v2317, %v2546
    %v2548 = vpop.f32.mrf.mxu0
    %v2549 = vadd.f32 %v2321, %v2548
    %2550 = vmatprep.mubr.f32.mxu0 %v2109
    %2551 = vmatmul.mubr.f32.gmra.mxu0 %v2107
    %v2552 = vpop.f32.mrf.mxu0
    %v2553 = vadd.f32 %v2317, %v2552
    %v2554 = vpop.f32.mrf.mxu0
    %v2555 = vadd.f32 %v2321, %v2554
    %2556 = vdwg.mxu0
    %2557 = vmatprep.subr.mxu0 %v2303
    %2558 = vmatpush1.msra.mxu0 %v2302
    %2559 = vmatprep.subr.mxu0 %v2299
    %2560 = vmatpush1.msra.mxu0 %v2298
    %2561 = vmatprep.subr.mxu0 %v2295
    %2562 = vmatpush1.msra.mxu0 %v2294
    %2563 = vmatprep.subr.mxu0 %v2291
    %2564 = vmatpush1.msra.mxu0 %v2290
    %2565 = vmatprep.subr.mxu0 %v2287
    %2566 = vmatpush1.msra.mxu0 %v2286
    %2567 = vmatprep.subr.mxu0 %v2283
    %2568 = vmatpush1.msra.mxu0 %v2282
    %2569 = vmatprep.subr.mxu0 %v2279
    %2570 = vmatpush1.msra.mxu0 %v2278
    %2571 = vmatprep.subr.mxu0 %v2275
    %2572 = vmatpush1.msra.mxu0 %v2274
    %2573 = vmatprep.subr.mxu0 %v2271
    %2574 = vmatpush1.msra.mxu0 %v2270
    %2575 = vmatprep.subr.mxu0 %v2267
    %2576 = vmatpush1.msra.mxu0 %v2266
    %2577 = vmatprep.subr.mxu0 %v2263
    %2578 = vmatpush1.msra.mxu0 %v2262
    %2579 = vmatprep.subr.mxu0 %v2259
    %2580 = vmatpush1.msra.mxu0 %v2258
    %2581 = vmatprep.subr.mxu0 %v2255
    %2582 = vmatpush1.msra.mxu0 %v2254
    %2583 = vmatprep.subr.mxu0 %v2251
    %2584 = vmatpush1.msra.mxu0 %v2250
    %2585 = vmatprep.subr.mxu0 %v2247
    %2586 = vmatpush1.msra.mxu0 %v2246
    %2587 = vmatprep.subr.mxu0 %v2243
    %2588 = vmatpush1.msra.mxu0 %v2242
    %2589 = vmatprep.subr.mxu0 0.0
    %2590 = vmatpush2.msra.mxu0 0.0
    %2591 = vmatprep.subr.mxu0 0.0
    %2592 = vmatpush2.msra.mxu0 0.0
    %2593 = vmatprep.subr.mxu0 0.0
    %2594 = vmatpush2.msra.mxu0 0.0
    %2595 = vmatprep.subr.mxu0 0.0
    %2596 = vmatpush2.msra.mxu0 0.0
    %2597 = vmatprep.subr.mxu0 0.0
    %2598 = vmatpush2.msra.mxu0 0.0
    %2599 = vmatprep.subr.mxu0 0.0
    %2600 = vmatpush2.msra.mxu0 0.0
    %2601 = vmatprep.subr.mxu0 0.0
    %2602 = vmatpush2.msra.mxu0 0.0
    %2603 = vmatprep.subr.mxu0 0.0
    %2604 = vmatpush2.msra.mxu0 0.0
    %2605 = vmatprep.subr.mxu0 0.0
    %2606 = vmatpush2.msra.mxu0 0.0
    %2607 = vmatprep.subr.mxu0 0.0
    %2608 = vmatpush2.msra.mxu0 0.0
    %2609 = vmatprep.subr.mxu0 0.0
    %2610 = vmatpush2.msra.mxu0 0.0
    %2611 = vmatprep.subr.mxu0 0.0
    %2612 = vmatpush2.msra.mxu0 0.0
    %2613 = vmatprep.subr.mxu0 0.0
    %2614 = vmatpush2.msra.mxu0 0.0
    %2615 = vmatprep.subr.mxu0 0.0
    %2616 = vmatpush2.msra.mxu0 0.0
    %2617 = vmatprep.subr.mxu0 0.0
    %2618 = vmatpush2.msra.mxu0 0.0
    %2619 = vmatprep.subr.mxu0 0.0
    %2620 = vmatpush2.msra.mxu0 0.0
    %2621 = vmatprep.mubr.f32.mxu0 0.0
    %2622 = vmatmul.mubr.f32.gmra.mxu0 %v2105
    %v2623 = vpop.f32.mrf.mxu0
    %v2624 = vadd.f32 %v2547, %v2623
    %v2625 = vpop.f32.mrf.mxu0
    %v2626 = vadd.f32 %v2549, %v2625
    %2627 = vmatprep.mubr.f32.mxu0 0.0
    %2628 = vmatmul.mubr.f32.gmra.mxu0 %v2111
    %v2629 = vpop.f32.mrf.mxu0
    %v2630 = vadd.f32 %v2553, %v2629
    %v2631 = vpop.f32.mrf.mxu0
    %v2632 = vadd.f32 %v2555, %v2631
    %2633 = vdwg.mxu0
    %v2634 = vmax.f32 %v2470, 0.0
    %v2635 = vmax.f32 %v2472, 0.0
    %v2636 = vmax.f32 %v2624, 0.0
    %v2637 = vmax.f32 %v2626, 0.0
    %v2638 = vmax.f32 %v2476, 0.0
    %v2639 = vmax.f32 %v2478, 0.0
    %v2640 = vmax.f32 %v2630, 0.0
    %v2641 = vmax.f32 %v2632, 0.0
    %v2642 = vpack.c.bf16 %v2638, %v2634
    %v2643 = vpack.c.bf16 %v2639, %v2635
    %v2644 = vpack.c.bf16 %v2640, %v2636
    %v2645 = vpack.c.bf16 %v2641, %v2637
    %v2646 = vld [vmem:[#allocation7] sm:$0xff]
    %v2647 = vld [vmem:[#allocation7 + $0x8] sm:$0xff]
    %v2648 = vld [vmem:[#allocation7 + $0x10] sm:$0xff]
    %v2649 = vld [vmem:[#allocation7 + $0x18] sm:$0xff]
    %v2650 = vld [vmem:[#allocation7 + $0x20] sm:$0xff]
    %v2651 = vld [vmem:[#allocation7 + $0x28] sm:$0xff]
    %v2652 = vld [vmem:[#allocation7 + $0x30] sm:$0xff]
    %v2653 = vld [vmem:[#allocation7 + $0x38] sm:$0xff]
    %v2654 = vld [vmem:[#allocation7 + $0x40] sm:$0xff]
    %v2655 = vld [vmem:[#allocation7 + $0x48] sm:$0xff]
    %v2656 = vld [vmem:[#allocation7 + $0x50] sm:$0xff]
    %v2657 = vld [vmem:[#allocation7 + $0x58] sm:$0xff]
    %v2658 = vld [vmem:[#allocation7 + $0x60] sm:$0xff]
    %v2659 = vld [vmem:[#allocation7 + $0x68] sm:$0xff]
    %v2660 = vld [vmem:[#allocation7 + $0x70] sm:$0xff]
    %v2661 = vld [vmem:[#allocation7 + $0x78] sm:$0xff]
    %v2662 = vld [vmem:[#allocation7 + $0x80] sm:$0xff]
    %v2663 = vld [vmem:[#allocation7 + $0x88] sm:$0xff]
    %v2664 = vld [vmem:[#allocation7 + $0x90] sm:$0xff]
    %v2665 = vld [vmem:[#allocation7 + $0x98] sm:$0xff]
    %v2666 = vld [vmem:[#allocation7 + $0xa0] sm:$0xff]
    %v2667 = vld [vmem:[#allocation7 + $0xa8] sm:$0xff]
    %v2668 = vld [vmem:[#allocation7 + $0xb0] sm:$0xff]
    %v2669 = vld [vmem:[#allocation7 + $0xb8] sm:$0xff]
    %v2670 = vld [vmem:[#allocation7 + $0xc0] sm:$0xff]
    %v2671 = vld [vmem:[#allocation7 + $0xc8] sm:$0xff]
    %v2672 = vld [vmem:[#allocation7 + $0xd0] sm:$0xff]
    %v2673 = vld [vmem:[#allocation7 + $0xd8] sm:$0xff]
    %v2674 = vld [vmem:[#allocation7 + $0xe0] sm:$0xff]
    %v2675 = vld [vmem:[#allocation7 + $0xe8] sm:$0xff]
    %v2676 = vld [vmem:[#allocation7 + $0xf0] sm:$0xff]
    %v2677 = vld [vmem:[#allocation7 + $0xf8] sm:$0xff]
    %v2678 = vld [vmem:[#allocation7 + $0x100] sm:$0xff]
    %v2679 = vld [vmem:[#allocation7 + $0x108] sm:$0xff]
    %v2680 = vld [vmem:[#allocation7 + $0x110] sm:$0xff]
    %v2681 = vld [vmem:[#allocation7 + $0x118] sm:$0xff]
    %v2682 = vld [vmem:[#allocation7 + $0x120] sm:$0xff]
    %v2683 = vld [vmem:[#allocation7 + $0x128] sm:$0xff]
    %v2684 = vld [vmem:[#allocation7 + $0x130] sm:$0xff]
    %v2685 = vld [vmem:[#allocation7 + $0x138] sm:$0xff]
    %v2686 = vld [vmem:[#allocation7 + $0x140] sm:$0xff]
    %v2687 = vld [vmem:[#allocation7 + $0x148] sm:$0xff]
    %v2688 = vld [vmem:[#allocation7 + $0x150] sm:$0xff]
    %v2689 = vld [vmem:[#allocation7 + $0x158] sm:$0xff]
    %v2690 = vld [vmem:[#allocation7 + $0x160] sm:$0xff]
    %v2691 = vld [vmem:[#allocation7 + $0x168] sm:$0xff]
    %v2692 = vld [vmem:[#allocation7 + $0x170] sm:$0xff]
    %v2693 = vld [vmem:[#allocation7 + $0x178] sm:$0xff]
    %v2694 = vld [vmem:[#allocation7 + $0x180] sm:$0xff]
    %v2695 = vld [vmem:[#allocation7 + $0x188] sm:$0xff]
    %v2696 = vld [vmem:[#allocation7 + $0x190] sm:$0xff]
    %v2697 = vld [vmem:[#allocation7 + $0x198] sm:$0xff]
    %v2698 = vld [vmem:[#allocation7 + $0x1a0] sm:$0xff]
    %v2699 = vld [vmem:[#allocation7 + $0x1a8] sm:$0xff]
    %v2700 = vld [vmem:[#allocation7 + $0x1b0] sm:$0xff]
    %v2701 = vld [vmem:[#allocation7 + $0x1b8] sm:$0xff]
    %v2702 = vld [vmem:[#allocation7 + $0x1c0] sm:$0xff]
    %v2703 = vld [vmem:[#allocation7 + $0x1c8] sm:$0xff]
    %v2704 = vld [vmem:[#allocation7 + $0x1d0] sm:$0xff]
    %v2705 = vld [vmem:[#allocation7 + $0x1d8] sm:$0xff]
    %v2706 = vld [vmem:[#allocation7 + $0x1e0] sm:$0xff]
    %v2707 = vld [vmem:[#allocation7 + $0x1e8] sm:$0xff]
    %v2708 = vld [vmem:[#allocation7 + $0x1f0] sm:$0xff]
    %v2709 = vld [vmem:[#allocation7 + $0x1f8] sm:$0xff]
    %v2710 = vld [vmem:[#allocation7 + $0x200] sm:$0xff]
    %v2711 = vld [vmem:[#allocation7 + $0x208] sm:$0xff]
    %v2712 = vld [vmem:[#allocation7 + $0x210] sm:$0xff]
    %v2713 = vld [vmem:[#allocation7 + $0x218] sm:$0xff]
    %v2714 = vld [vmem:[#allocation7 + $0x220] sm:$0xff]
    %v2715 = vld [vmem:[#allocation7 + $0x228] sm:$0xff]
    %v2716 = vld [vmem:[#allocation7 + $0x230] sm:$0xff]
    %v2717 = vld [vmem:[#allocation7 + $0x238] sm:$0xff]
    %v2718 = vld [vmem:[#allocation7 + $0x240] sm:$0xff]
    %v2719 = vld [vmem:[#allocation7 + $0x248] sm:$0xff]
    %v2720 = vld [vmem:[#allocation7 + $0x250] sm:$0xff]
    %v2721 = vld [vmem:[#allocation7 + $0x258] sm:$0xff]
    %v2722 = vld [vmem:[#allocation7 + $0x260] sm:$0xff]
    %v2723 = vld [vmem:[#allocation7 + $0x268] sm:$0xff]
    %v2724 = vld [vmem:[#allocation7 + $0x270] sm:$0xff]
    %v2725 = vld [vmem:[#allocation7 + $0x278] sm:$0xff]
    %v2726 = vld [vmem:[#allocation7 + $0x280] sm:$0xff]
    %v2727 = vld [vmem:[#allocation7 + $0x288] sm:$0xff]
    %v2728 = vld [vmem:[#allocation7 + $0x290] sm:$0xff]
    %v2729 = vld [vmem:[#allocation7 + $0x298] sm:$0xff]
    %v2730 = vld [vmem:[#allocation7 + $0x2a0] sm:$0xff]
    %v2731 = vld [vmem:[#allocation7 + $0x2a8] sm:$0xff]
    %v2732 = vld [vmem:[#allocation7 + $0x2b0] sm:$0xff]
    %v2733 = vld [vmem:[#allocation7 + $0x2b8] sm:$0xff]
    %v2734 = vld [vmem:[#allocation7 + $0x2c0] sm:$0xff]
    %v2735 = vld [vmem:[#allocation7 + $0x2c8] sm:$0xff]
    %v2736 = vld [vmem:[#allocation7 + $0x2d0] sm:$0xff]
    %v2737 = vld [vmem:[#allocation7 + $0x2d8] sm:$0xff]
    %v2738 = vld [vmem:[#allocation7 + $0x2e0] sm:$0xff]
    %v2739 = vld [vmem:[#allocation7 + $0x2e8] sm:$0xff]
    %v2740 = vld [vmem:[#allocation7 + $0x2f0] sm:$0xff]
    %v2741 = vld [vmem:[#allocation7 + $0x2f8] sm:$0xff]
    %v2742 = vld [vmem:[#allocation7 + $0x300] sm:$0xff]
    %v2743 = vld [vmem:[#allocation7 + $0x308] sm:$0xff]
    %v2744 = vld [vmem:[#allocation7 + $0x310] sm:$0xff]
    %v2745 = vld [vmem:[#allocation7 + $0x318] sm:$0xff]
    %v2746 = vld [vmem:[#allocation7 + $0x320] sm:$0xff]
    %v2747 = vld [vmem:[#allocation7 + $0x328] sm:$0xff]
    %v2748 = vld [vmem:[#allocation7 + $0x330] sm:$0xff]
    %v2749 = vld [vmem:[#allocation7 + $0x338] sm:$0xff]
    %v2750 = vld [vmem:[#allocation7 + $0x340] sm:$0xff]
    %v2751 = vld [vmem:[#allocation7 + $0x348] sm:$0xff]
    %v2752 = vld [vmem:[#allocation7 + $0x350] sm:$0xff]
    %v2753 = vld [vmem:[#allocation7 + $0x358] sm:$0xff]
    %v2754 = vld [vmem:[#allocation7 + $0x360] sm:$0xff]
    %v2755 = vld [vmem:[#allocation7 + $0x368] sm:$0xff]
    %v2756 = vld [vmem:[#allocation7 + $0x370] sm:$0xff]
    %v2757 = vld [vmem:[#allocation7 + $0x378] sm:$0xff]
    %v2758 = vld [vmem:[#allocation7 + $0x380] sm:$0xff]
    %v2759 = vld [vmem:[#allocation7 + $0x388] sm:$0xff]
    %v2760 = vld [vmem:[#allocation7 + $0x390] sm:$0xff]
    %v2761 = vld [vmem:[#allocation7 + $0x398] sm:$0xff]
    %v2762 = vld [vmem:[#allocation7 + $0x3a0] sm:$0xff]
    %v2763 = vld [vmem:[#allocation7 + $0x3a8] sm:$0xff]
    %v2764 = vld [vmem:[#allocation7 + $0x3b0] sm:$0xff]
    %v2765 = vld [vmem:[#allocation7 + $0x3b8] sm:$0xff]
    %v2766 = vld [vmem:[#allocation7 + $0x3c0] sm:$0xff]
    %v2767 = vld [vmem:[#allocation7 + $0x3c8] sm:$0xff]
    %v2768 = vld [vmem:[#allocation7 + $0x3d0] sm:$0xff]
    %v2769 = vld [vmem:[#allocation7 + $0x3d8] sm:$0xff]
    %v2770 = vld [vmem:[#allocation7 + $0x3e0] sm:$0xff]
    %v2771 = vld [vmem:[#allocation7 + $0x3e8] sm:$0xff]
    %v2772 = vld [vmem:[#allocation7 + $0x3f0] sm:$0xff]
    %v2773 = vld [vmem:[#allocation7 + $0x3f8] sm:$0xff]
    %v2774 = vld [vmem:[#allocation7 + $0x400] sm:$0xff]
    %v2775 = vld [vmem:[#allocation7 + $0x408] sm:$0xff]
    %v2776 = vld [vmem:[#allocation7 + $0x410] sm:$0xff]
    %v2777 = vld [vmem:[#allocation7 + $0x418] sm:$0xff]
    %v2778 = vld [vmem:[#allocation7 + $0x420] sm:$0xff]
    %v2779 = vld [vmem:[#allocation7 + $0x428] sm:$0xff]
    %v2780 = vld [vmem:[#allocation7 + $0x430] sm:$0xff]
    %v2781 = vld [vmem:[#allocation7 + $0x438] sm:$0xff]
    %v2782 = vld [vmem:[#allocation7 + $0x440] sm:$0xff]
    %v2783 = vld [vmem:[#allocation7 + $0x448] sm:$0xff]
    %v2784 = vld [vmem:[#allocation7 + $0x450] sm:$0xff]
    %v2785 = vld [vmem:[#allocation7 + $0x458] sm:$0xff]
    %v2786 = vld [vmem:[#allocation7 + $0x460] sm:$0xff]
    %v2787 = vld [vmem:[#allocation7 + $0x468] sm:$0xff]
    %v2788 = vld [vmem:[#allocation7 + $0x470] sm:$0xff]
    %v2789 = vld [vmem:[#allocation7 + $0x478] sm:$0xff]
    %v2790 = vld [vmem:[#allocation7 + $0x480] sm:$0xff]
    %v2791 = vld [vmem:[#allocation7 + $0x488] sm:$0xff]
    %v2792 = vld [vmem:[#allocation7 + $0x490] sm:$0xff]
    %v2793 = vld [vmem:[#allocation7 + $0x498] sm:$0xff]
    %v2794 = vld [vmem:[#allocation7 + $0x4a0] sm:$0xff]
    %v2795 = vld [vmem:[#allocation7 + $0x4a8] sm:$0xff]
    %v2796 = vld [vmem:[#allocation7 + $0x4b0] sm:$0xff]
    %v2797 = vld [vmem:[#allocation7 + $0x4b8] sm:$0xff]
    %v2798 = vld [vmem:[#allocation7 + $0x4c0] sm:$0xff]
    %v2799 = vld [vmem:[#allocation7 + $0x4c8] sm:$0xff]
    %v2800 = vld [vmem:[#allocation7 + $0x4d0] sm:$0xff]
    %v2801 = vld [vmem:[#allocation7 + $0x4d8] sm:$0xff]
    %v2802 = vld [vmem:[#allocation7 + $0x4e0] sm:$0xff]
    %v2803 = vld [vmem:[#allocation7 + $0x4e8] sm:$0xff]
    %v2804 = vld [vmem:[#allocation7 + $0x4f0] sm:$0xff]
    %v2805 = vld [vmem:[#allocation7 + $0x4f8] sm:$0xff]
    %v2806 = vld [vmem:[#allocation7 + $0x500] sm:$0xff]
    %v2807 = vld [vmem:[#allocation7 + $0x508] sm:$0xff]
    %v2808 = vld [vmem:[#allocation7 + $0x510] sm:$0xff]
    %v2809 = vld [vmem:[#allocation7 + $0x518] sm:$0xff]
    %v2810 = vld [vmem:[#allocation7 + $0x520] sm:$0xff]
    %v2811 = vld [vmem:[#allocation7 + $0x528] sm:$0xff]
    %v2812 = vld [vmem:[#allocation7 + $0x530] sm:$0xff]
    %v2813 = vld [vmem:[#allocation7 + $0x538] sm:$0xff]
    %v2814 = vld [vmem:[#allocation7 + $0x540] sm:$0xff]
    %v2815 = vld [vmem:[#allocation7 + $0x548] sm:$0xff]
    %v2816 = vld [vmem:[#allocation7 + $0x550] sm:$0xff]
    %v2817 = vld [vmem:[#allocation7 + $0x558] sm:$0xff]
    %v2818 = vld [vmem:[#allocation7 + $0x560] sm:$0xff]
    %v2819 = vld [vmem:[#allocation7 + $0x568] sm:$0xff]
    %v2820 = vld [vmem:[#allocation7 + $0x570] sm:$0xff]
    %v2821 = vld [vmem:[#allocation7 + $0x578] sm:$0xff]
    %v2822 = vld [vmem:[#allocation7 + $0x580] sm:$0xff]
    %v2823 = vld [vmem:[#allocation7 + $0x588] sm:$0xff]
    %v2824 = vld [vmem:[#allocation7 + $0x590] sm:$0xff]
    %v2825 = vld [vmem:[#allocation7 + $0x598] sm:$0xff]
    %v2826 = vld [vmem:[#allocation7 + $0x5a0] sm:$0xff]
    %v2827 = vld [vmem:[#allocation7 + $0x5a8] sm:$0xff]
    %v2828 = vld [vmem:[#allocation7 + $0x5b0] sm:$0xff]
    %v2829 = vld [vmem:[#allocation7 + $0x5b8] sm:$0xff]
    %v2830 = vld [vmem:[#allocation7 + $0x5c0] sm:$0xff]
    %v2831 = vld [vmem:[#allocation7 + $0x5c8] sm:$0xff]
    %v2832 = vld [vmem:[#allocation7 + $0x5d0] sm:$0xff]
    %v2833 = vld [vmem:[#allocation7 + $0x5d8] sm:$0xff]
    %v2834 = vld [vmem:[#allocation7 + $0x5e0] sm:$0xff]
    %v2835 = vld [vmem:[#allocation7 + $0x5e8] sm:$0xff]
    %v2836 = vld [vmem:[#allocation7 + $0x5f0] sm:$0xff]
    %v2837 = vld [vmem:[#allocation7 + $0x5f8] sm:$0xff]
    %v2838 = vld [vmem:[%s8] sm:$0x3f]
    %v2840 = vlaneseq
    %v2841 = vshrl.u32 %v2840, 7
    %v2842 = vsub.s32 0, %v2841
    %v2843 = vrot.slane %v2838, %v2842
    %v2844 = vlaneseq
    %v2845 = vshrl.u32 %v2844, 7
    %v2846 = vsub.s32 1, %v2845
    %v2847 = vrot.slane %v2838, %v2846
    %v2848 = vlaneseq
    %v2849 = vshrl.u32 %v2848, 7
    %v2850 = vsub.s32 2, %v2849
    %v2851 = vrot.slane %v2838, %v2850
    %v2852 = vlaneseq
    %v2853 = vshrl.u32 %v2852, 7
    %v2854 = vsub.s32 3, %v2853
    %v2855 = vrot.slane %v2838, %v2854
    %v2856 = vlaneseq
    %v2857 = vshrl.u32 %v2856, 7
    %v2858 = vsub.s32 4, %v2857
    %v2859 = vrot.slane %v2838, %v2858
    %v2860 = vlaneseq
    %v2861 = vshrl.u32 %v2860, 7
    %v2862 = vsub.s32 5, %v2861
    %v2863 = vrot.slane %v2838, %v2862
    %v3062 = vunpack.c.l.b16 %v2646
    %v3063 = vunpack.c.h.b16 %v2646
    %v3064 = vunpack.c.l.b16 %v2647
    %v3065 = vunpack.c.h.b16 %v2647
    %v3066 = vunpack.c.l.b16 %v2648
    %v3067 = vunpack.c.h.b16 %v2648
    %v3068 = vunpack.c.l.b16 %v2649
    %v3069 = vunpack.c.h.b16 %v2649
    %v3070 = vunpack.c.l.b16 %v2650
    %v3071 = vunpack.c.h.b16 %v2650
    %v3072 = vunpack.c.l.b16 %v2651
    %v3073 = vunpack.c.h.b16 %v2651
    %v3074 = vunpack.c.l.b16 %v2652
    %v3075 = vunpack.c.h.b16 %v2652
    %v3076 = vunpack.c.l.b16 %v2653
    %v3077 = vunpack.c.h.b16 %v2653
    %v3078 = vunpack.c.l.b16 %v2654
    %v3079 = vunpack.c.h.b16 %v2654
    %v3080 = vunpack.c.l.b16 %v2655
    %v3081 = vunpack.c.h.b16 %v2655
    %v3082 = vunpack.c.l.b16 %v2656
    %v3083 = vunpack.c.h.b16 %v2656
    %v3084 = vunpack.c.l.b16 %v2657
    %v3085 = vunpack.c.h.b16 %v2657
    %v3086 = vunpack.c.l.b16 %v2658
    %v3087 = vunpack.c.h.b16 %v2658
    %v3088 = vunpack.c.l.b16 %v2659
    %v3089 = vunpack.c.h.b16 %v2659
    %v3090 = vunpack.c.l.b16 %v2660
    %v3091 = vunpack.c.h.b16 %v2660
    %v3092 = vunpack.c.l.b16 %v2661
    %v3093 = vunpack.c.h.b16 %v2661
    %v3094 = vunpack.c.l.b16 %v2662
    %v3095 = vunpack.c.h.b16 %v2662
    %v3096 = vunpack.c.l.b16 %v2663
    %v3097 = vunpack.c.h.b16 %v2663
    %v3098 = vunpack.c.l.b16 %v2664
    %v3099 = vunpack.c.h.b16 %v2664
    %v3100 = vunpack.c.l.b16 %v2665
    %v3101 = vunpack.c.h.b16 %v2665
    %v3102 = vunpack.c.l.b16 %v2666
    %v3103 = vunpack.c.h.b16 %v2666
    %v3104 = vunpack.c.l.b16 %v2667
    %v3105 = vunpack.c.h.b16 %v2667
    %v3106 = vunpack.c.l.b16 %v2668
    %v3107 = vunpack.c.h.b16 %v2668
    %v3108 = vunpack.c.l.b16 %v2669
    %v3109 = vunpack.c.h.b16 %v2669
    %v3110 = vunpack.c.l.b16 %v2670
    %v3111 = vunpack.c.h.b16 %v2670
    %v3112 = vunpack.c.l.b16 %v2671
    %v3113 = vunpack.c.h.b16 %v2671
    %v3114 = vunpack.c.l.b16 %v2672
    %v3115 = vunpack.c.h.b16 %v2672
    %v3116 = vunpack.c.l.b16 %v2673
    %v3117 = vunpack.c.h.b16 %v2673
    %v3118 = vunpack.c.l.b16 %v2674
    %v3119 = vunpack.c.h.b16 %v2674
    %v3120 = vunpack.c.l.b16 %v2675
    %v3121 = vunpack.c.h.b16 %v2675
    %v3122 = vunpack.c.l.b16 %v2676
    %v3123 = vunpack.c.h.b16 %v2676
    %v3124 = vunpack.c.l.b16 %v2677
    %v3125 = vunpack.c.h.b16 %v2677
    %v3126 = vunpack.c.l.b16 %v2678
    %v3127 = vunpack.c.h.b16 %v2678
    %v3128 = vunpack.c.l.b16 %v2679
    %v3129 = vunpack.c.h.b16 %v2679
    %v3130 = vunpack.c.l.b16 %v2680
    %v3131 = vunpack.c.h.b16 %v2680
    %v3132 = vunpack.c.l.b16 %v2681
    %v3133 = vunpack.c.h.b16 %v2681
    %v3134 = vunpack.c.l.b16 %v2682
    %v3135 = vunpack.c.h.b16 %v2682
    %v3136 = vunpack.c.l.b16 %v2683
    %v3137 = vunpack.c.h.b16 %v2683
    %v3138 = vunpack.c.l.b16 %v2684
    %v3139 = vunpack.c.h.b16 %v2684
    %v3140 = vunpack.c.l.b16 %v2685
    %v3141 = vunpack.c.h.b16 %v2685
    %v3142 = vunpack.c.l.b16 %v2686
    %v3143 = vunpack.c.h.b16 %v2686
    %v3144 = vunpack.c.l.b16 %v2687
    %v3145 = vunpack.c.h.b16 %v2687
    %v3146 = vunpack.c.l.b16 %v2688
    %v3147 = vunpack.c.h.b16 %v2688
    %v3148 = vunpack.c.l.b16 %v2689
    %v3149 = vunpack.c.h.b16 %v2689
    %v3150 = vunpack.c.l.b16 %v2690
    %v3151 = vunpack.c.h.b16 %v2690
    %v3152 = vunpack.c.l.b16 %v2691
    %v3153 = vunpack.c.h.b16 %v2691
    %v3154 = vunpack.c.l.b16 %v2692
    %v3155 = vunpack.c.h.b16 %v2692
    %v3156 = vunpack.c.l.b16 %v2693
    %v3157 = vunpack.c.h.b16 %v2693
    %v3158 = vunpack.c.l.b16 %v2694
    %v3159 = vunpack.c.h.b16 %v2694
    %v3160 = vunpack.c.l.b16 %v2695
    %v3161 = vunpack.c.h.b16 %v2695
    %v3162 = vunpack.c.l.b16 %v2696
    %v3163 = vunpack.c.h.b16 %v2696
    %v3164 = vunpack.c.l.b16 %v2697
    %v3165 = vunpack.c.h.b16 %v2697
    %v3166 = vunpack.c.l.b16 %v2698
    %v3167 = vunpack.c.h.b16 %v2698
    %v3168 = vunpack.c.l.b16 %v2699
    %v3169 = vunpack.c.h.b16 %v2699
    %v3170 = vunpack.c.l.b16 %v2700
    %v3171 = vunpack.c.h.b16 %v2700
    %v3172 = vunpack.c.l.b16 %v2701
    %v3173 = vunpack.c.h.b16 %v2701
    %v3174 = vunpack.c.l.b16 %v2702
    %v3175 = vunpack.c.h.b16 %v2702
    %v3176 = vunpack.c.l.b16 %v2703
    %v3177 = vunpack.c.h.b16 %v2703
    %v3178 = vunpack.c.l.b16 %v2704
    %v3179 = vunpack.c.h.b16 %v2704
    %v3180 = vunpack.c.l.b16 %v2705
    %v3181 = vunpack.c.h.b16 %v2705
    %v3182 = vunpack.c.l.b16 %v2706
    %v3183 = vunpack.c.h.b16 %v2706
    %v3184 = vunpack.c.l.b16 %v2707
    %v3185 = vunpack.c.h.b16 %v2707
    %v3186 = vunpack.c.l.b16 %v2708
    %v3187 = vunpack.c.h.b16 %v2708
    %v3188 = vunpack.c.l.b16 %v2709
    %v3189 = vunpack.c.h.b16 %v2709
    %v3190 = vunpack.c.l.b16 %v2710
    %v3191 = vunpack.c.h.b16 %v2710
    %v3192 = vunpack.c.l.b16 %v2711
    %v3193 = vunpack.c.h.b16 %v2711
    %v3194 = vunpack.c.l.b16 %v2712
    %v3195 = vunpack.c.h.b16 %v2712
    %v3196 = vunpack.c.l.b16 %v2713
    %v3197 = vunpack.c.h.b16 %v2713
    %v3198 = vunpack.c.l.b16 %v2714
    %v3199 = vunpack.c.h.b16 %v2714
    %v3200 = vunpack.c.l.b16 %v2715
    %v3201 = vunpack.c.h.b16 %v2715
    %v3202 = vunpack.c.l.b16 %v2716
    %v3203 = vunpack.c.h.b16 %v2716
    %v3204 = vunpack.c.l.b16 %v2717
    %v3205 = vunpack.c.h.b16 %v2717
    %v3206 = vunpack.c.l.b16 %v2718
    %v3207 = vunpack.c.h.b16 %v2718
    %v3208 = vunpack.c.l.b16 %v2719
    %v3209 = vunpack.c.h.b16 %v2719
    %v3210 = vunpack.c.l.b16 %v2720
    %v3211 = vunpack.c.h.b16 %v2720
    %v3212 = vunpack.c.l.b16 %v2721
    %v3213 = vunpack.c.h.b16 %v2721
    %v3214 = vunpack.c.l.b16 %v2722
    %v3215 = vunpack.c.h.b16 %v2722
    %v3216 = vunpack.c.l.b16 %v2723
    %v3217 = vunpack.c.h.b16 %v2723
    %v3218 = vunpack.c.l.b16 %v2724
    %v3219 = vunpack.c.h.b16 %v2724
    %v3220 = vunpack.c.l.b16 %v2725
    %v3221 = vunpack.c.h.b16 %v2725
    %v3222 = vunpack.c.l.b16 %v2726
    %v3223 = vunpack.c.h.b16 %v2726
    %v3224 = vunpack.c.l.b16 %v2727
    %v3225 = vunpack.c.h.b16 %v2727
    %v3226 = vunpack.c.l.b16 %v2728
    %v3227 = vunpack.c.h.b16 %v2728
    %v3228 = vunpack.c.l.b16 %v2729
    %v3229 = vunpack.c.h.b16 %v2729
    %v3230 = vunpack.c.l.b16 %v2730
    %v3231 = vunpack.c.h.b16 %v2730
    %v3232 = vunpack.c.l.b16 %v2731
    %v3233 = vunpack.c.h.b16 %v2731
    %v3234 = vunpack.c.l.b16 %v2732
    %v3235 = vunpack.c.h.b16 %v2732
    %v3236 = vunpack.c.l.b16 %v2733
    %v3237 = vunpack.c.h.b16 %v2733
    %v3238 = vunpack.c.l.b16 %v2734
    %v3239 = vunpack.c.h.b16 %v2734
    %v3240 = vunpack.c.l.b16 %v2735
    %v3241 = vunpack.c.h.b16 %v2735
    %v3242 = vunpack.c.l.b16 %v2736
    %v3243 = vunpack.c.h.b16 %v2736
    %v3244 = vunpack.c.l.b16 %v2737
    %v3245 = vunpack.c.h.b16 %v2737
    %v3246 = vunpack.c.l.b16 %v2738
    %v3247 = vunpack.c.h.b16 %v2738
    %v3248 = vunpack.c.l.b16 %v2739
    %v3249 = vunpack.c.h.b16 %v2739
    %v3250 = vunpack.c.l.b16 %v2740
    %v3251 = vunpack.c.h.b16 %v2740
    %v3252 = vunpack.c.l.b16 %v2741
    %v3253 = vunpack.c.h.b16 %v2741
    %v3254 = vunpack.c.l.b16 %v2742
    %v3255 = vunpack.c.h.b16 %v2742
    %v3256 = vunpack.c.l.b16 %v2743
    %v3257 = vunpack.c.h.b16 %v2743
    %v3258 = vunpack.c.l.b16 %v2744
    %v3259 = vunpack.c.h.b16 %v2744
    %v3260 = vunpack.c.l.b16 %v2745
    %v3261 = vunpack.c.h.b16 %v2745
    %v3262 = vunpack.c.l.b16 %v2746
    %v3263 = vunpack.c.h.b16 %v2746
    %v3264 = vunpack.c.l.b16 %v2747
    %v3265 = vunpack.c.h.b16 %v2747
    %v3266 = vunpack.c.l.b16 %v2748
    %v3267 = vunpack.c.h.b16 %v2748
    %v3268 = vunpack.c.l.b16 %v2749
    %v3269 = vunpack.c.h.b16 %v2749
    %v3270 = vunpack.c.l.b16 %v2750
    %v3271 = vunpack.c.h.b16 %v2750
    %v3272 = vunpack.c.l.b16 %v2751
    %v3273 = vunpack.c.h.b16 %v2751
    %v3274 = vunpack.c.l.b16 %v2752
    %v3275 = vunpack.c.h.b16 %v2752
    %v3276 = vunpack.c.l.b16 %v2753
    %v3277 = vunpack.c.h.b16 %v2753
    %v3278 = vunpack.c.l.b16 %v2754
    %v3279 = vunpack.c.h.b16 %v2754
    %v3280 = vunpack.c.l.b16 %v2755
    %v3281 = vunpack.c.h.b16 %v2755
    %v3282 = vunpack.c.l.b16 %v2756
    %v3283 = vunpack.c.h.b16 %v2756
    %v3284 = vunpack.c.l.b16 %v2757
    %v3285 = vunpack.c.h.b16 %v2757
    %v3286 = vunpack.c.l.b16 %v2758
    %v3287 = vunpack.c.h.b16 %v2758
    %v3288 = vunpack.c.l.b16 %v2759
    %v3289 = vunpack.c.h.b16 %v2759
    %v3290 = vunpack.c.l.b16 %v2760
    %v3291 = vunpack.c.h.b16 %v2760
    %v3292 = vunpack.c.l.b16 %v2761
    %v3293 = vunpack.c.h.b16 %v2761
    %v3294 = vunpack.c.l.b16 %v2762
    %v3295 = vunpack.c.h.b16 %v2762
    %v3296 = vunpack.c.l.b16 %v2763
    %v3297 = vunpack.c.h.b16 %v2763
    %v3298 = vunpack.c.l.b16 %v2764
    %v3299 = vunpack.c.h.b16 %v2764
    %v3300 = vunpack.c.l.b16 %v2765
    %v3301 = vunpack.c.h.b16 %v2765
    %v3302 = vunpack.c.l.b16 %v2766
    %v3303 = vunpack.c.h.b16 %v2766
    %v3304 = vunpack.c.l.b16 %v2767
    %v3305 = vunpack.c.h.b16 %v2767
    %v3306 = vunpack.c.l.b16 %v2768
    %v3307 = vunpack.c.h.b16 %v2768
    %v3308 = vunpack.c.l.b16 %v2769
    %v3309 = vunpack.c.h.b16 %v2769
    %v3310 = vunpack.c.l.b16 %v2770
    %v3311 = vunpack.c.h.b16 %v2770
    %v3312 = vunpack.c.l.b16 %v2771
    %v3313 = vunpack.c.h.b16 %v2771
    %v3314 = vunpack.c.l.b16 %v2772
    %v3315 = vunpack.c.h.b16 %v2772
    %v3316 = vunpack.c.l.b16 %v2773
    %v3317 = vunpack.c.h.b16 %v2773
    %v3318 = vunpack.c.l.b16 %v2774
    %v3319 = vunpack.c.h.b16 %v2774
    %v3320 = vunpack.c.l.b16 %v2775
    %v3321 = vunpack.c.h.b16 %v2775
    %v3322 = vunpack.c.l.b16 %v2776
    %v3323 = vunpack.c.h.b16 %v2776
    %v3324 = vunpack.c.l.b16 %v2777
    %v3325 = vunpack.c.h.b16 %v2777
    %v3326 = vunpack.c.l.b16 %v2778
    %v3327 = vunpack.c.h.b16 %v2778
    %v3328 = vunpack.c.l.b16 %v2779
    %v3329 = vunpack.c.h.b16 %v2779
    %v3330 = vunpack.c.l.b16 %v2780
    %v3331 = vunpack.c.h.b16 %v2780
    %v3332 = vunpack.c.l.b16 %v2781
    %v3333 = vunpack.c.h.b16 %v2781
    %v3334 = vunpack.c.l.b16 %v2782
    %v3335 = vunpack.c.h.b16 %v2782
    %v3336 = vunpack.c.l.b16 %v2783
    %v3337 = vunpack.c.h.b16 %v2783
    %v3338 = vunpack.c.l.b16 %v2784
    %v3339 = vunpack.c.h.b16 %v2784
    %v3340 = vunpack.c.l.b16 %v2785
    %v3341 = vunpack.c.h.b16 %v2785
    %v3342 = vunpack.c.l.b16 %v2786
    %v3343 = vunpack.c.h.b16 %v2786
    %v3344 = vunpack.c.l.b16 %v2787
    %v3345 = vunpack.c.h.b16 %v2787
    %v3346 = vunpack.c.l.b16 %v2788
    %v3347 = vunpack.c.h.b16 %v2788
    %v3348 = vunpack.c.l.b16 %v2789
    %v3349 = vunpack.c.h.b16 %v2789
    %v3350 = vunpack.c.l.b16 %v2790
    %v3351 = vunpack.c.h.b16 %v2790
    %v3352 = vunpack.c.l.b16 %v2791
    %v3353 = vunpack.c.h.b16 %v2791
    %v3354 = vunpack.c.l.b16 %v2792
    %v3355 = vunpack.c.h.b16 %v2792
    %v3356 = vunpack.c.l.b16 %v2793
    %v3357 = vunpack.c.h.b16 %v2793
    %v3358 = vunpack.c.l.b16 %v2794
    %v3359 = vunpack.c.h.b16 %v2794
    %v3360 = vunpack.c.l.b16 %v2795
    %v3361 = vunpack.c.h.b16 %v2795
    %v3362 = vunpack.c.l.b16 %v2796
    %v3363 = vunpack.c.h.b16 %v2796
    %v3364 = vunpack.c.l.b16 %v2797
    %v3365 = vunpack.c.h.b16 %v2797
    %v3366 = vunpack.c.l.b16 %v2798
    %v3367 = vunpack.c.h.b16 %v2798
    %v3368 = vunpack.c.l.b16 %v2799
    %v3369 = vunpack.c.h.b16 %v2799
    %v3370 = vunpack.c.l.b16 %v2800
    %v3371 = vunpack.c.h.b16 %v2800
    %v3372 = vunpack.c.l.b16 %v2801
    %v3373 = vunpack.c.h.b16 %v2801
    %v3374 = vunpack.c.l.b16 %v2802
    %v3375 = vunpack.c.h.b16 %v2802
    %v3376 = vunpack.c.l.b16 %v2803
    %v3377 = vunpack.c.h.b16 %v2803
    %v3378 = vunpack.c.l.b16 %v2804
    %v3379 = vunpack.c.h.b16 %v2804
    %v3380 = vunpack.c.l.b16 %v2805
    %v3381 = vunpack.c.h.b16 %v2805
    %v3382 = vunpack.c.l.b16 %v2806
    %v3383 = vunpack.c.h.b16 %v2806
    %v3384 = vunpack.c.l.b16 %v2807
    %v3385 = vunpack.c.h.b16 %v2807
    %v3386 = vunpack.c.l.b16 %v2808
    %v3387 = vunpack.c.h.b16 %v2808
    %v3388 = vunpack.c.l.b16 %v2809
    %v3389 = vunpack.c.h.b16 %v2809
    %v3390 = vunpack.c.l.b16 %v2810
    %v3391 = vunpack.c.h.b16 %v2810
    %v3392 = vunpack.c.l.b16 %v2811
    %v3393 = vunpack.c.h.b16 %v2811
    %v3394 = vunpack.c.l.b16 %v2812
    %v3395 = vunpack.c.h.b16 %v2812
    %v3396 = vunpack.c.l.b16 %v2813
    %v3397 = vunpack.c.h.b16 %v2813
    %v3398 = vunpack.c.l.b16 %v2814
    %v3399 = vunpack.c.h.b16 %v2814
    %v3400 = vunpack.c.l.b16 %v2815
    %v3401 = vunpack.c.h.b16 %v2815
    %v3402 = vunpack.c.l.b16 %v2816
    %v3403 = vunpack.c.h.b16 %v2816
    %v3404 = vunpack.c.l.b16 %v2817
    %v3405 = vunpack.c.h.b16 %v2817
    %v3406 = vunpack.c.l.b16 %v2818
    %v3407 = vunpack.c.h.b16 %v2818
    %v3408 = vunpack.c.l.b16 %v2819
    %v3409 = vunpack.c.h.b16 %v2819
    %v3410 = vunpack.c.l.b16 %v2820
    %v3411 = vunpack.c.h.b16 %v2820
    %v3412 = vunpack.c.l.b16 %v2821
    %v3413 = vunpack.c.h.b16 %v2821
    %v3414 = vunpack.c.l.b16 %v2822
    %v3415 = vunpack.c.h.b16 %v2822
    %v3416 = vunpack.c.l.b16 %v2823
    %v3417 = vunpack.c.h.b16 %v2823
    %v3418 = vunpack.c.l.b16 %v2824
    %v3419 = vunpack.c.h.b16 %v2824
    %v3420 = vunpack.c.l.b16 %v2825
    %v3421 = vunpack.c.h.b16 %v2825
    %v3422 = vunpack.c.l.b16 %v2826
    %v3423 = vunpack.c.h.b16 %v2826
    %v3424 = vunpack.c.l.b16 %v2827
    %v3425 = vunpack.c.h.b16 %v2827
    %v3426 = vunpack.c.l.b16 %v2828
    %v3427 = vunpack.c.h.b16 %v2828
    %v3428 = vunpack.c.l.b16 %v2829
    %v3429 = vunpack.c.h.b16 %v2829
    %v3430 = vunpack.c.l.b16 %v2830
    %v3431 = vunpack.c.h.b16 %v2830
    %v3432 = vunpack.c.l.b16 %v2831
    %v3433 = vunpack.c.h.b16 %v2831
    %v3434 = vunpack.c.l.b16 %v2832
    %v3435 = vunpack.c.h.b16 %v2832
    %v3436 = vunpack.c.l.b16 %v2833
    %v3437 = vunpack.c.h.b16 %v2833
    %v3438 = vunpack.c.l.b16 %v2834
    %v3439 = vunpack.c.h.b16 %v2834
    %v3440 = vunpack.c.l.b16 %v2835
    %v3441 = vunpack.c.h.b16 %v2835
    %v3442 = vunpack.c.l.b16 %v2836
    %v3443 = vunpack.c.h.b16 %v2836
    %v3444 = vunpack.c.l.b16 %v2837
    %v3445 = vunpack.c.h.b16 %v2837
    %v3446 = vpack.c.b16 %v3068, %v3062
    %v3447 = vpack.c.b16 %v3069, %v3063
    %v3448 = vpack.c.b16 %v3070, %v3064
    %v3449 = vpack.c.b16 %v3071, %v3065
    %v3450 = vpack.c.b16 %v3072, %v3066
    %v3451 = vpack.c.b16 %v3073, %v3067
    %v3452 = vpack.c.b16 %v3080, %v3074
    %v3453 = vpack.c.b16 %v3081, %v3075
    %v3454 = vpack.c.b16 %v3082, %v3076
    %v3455 = vpack.c.b16 %v3083, %v3077
    %v3456 = vpack.c.b16 %v3084, %v3078
    %v3457 = vpack.c.b16 %v3085, %v3079
    %v3458 = vpack.c.b16 %v3092, %v3086
    %v3459 = vpack.c.b16 %v3093, %v3087
    %v3460 = vpack.c.b16 %v3094, %v3088
    %v3461 = vpack.c.b16 %v3095, %v3089
    %v3462 = vpack.c.b16 %v3096, %v3090
    %v3463 = vpack.c.b16 %v3097, %v3091
    %v3464 = vpack.c.b16 %v3104, %v3098
    %v3465 = vpack.c.b16 %v3105, %v3099
    %v3466 = vpack.c.b16 %v3106, %v3100
    %v3467 = vpack.c.b16 %v3107, %v3101
    %v3468 = vpack.c.b16 %v3108, %v3102
    %v3469 = vpack.c.b16 %v3109, %v3103
    %v3470 = vpack.c.b16 %v3116, %v3110
    %v3471 = vpack.c.b16 %v3117, %v3111
    %v3472 = vpack.c.b16 %v3118, %v3112
    %v3473 = vpack.c.b16 %v3119, %v3113
    %v3474 = vpack.c.b16 %v3120, %v3114
    %v3475 = vpack.c.b16 %v3121, %v3115
    %v3476 = vpack.c.b16 %v3128, %v3122
    %v3477 = vpack.c.b16 %v3129, %v3123
    %v3478 = vpack.c.b16 %v3130, %v3124
    %v3479 = vpack.c.b16 %v3131, %v3125
    %v3480 = vpack.c.b16 %v3132, %v3126
    %v3481 = vpack.c.b16 %v3133, %v3127
    %v3482 = vpack.c.b16 %v3140, %v3134
    %v3483 = vpack.c.b16 %v3141, %v3135
    %v3484 = vpack.c.b16 %v3142, %v3136
    %v3485 = vpack.c.b16 %v3143, %v3137
    %v3486 = vpack.c.b16 %v3144, %v3138
    %v3487 = vpack.c.b16 %v3145, %v3139
    %v3488 = vpack.c.b16 %v3152, %v3146
    %v3489 = vpack.c.b16 %v3153, %v3147
    %v3490 = vpack.c.b16 %v3154, %v3148
    %v3491 = vpack.c.b16 %v3155, %v3149
    %v3492 = vpack.c.b16 %v3156, %v3150
    %v3493 = vpack.c.b16 %v3157, %v3151
    %v3494 = vpack.c.b16 %v3164, %v3158
    %v3495 = vpack.c.b16 %v3165, %v3159
    %v3496 = vpack.c.b16 %v3166, %v3160
    %v3497 = vpack.c.b16 %v3167, %v3161
    %v3498 = vpack.c.b16 %v3168, %v3162
    %v3499 = vpack.c.b16 %v3169, %v3163
    %v3500 = vpack.c.b16 %v3176, %v3170
    %v3501 = vpack.c.b16 %v3177, %v3171
    %v3502 = vpack.c.b16 %v3178, %v3172
    %v3503 = vpack.c.b16 %v3179, %v3173
    %v3504 = vpack.c.b16 %v3180, %v3174
    %v3505 = vpack.c.b16 %v3181, %v3175
    %v3506 = vpack.c.b16 %v3188, %v3182
    %v3507 = vpack.c.b16 %v3189, %v3183
    %v3508 = vpack.c.b16 %v3190, %v3184
    %v3509 = vpack.c.b16 %v3191, %v3185
    %v3510 = vpack.c.b16 %v3192, %v3186
    %v3511 = vpack.c.b16 %v3193, %v3187
    %v3512 = vpack.c.b16 %v3200, %v3194
    %v3513 = vpack.c.b16 %v3201, %v3195
    %v3514 = vpack.c.b16 %v3202, %v3196
    %v3515 = vpack.c.b16 %v3203, %v3197
    %v3516 = vpack.c.b16 %v3204, %v3198
    %v3517 = vpack.c.b16 %v3205, %v3199
    %v3518 = vpack.c.b16 %v3212, %v3206
    %v3519 = vpack.c.b16 %v3213, %v3207
    %v3520 = vpack.c.b16 %v3214, %v3208
    %v3521 = vpack.c.b16 %v3215, %v3209
    %v3522 = vpack.c.b16 %v3216, %v3210
    %v3523 = vpack.c.b16 %v3217, %v3211
    %v3524 = vpack.c.b16 %v3224, %v3218
    %v3525 = vpack.c.b16 %v3225, %v3219
    %v3526 = vpack.c.b16 %v3226, %v3220
    %v3527 = vpack.c.b16 %v3227, %v3221
    %v3528 = vpack.c.b16 %v3228, %v3222
    %v3529 = vpack.c.b16 %v3229, %v3223
    %v3530 = vpack.c.b16 %v3236, %v3230
    %v3531 = vpack.c.b16 %v3237, %v3231
    %v3532 = vpack.c.b16 %v3238, %v3232
    %v3533 = vpack.c.b16 %v3239, %v3233
    %v3534 = vpack.c.b16 %v3240, %v3234
    %v3535 = vpack.c.b16 %v3241, %v3235
    %v3536 = vpack.c.b16 %v3248, %v3242
    %v3537 = vpack.c.b16 %v3249, %v3243
    %v3538 = vpack.c.b16 %v3250, %v3244
    %v3539 = vpack.c.b16 %v3251, %v3245
    %v3540 = vpack.c.b16 %v3252, %v3246
    %v3541 = vpack.c.b16 %v3253, %v3247
    %v3542 = vpack.c.b16 %v3260, %v3254
    %v3543 = vpack.c.b16 %v3261, %v3255
    %v3544 = vpack.c.b16 %v3262, %v3256
    %v3545 = vpack.c.b16 %v3263, %v3257
    %v3546 = vpack.c.b16 %v3264, %v3258
    %v3547 = vpack.c.b16 %v3265, %v3259
    %v3548 = vpack.c.b16 %v3272, %v3266
    %v3549 = vpack.c.b16 %v3273, %v3267
    %v3550 = vpack.c.b16 %v3274, %v3268
    %v3551 = vpack.c.b16 %v3275, %v3269
    %v3552 = vpack.c.b16 %v3276, %v3270
    %v3553 = vpack.c.b16 %v3277, %v3271
    %v3554 = vpack.c.b16 %v3284, %v3278
    %v3555 = vpack.c.b16 %v3285, %v3279
    %v3556 = vpack.c.b16 %v3286, %v3280
    %v3557 = vpack.c.b16 %v3287, %v3281
    %v3558 = vpack.c.b16 %v3288, %v3282
    %v3559 = vpack.c.b16 %v3289, %v3283
    %v3560 = vpack.c.b16 %v3296, %v3290
    %v3561 = vpack.c.b16 %v3297, %v3291
    %v3562 = vpack.c.b16 %v3298, %v3292
    %v3563 = vpack.c.b16 %v3299, %v3293
    %v3564 = vpack.c.b16 %v3300, %v3294
    %v3565 = vpack.c.b16 %v3301, %v3295
    %v3566 = vpack.c.b16 %v3308, %v3302
    %v3567 = vpack.c.b16 %v3309, %v3303
    %v3568 = vpack.c.b16 %v3310, %v3304
    %v3569 = vpack.c.b16 %v3311, %v3305
    %v3570 = vpack.c.b16 %v3312, %v3306
    %v3571 = vpack.c.b16 %v3313, %v3307
    %v3572 = vpack.c.b16 %v3320, %v3314
    %v3573 = vpack.c.b16 %v3321, %v3315
    %v3574 = vpack.c.b16 %v3322, %v3316
    %v3575 = vpack.c.b16 %v3323, %v3317
    %v3576 = vpack.c.b16 %v3324, %v3318
    %v3577 = vpack.c.b16 %v3325, %v3319
    %v3578 = vpack.c.b16 %v3332, %v3326
    %v3579 = vpack.c.b16 %v3333, %v3327
    %v3580 = vpack.c.b16 %v3334, %v3328
    %v3581 = vpack.c.b16 %v3335, %v3329
    %v3582 = vpack.c.b16 %v3336, %v3330
    %v3583 = vpack.c.b16 %v3337, %v3331
    %v3584 = vpack.c.b16 %v3344, %v3338
    %v3585 = vpack.c.b16 %v3345, %v3339
    %v3586 = vpack.c.b16 %v3346, %v3340
    %v3587 = vpack.c.b16 %v3347, %v3341
    %v3588 = vpack.c.b16 %v3348, %v3342
    %v3589 = vpack.c.b16 %v3349, %v3343
    %v3590 = vpack.c.b16 %v3356, %v3350
    %v3591 = vpack.c.b16 %v3357, %v3351
    %v3592 = vpack.c.b16 %v3358, %v3352
    %v3593 = vpack.c.b16 %v3359, %v3353
    %v3594 = vpack.c.b16 %v3360, %v3354
    %v3595 = vpack.c.b16 %v3361, %v3355
    %v3596 = vpack.c.b16 %v3368, %v3362
    %v3597 = vpack.c.b16 %v3369, %v3363
    %v3598 = vpack.c.b16 %v3370, %v3364
    %v3599 = vpack.c.b16 %v3371, %v3365
    %v3600 = vpack.c.b16 %v3372, %v3366
    %v3601 = vpack.c.b16 %v3373, %v3367
    %v3602 = vpack.c.b16 %v3380, %v3374
    %v3603 = vpack.c.b16 %v3381, %v3375
    %v3604 = vpack.c.b16 %v3382, %v3376
    %v3605 = vpack.c.b16 %v3383, %v3377
    %v3606 = vpack.c.b16 %v3384, %v3378
    %v3607 = vpack.c.b16 %v3385, %v3379
    %v3608 = vpack.c.b16 %v3392, %v3386
    %v3609 = vpack.c.b16 %v3393, %v3387
    %v3610 = vpack.c.b16 %v3394, %v3388
    %v3611 = vpack.c.b16 %v3395, %v3389
    %v3612 = vpack.c.b16 %v3396, %v3390
    %v3613 = vpack.c.b16 %v3397, %v3391
    %v3614 = vpack.c.b16 %v3404, %v3398
    %v3615 = vpack.c.b16 %v3405, %v3399
    %v3616 = vpack.c.b16 %v3406, %v3400
    %v3617 = vpack.c.b16 %v3407, %v3401
    %v3618 = vpack.c.b16 %v3408, %v3402
    %v3619 = vpack.c.b16 %v3409, %v3403
    %v3620 = vpack.c.b16 %v3416, %v3410
    %v3621 = vpack.c.b16 %v3417, %v3411
    %v3622 = vpack.c.b16 %v3418, %v3412
    %v3623 = vpack.c.b16 %v3419, %v3413
    %v3624 = vpack.c.b16 %v3420, %v3414
    %v3625 = vpack.c.b16 %v3421, %v3415
    %v3626 = vpack.c.b16 %v3428, %v3422
    %v3627 = vpack.c.b16 %v3429, %v3423
    %v3628 = vpack.c.b16 %v3430, %v3424
    %v3629 = vpack.c.b16 %v3431, %v3425
    %v3630 = vpack.c.b16 %v3432, %v3426
    %v3631 = vpack.c.b16 %v3433, %v3427
    %v3632 = vpack.c.b16 %v3440, %v3434
    %v3633 = vpack.c.b16 %v3441, %v3435
    %v3634 = vpack.c.b16 %v3442, %v3436
    %v3635 = vpack.c.b16 %v3443, %v3437
    %v3636 = vpack.c.b16 %v3444, %v3438
    %v3637 = vpack.c.b16 %v3445, %v3439
    %3830 = vmatprep.subr.bf16.mxu0 %v3489
    %3831 = vmatpush1.bf16.msra.mxu0 %v3488
    %3832 = vmatprep.subr.bf16.mxu0 %v3483
    %3833 = vmatpush1.bf16.msra.mxu0 %v3482
    %3834 = vmatprep.subr.bf16.mxu0 %v3477
    %3835 = vmatpush1.bf16.msra.mxu0 %v3476
    %3836 = vmatprep.subr.bf16.mxu0 %v3471
    %3837 = vmatpush1.bf16.msra.mxu0 %v3470
    %3838 = vmatprep.subr.bf16.mxu0 %v3465
    %3839 = vmatpush1.bf16.msra.mxu0 %v3464
    %3840 = vmatprep.subr.bf16.mxu0 %v3459
    %3841 = vmatpush1.bf16.msra.mxu0 %v3458
    %3842 = vmatprep.subr.bf16.mxu0 %v3453
    %3843 = vmatpush1.bf16.msra.mxu0 %v3452
    %3844 = vmatprep.subr.bf16.mxu0 %v3447
    %3845 = vmatpush1.bf16.msra.mxu0 %v3446
    %3846 = vmatprep.subr.bf16.mxu0 %v3537
    %3847 = vmatpush2.bf16.msra.mxu0 %v3536
    %3848 = vmatprep.subr.bf16.mxu0 %v3531
    %3849 = vmatpush2.bf16.msra.mxu0 %v3530
    %3850 = vmatprep.subr.bf16.mxu0 %v3525
    %3851 = vmatpush2.bf16.msra.mxu0 %v3524
    %3852 = vmatprep.subr.bf16.mxu0 %v3519
    %3853 = vmatpush2.bf16.msra.mxu0 %v3518
    %3854 = vmatprep.subr.bf16.mxu0 %v3513
    %3855 = vmatpush2.bf16.msra.mxu0 %v3512
    %3856 = vmatprep.subr.bf16.mxu0 %v3507
    %3857 = vmatpush2.bf16.msra.mxu0 %v3506
    %3858 = vmatprep.subr.bf16.mxu0 %v3501
    %3859 = vmatpush2.bf16.msra.mxu0 %v3500
    %3860 = vmatprep.subr.bf16.mxu0 %v3495
    %3861 = vmatpush2.bf16.msra.mxu0 %v3494
    %3862 = vmatprep.mubr.bf16.mxu0 %v2643
    %3863 = vmatmul.mubr.bf16.gmra.mxu0 %v2642
    %v3864 = vpop.f32.mrf.mxu0
    %v3865 = vadd.f32 %v2843, %v3864
    %v3866 = vpop.f32.mrf.mxu0
    %v3867 = vadd.f32 %v2847, %v3866
    %v3868 = vpop.f32.mrf.mxu0
    %v3869 = vadd.f32 %v2843, %v3868
    %v3870 = vpop.f32.mrf.mxu0
    %v3871 = vadd.f32 %v2847, %v3870
    %3872 = vdwg.mxu0
    %3873 = vmatprep.subr.bf16.mxu0 %v3585
    %3874 = vmatpush1.bf16.msra.mxu0 %v3584
    %3875 = vmatprep.subr.bf16.mxu0 %v3579
    %3876 = vmatpush1.bf16.msra.mxu0 %v3578
    %3877 = vmatprep.subr.bf16.mxu0 %v3573
    %3878 = vmatpush1.bf16.msra.mxu0 %v3572
    %3879 = vmatprep.subr.bf16.mxu0 %v3567
    %3880 = vmatpush1.bf16.msra.mxu0 %v3566
    %3881 = vmatprep.subr.bf16.mxu0 %v3561
    %3882 = vmatpush1.bf16.msra.mxu0 %v3560
    %3883 = vmatprep.subr.bf16.mxu0 %v3555
    %3884 = vmatpush1.bf16.msra.mxu0 %v3554
    %3885 = vmatprep.subr.bf16.mxu0 %v3549
    %3886 = vmatpush1.bf16.msra.mxu0 %v3548
    %3887 = vmatprep.subr.bf16.mxu0 %v3543
    %3888 = vmatpush1.bf16.msra.mxu0 %v3542
    %3889 = vmatprep.subr.bf16.mxu0 %v3633
    %3890 = vmatpush2.bf16.msra.mxu0 %v3632
    %3891 = vmatprep.subr.bf16.mxu0 %v3627
    %3892 = vmatpush2.bf16.msra.mxu0 %v3626
    %3893 = vmatprep.subr.bf16.mxu0 %v3621
    %3894 = vmatpush2.bf16.msra.mxu0 %v3620
    %3895 = vmatprep.subr.bf16.mxu0 %v3615
    %3896 = vmatpush2.bf16.msra.mxu0 %v3614
    %3897 = vmatprep.subr.bf16.mxu0 %v3609
    %3898 = vmatpush2.bf16.msra.mxu0 %v3608
    %3899 = vmatprep.subr.bf16.mxu0 %v3603
    %3900 = vmatpush2.bf16.msra.mxu0 %v3602
    %3901 = vmatprep.subr.bf16.mxu0 %v3597
    %3902 = vmatpush2.bf16.msra.mxu0 %v3596
    %3903 = vmatprep.subr.bf16.mxu0 %v3591
    %3904 = vmatpush2.bf16.msra.mxu0 %v3590
    %3905 = vmatprep.mubr.bf16.mxu0 %v2645
    %3906 = vmatmul.mubr.bf16.gmra.mxu0 %v2644
    %v3907 = vpop.f32.mrf.mxu0
    %v3908 = vadd.f32 %v3865, %v3907
    %v3909 = vpop.f32.mrf.mxu0
    %v3910 = vadd.f32 %v3867, %v3909
    %v3911 = vpop.f32.mrf.mxu0
    %v3912 = vadd.f32 %v3869, %v3911
    %v3913 = vpop.f32.mrf.mxu0
    %v3914 = vadd.f32 %v3871, %v3913
    %3915 = vdwg.mxu0
    %3916 = vmatprep.subr.bf16.mxu0 %v3491
    %3917 = vmatpush1.bf16.msra.mxu0 %v3490
    %3918 = vmatprep.subr.bf16.mxu0 %v3485
    %3919 = vmatpush1.bf16.msra.mxu0 %v3484
    %3920 = vmatprep.subr.bf16.mxu0 %v3479
    %3921 = vmatpush1.bf16.msra.mxu0 %v3478
    %3922 = vmatprep.subr.bf16.mxu0 %v3473
    %3923 = vmatpush1.bf16.msra.mxu0 %v3472
    %3924 = vmatprep.subr.bf16.mxu0 %v3467
    %3925 = vmatpush1.bf16.msra.mxu0 %v3466
    %3926 = vmatprep.subr.bf16.mxu0 %v3461
    %3927 = vmatpush1.bf16.msra.mxu0 %v3460
    %3928 = vmatprep.subr.bf16.mxu0 %v3455
    %3929 = vmatpush1.bf16.msra.mxu0 %v3454
    %3930 = vmatprep.subr.bf16.mxu0 %v3449
    %3931 = vmatpush1.bf16.msra.mxu0 %v3448
    %3932 = vmatprep.subr.bf16.mxu0 %v3539
    %3933 = vmatpush2.bf16.msra.mxu0 %v3538
    %3934 = vmatprep.subr.bf16.mxu0 %v3533
    %3935 = vmatpush2.bf16.msra.mxu0 %v3532
    %3936 = vmatprep.subr.bf16.mxu0 %v3527
    %3937 = vmatpush2.bf16.msra.mxu0 %v3526
    %3938 = vmatprep.subr.bf16.mxu0 %v3521
    %3939 = vmatpush2.bf16.msra.mxu0 %v3520
    %3940 = vmatprep.subr.bf16.mxu0 %v3515
    %3941 = vmatpush2.bf16.msra.mxu0 %v3514
    %3942 = vmatprep.subr.bf16.mxu0 %v3509
    %3943 = vmatpush2.bf16.msra.mxu0 %v3508
    %3944 = vmatprep.subr.bf16.mxu0 %v3503
    %3945 = vmatpush2.bf16.msra.mxu0 %v3502
    %3946 = vmatprep.subr.bf16.mxu0 %v3497
    %3947 = vmatpush2.bf16.msra.mxu0 %v3496
    %3948 = vmatprep.mubr.bf16.mxu0 %v2643
    %3949 = vmatmul.mubr.bf16.gmra.mxu0 %v2642
    %v3950 = vpop.f32.mrf.mxu0
    %v3951 = vadd.f32 %v2851, %v3950
    %v3952 = vpop.f32.mrf.mxu0
    %v3953 = vadd.f32 %v2855, %v3952
    %v3954 = vpop.f32.mrf.mxu0
    %v3955 = vadd.f32 %v2851, %v3954
    %v3956 = vpop.f32.mrf.mxu0
    %v3957 = vadd.f32 %v2855, %v3956
    %3958 = vdwg.mxu0
    %3959 = vmatprep.subr.bf16.mxu0 %v3587
    %3960 = vmatpush1.bf16.msra.mxu0 %v3586
    %3961 = vmatprep.subr.bf16.mxu0 %v3581
    %3962 = vmatpush1.bf16.msra.mxu0 %v3580
    %3963 = vmatprep.subr.bf16.mxu0 %v3575
    %3964 = vmatpush1.bf16.msra.mxu0 %v3574
    %3965 = vmatprep.subr.bf16.mxu0 %v3569
    %3966 = vmatpush1.bf16.msra.mxu0 %v3568
    %3967 = vmatprep.subr.bf16.mxu0 %v3563
    %3968 = vmatpush1.bf16.msra.mxu0 %v3562
    %3969 = vmatprep.subr.bf16.mxu0 %v3557
    %3970 = vmatpush1.bf16.msra.mxu0 %v3556
    %3971 = vmatprep.subr.bf16.mxu0 %v3551
    %3972 = vmatpush1.bf16.msra.mxu0 %v3550
    %3973 = vmatprep.subr.bf16.mxu0 %v3545
    %3974 = vmatpush1.bf16.msra.mxu0 %v3544
    %3975 = vmatprep.subr.bf16.mxu0 %v3635
    %3976 = vmatpush2.bf16.msra.mxu0 %v3634
    %3977 = vmatprep.subr.bf16.mxu0 %v3629
    %3978 = vmatpush2.bf16.msra.mxu0 %v3628
    %3979 = vmatprep.subr.bf16.mxu0 %v3623
    %3980 = vmatpush2.bf16.msra.mxu0 %v3622
    %3981 = vmatprep.subr.bf16.mxu0 %v3617
    %3982 = vmatpush2.bf16.msra.mxu0 %v3616
    %3983 = vmatprep.subr.bf16.mxu0 %v3611
    %3984 = vmatpush2.bf16.msra.mxu0 %v3610
    %3985 = vmatprep.subr.bf16.mxu0 %v3605
    %3986 = vmatpush2.bf16.msra.mxu0 %v3604
    %3987 = vmatprep.subr.bf16.mxu0 %v3599
    %3988 = vmatpush2.bf16.msra.mxu0 %v3598
    %3989 = vmatprep.subr.bf16.mxu0 %v3593
    %3990 = vmatpush2.bf16.msra.mxu0 %v3592
    %3991 = vmatprep.mubr.bf16.mxu0 %v2645
    %3992 = vmatmul.mubr.bf16.gmra.mxu0 %v2644
    %v3993 = vpop.f32.mrf.mxu0
    %v3994 = vadd.f32 %v3951, %v3993
    %v3995 = vpop.f32.mrf.mxu0
    %v3996 = vadd.f32 %v3953, %v3995
    %v3997 = vpop.f32.mrf.mxu0
    %v3998 = vadd.f32 %v3955, %v3997
    %v3999 = vpop.f32.mrf.mxu0
    %v4000 = vadd.f32 %v3957, %v3999
    %4001 = vdwg.mxu0
    %4002 = vmatprep.subr.bf16.mxu0 %v3493
    %4003 = vmatpush1.bf16.msra.mxu0 %v3492
    %4004 = vmatprep.subr.bf16.mxu0 %v3487
    %4005 = vmatpush1.bf16.msra.mxu0 %v3486
    %4006 = vmatprep.subr.bf16.mxu0 %v3481
    %4007 = vmatpush1.bf16.msra.mxu0 %v3480
    %4008 = vmatprep.subr.bf16.mxu0 %v3475
    %4009 = vmatpush1.bf16.msra.mxu0 %v3474
    %4010 = vmatprep.subr.bf16.mxu0 %v3469
    %4011 = vmatpush1.bf16.msra.mxu0 %v3468
    %4012 = vmatprep.subr.bf16.mxu0 %v3463
    %4013 = vmatpush1.bf16.msra.mxu0 %v3462
    %4014 = vmatprep.subr.bf16.mxu0 %v3457
    %4015 = vmatpush1.bf16.msra.mxu0 %v3456
    %4016 = vmatprep.subr.bf16.mxu0 %v3451
    %4017 = vmatpush1.bf16.msra.mxu0 %v3450
    %4018 = vmatprep.subr.bf16.mxu0 %v3541
    %4019 = vmatpush2.bf16.msra.mxu0 %v3540
    %4020 = vmatprep.subr.bf16.mxu0 %v3535
    %4021 = vmatpush2.bf16.msra.mxu0 %v3534
    %4022 = vmatprep.subr.bf16.mxu0 %v3529
    %4023 = vmatpush2.bf16.msra.mxu0 %v3528
    %4024 = vmatprep.subr.bf16.mxu0 %v3523
    %4025 = vmatpush2.bf16.msra.mxu0 %v3522
    %4026 = vmatprep.subr.bf16.mxu0 %v3517
    %4027 = vmatpush2.bf16.msra.mxu0 %v3516
    %4028 = vmatprep.subr.bf16.mxu0 %v3511
    %4029 = vmatpush2.bf16.msra.mxu0 %v3510
    %4030 = vmatprep.subr.bf16.mxu0 %v3505
    %4031 = vmatpush2.bf16.msra.mxu0 %v3504
    %4032 = vmatprep.subr.bf16.mxu0 %v3499
    %4033 = vmatpush2.bf16.msra.mxu0 %v3498
    %4034 = vmatprep.mubr.bf16.mxu0 %v2643
    %4035 = vmatmul.mubr.bf16.gmra.mxu0 %v2642
    %v4036 = vpop.f32.mrf.mxu0
    %v4037 = vadd.f32 %v2859, %v4036
    %v4038 = vpop.f32.mrf.mxu0
    %v4039 = vadd.f32 %v2863, %v4038
    %v4040 = vpop.f32.mrf.mxu0
    %v4041 = vadd.f32 %v2859, %v4040
    %v4042 = vpop.f32.mrf.mxu0
    %v4043 = vadd.f32 %v2863, %v4042
    %4044 = vdwg.mxu0
    %4045 = vmatprep.subr.bf16.mxu0 %v3589
    %4046 = vmatpush1.bf16.msra.mxu0 %v3588
    %4047 = vmatprep.subr.bf16.mxu0 %v3583
    %4048 = vmatpush1.bf16.msra.mxu0 %v3582
    %4049 = vmatprep.subr.bf16.mxu0 %v3577
    %4050 = vmatpush1.bf16.msra.mxu0 %v3576
    %4051 = vmatprep.subr.bf16.mxu0 %v3571
    %4052 = vmatpush1.bf16.msra.mxu0 %v3570
    %4053 = vmatprep.subr.bf16.mxu0 %v3565
    %4054 = vmatpush1.bf16.msra.mxu0 %v3564
    %4055 = vmatprep.subr.bf16.mxu0 %v3559
    %4056 = vmatpush1.bf16.msra.mxu0 %v3558
    %4057 = vmatprep.subr.bf16.mxu0 %v3553
    %4058 = vmatpush1.bf16.msra.mxu0 %v3552
    %4059 = vmatprep.subr.bf16.mxu0 %v3547
    %4060 = vmatpush1.bf16.msra.mxu0 %v3546
    %4061 = vmatprep.subr.bf16.mxu0 %v3637
    %4062 = vmatpush2.bf16.msra.mxu0 %v3636
    %4063 = vmatprep.subr.bf16.mxu0 %v3631
    %4064 = vmatpush2.bf16.msra.mxu0 %v3630
    %4065 = vmatprep.subr.bf16.mxu0 %v3625
    %4066 = vmatpush2.bf16.msra.mxu0 %v3624
    %4067 = vmatprep.subr.bf16.mxu0 %v3619
    %4068 = vmatpush2.bf16.msra.mxu0 %v3618
    %4069 = vmatprep.subr.bf16.mxu0 %v3613
    %4070 = vmatpush2.bf16.msra.mxu0 %v3612
    %4071 = vmatprep.subr.bf16.mxu0 %v3607
    %4072 = vmatpush2.bf16.msra.mxu0 %v3606
    %4073 = vmatprep.subr.bf16.mxu0 %v3601
    %4074 = vmatpush2.bf16.msra.mxu0 %v3600
    %4075 = vmatprep.subr.bf16.mxu0 %v3595
    %4076 = vmatpush2.bf16.msra.mxu0 %v3594
    %4077 = vmatprep.mubr.bf16.mxu0 %v2645
    %4078 = vmatmul.mubr.bf16.gmra.mxu0 %v2644
    %v4079 = vpop.f32.mrf.mxu0
    %v4080 = vadd.f32 %v4037, %v4079
    %v4081 = vpop.f32.mrf.mxu0
    %v4082 = vadd.f32 %v4039, %v4081
    %v4083 = vpop.f32.mrf.mxu0
    %v4084 = vadd.f32 %v4041, %v4083
    %v4085 = vpop.f32.mrf.mxu0
    %v4086 = vadd.f32 %v4043, %v4085
    %4087 = vdwg.mxu0
    %v4088 = vxor.u32 %v3908, 2147483648
    %v4089 = vxor.u32 %v3910, 2147483648
    %v4090 = vxor.u32 %v3994, 2147483648
    %v4091 = vxor.u32 %v3996, 2147483648
    %v4092 = vxor.u32 %v4080, 2147483648
    %v4093 = vxor.u32 %v4082, 2147483648
    %v4094 = vxor.u32 %v3912, 2147483648
    %v4095 = vxor.u32 %v3914, 2147483648
    %v4096 = vxor.u32 %v3998, 2147483648
    %v4097 = vxor.u32 %v4000, 2147483648
    %v4098 = vxor.u32 %v4084, 2147483648
    %v4099 = vxor.u32 %v4086, 2147483648
    %v4100 = vmul.f32 %v4088, 1.442695
    %v4101 = vpow.pop %v4100
    %v4102 = vmul.f32 %v4089, 1.442695
    %v4103 = vpow.pop %v4102
    %v4104 = vmul.f32 %v4090, 1.442695
    %v4105 = vpow.pop %v4104
    %v4106 = vmul.f32 %v4091, 1.442695
    %v4107 = vpow.pop %v4106
    %v4108 = vmul.f32 %v4092, 1.442695
    %v4109 = vpow.pop %v4108
    %v4110 = vmul.f32 %v4093, 1.442695
    %v4111 = vpow.pop %v4110
    %v4112 = vmul.f32 %v4094, 1.442695
    %v4113 = vpow.pop %v4112
    %v4114 = vmul.f32 %v4095, 1.442695
    %v4115 = vpow.pop %v4114
    %v4116 = vmul.f32 %v4096, 1.442695
    %v4117 = vpow.pop %v4116
    %v4118 = vmul.f32 %v4097, 1.442695
    %v4119 = vpow.pop %v4118
    %v4120 = vmul.f32 %v4098, 1.442695
    %v4121 = vpow.pop %v4120
    %v4122 = vmul.f32 %v4099, 1.442695
    %v4123 = vpow.pop %v4122
    %v4124 = vadd.f32 %v4101, 1.0
    %v4125 = vadd.f32 %v4103, 1.0
    %v4126 = vadd.f32 %v4105, 1.0
    %v4127 = vadd.f32 %v4107, 1.0
    %v4128 = vadd.f32 %v4109, 1.0
    %v4129 = vadd.f32 %v4111, 1.0
    %v4130 = vadd.f32 %v4113, 1.0
    %v4131 = vadd.f32 %v4115, 1.0
    %v4132 = vadd.f32 %v4117, 1.0
    %v4133 = vadd.f32 %v4119, 1.0
    %v4134 = vadd.f32 %v4121, 1.0
    %v4135 = vadd.f32 %v4123, 1.0
    %v4136 = vrcp.pop %v4124
    %v4137 = vmul.f32 1.0, %v4136
    %v4138 = vrcp.pop %v4125
    %v4139 = vmul.f32 1.0, %v4138
    %v4140 = vrcp.pop %v4126
    %v4141 = vmul.f32 1.0, %v4140
    %v4142 = vrcp.pop %v4127
    %v4143 = vmul.f32 1.0, %v4142
    %v4144 = vrcp.pop %v4128
    %v4145 = vmul.f32 1.0, %v4144
    %v4146 = vrcp.pop %v4129
    %v4147 = vmul.f32 1.0, %v4146
    %v4148 = vrcp.pop %v4130
    %v4149 = vmul.f32 1.0, %v4148
    %v4150 = vrcp.pop %v4131
    %v4151 = vmul.f32 1.0, %v4150
    %v4152 = vrcp.pop %v4132
    %v4153 = vmul.f32 1.0, %v4152
    %v4154 = vrcp.pop %v4133
    %v4155 = vmul.f32 1.0, %v4154
    %v4156 = vrcp.pop %v4134
    %v4157 = vmul.f32 1.0, %v4156
    %v4158 = vrcp.pop %v4135
    %v4159 = vmul.f32 1.0, %v4158
    %4160 = vst [vmem:[%s9] sm:$0xff] %v4137
    %4161 = vst [vmem:[%s9 + $0x8] sm:$0xff] %v4139
    %4162 = vst [vmem:[%s9 + $0x10] sm:$0xff] %v4141
    %4163 = vst [vmem:[%s9 + $0x18] sm:$0xff] %v4143
    %4164 = vst [vmem:[%s9 + $0x20] sm:$0xff] %v4145
    %4165 = vst [vmem:[%s9 + $0x28] sm:$0xff] %v4147
    %4166 = vst [vmem:[%s9 + $0x30] sm:$0xff] %v4149
    %4167 = vst [vmem:[%s9 + $0x38] sm:$0xff] %v4151
    %4168 = vst [vmem:[%s9 + $0x40] sm:$0xff] %v4153
    %4169 = vst [vmem:[%s9 + $0x48] sm:$0xff] %v4155
    %4170 = vst [vmem:[%s9 + $0x50] sm:$0xff] %v4157
    %4171 = vst [vmem:[%s9 + $0x58] sm:$0xff] %v4159
    // Predicated region
    $region54: #{net_forward.1} parent=1 // pred_check
      _
    $region55: #{net_forward.1} parent=1 // pred_check_branch
      %4173 = sbr.rel (0) target = $region57
    $region56: #{net_forward.1} parent=1 // pred_region
      _
    $region57: #{net_forward.1} parent=1 // pred_fallthru
      _
    // Predicated region
    $region58: #{net_forward.1} parent=1 // pred_check
      _
    $region59: #{net_forward.1} parent=1 // pred_check_branch
      %4175 = sbr.rel (0) target = $region61
    $region60: #{net_forward.1} parent=1 // pred_region
      _
    $region61: #{net_forward.1} parent=1 // pred_fallthru
      _
    %4176 = vsyncpa [#allocation3], 1
    %4177 = vsyncpa [#allocation5], 1
    %4178 = vsyncpa [#allocation8], 1

</llo_original>
